<compile_context>
chip_gen: v7x
topology: tpu7x:2x2x1
jax: 0.10.0
libtpu: 0.0.40
codegen_flags: <defaults>
</compile_context>

<pallas_src>
import functools

import jax
import jax.numpy as jnp
from jax.experimental import pallas as pl
from jax.experimental.pallas import tpu as pltpu


# ---------------------------------------------------------------------------
# Fused Pallas kernel: all GraphTripleConv layers in one call
# ---------------------------------------------------------------------------
def _gconv_net_kernel(
    gather_oh_ref,   # (2T, O) matmul_dtype : one-hot rows [s_idx ; o_idx]
    scat_s_ref,      # (O, T)  matmul_dtype : one-hot scatter for s_idx
    scat_o_ref,      # (O, T)  matmul_dtype : one-hot scatter for o_idx
    counts_inv_ref,  # (O, 1)  f32          : 1 / clamp(counts, 1)  (layer-invariant)
    node_ref,        # (O, D)  f32
    edge_ref,        # (T, D)  f32
    w1_ref,          # (L, 3D, H) matmul_dtype : net1 Linear(2D+D -> H), rows [s ; e ; o]
    w1b_s_ref,       # (L, H, H)  matmul_dtype : net1 Linear(H -> 2H+D), "s" column block
    w1b_o_ref,       # (L, H, H)  matmul_dtype : "o" column block
    w1b_p_ref,       # (L, H, D)  matmul_dtype : "p" column block
    w2a_ref,         # (L, H, H)  matmul_dtype : net2 Linear(H -> H)
    w2b_ref,         # (L, H, D)  matmul_dtype : net2 Linear(H -> D)
    b_h_ref,         # (L, 4, H) f32 : rows [b1, b1b_s, b1b_o, b2a]
    b_d_ref,         # (L, 2, D) f32 : rows [b1b_p, b2b]
    node_out_ref,    # (O, D) f32  (aliased to node input)
    edge_out_ref,    # (T, D) f32  (aliased to edge input)
    *,
    matmul_dtype,
):
    f32 = jnp.float32
    L = w1_ref.shape[0]
    O, D = node_ref.shape
    T = edge_ref.shape[0]

    def mm(a, b):
        # MXU operands in matmul_dtype (bf16 everywhere by default), f32 accumulation.
        # astype is a no-op when the operand is already matmul_dtype (pre-cast weights).
        return jnp.dot(a.astype(matmul_dtype), b.astype(matmul_dtype),
                       preferred_element_type=f32)

    gather_oh = gather_oh_ref[...]
    scat_s = scat_s_ref[...]
    scat_o = scat_o_ref[...]
    counts_inv = counts_inv_ref[...]

    # Read before write: outputs alias these inputs, but both are only written at the end.
    node = node_ref[...]
    edge = edge_ref[...]

    # Static unroll over layers (L is small); all weights stay VMEM-resident throughout.
    # NOTE (v7x): the three summed row-block dots for h1 can use MRB in-place accumulation;
    # verify in the bundle dump if this ever becomes the bottleneck (it is not at these sizes).
    for l in range(L):
        bh = b_h_ref[l]                                                 # (4, H) f32
        bd = b_d_ref[l]                                                 # (2, D) f32

        # gather: one (2T,O)@(O,D) MXU push gives [node[s_idx] ; node[o_idx]]
        gathered = mm(gather_oh, node)                                  # (2T, D) f32
        cur_s = gathered[:T]                                            # sublane-aligned
        cur_o = gathered[T:]

        # net1 layer 1: Linear(3D -> H) + ReLU; concat folded into row blocks of w1
        # (identical math to one K=3D dot; avoids an unaligned lane-axis concat).
        w1 = w1_ref[l]
        h1 = (mm(cur_s, w1[:D]) + mm(edge, w1[D:2 * D]) + mm(cur_o, w1[2 * D:])
              + bh[0:1])
        h1 = jnp.maximum(h1, 0.0)                                       # (T, H) f32

        # net1 layer 2: three column-block matmuls (s / o / p) -- no lane-64 slices,
        # no axis-0 concat; identical math to one (H, 2H+D) matmul on the merged weight.
        new_s = jnp.maximum(mm(h1, w1b_s_ref[l]) + bh[1:2], 0.0)        # (T, H)
        new_o = jnp.maximum(mm(h1, w1b_o_ref[l]) + bh[2:3], 0.0)        # (T, H)
        new_p = jnp.maximum(mm(h1, w1b_p_ref[l]) + bd[0:1], 0.0)        # (T, D)

        # scatter-add avg-pool: two (O,T)@(T,H) pushes, then f32 multiply by 1/counts.
        pooled = (mm(scat_s, new_s) + mm(scat_o, new_o)) * counts_inv   # (O, H) f32

        # net2: Linear(H->H)+ReLU, Linear(H->D)+ReLU
        h2 = jnp.maximum(mm(pooled, w2a_ref[l]) + bh[3:4], 0.0)         # (O, H)
        node = jnp.maximum(mm(h2, w2b_ref[l]) + bd[1:2], 0.0)           # (O, D)
        edge = new_p

    node_out_ref[...] = node.astype(node_out_ref.dtype)
    edge_out_ref[...] = edge.astype(edge_out_ref.dtype)


# ---------------------------------------------------------------------------
# Wrapper
# ---------------------------------------------------------------------------
def compute_counts_inv(edges_indices, O):
    # Reproduces the reference module's count computation:
    # torch scatter_add with a length-2 index -> only 4 increments total
    # (at e[0,0], e[1,0], e[0,1], e[1,1]); then clamp(min=1) and reciprocal.
    idx4 = jnp.concatenate([edges_indices[:, 0], edges_indices[:, 1]])
    counts = jnp.zeros((O,), jnp.float32).at[idx4].add(1.0)
    return 1.0 / jnp.maximum(counts, 1.0)


def graph_triple_conv_net_pallas(node, edge, edges_indices, layer_params,
                                 matmul_dtype=jnp.bfloat16):
    """Full GraphTripleConvNet forward in one fused Pallas call."""
    node = node.astype(jnp.float32)
    edge = edge.astype(jnp.float32)
    O, D = node.shape
    T = edge.shape[0]
    L = len(layer_params)
    H = layer_params[0]["w2a"].shape[0]

    # --- layer-invariant index structures, built once outside the kernel -------------
    counts_inv = compute_counts_inv(edges_indices, O).reshape(O, 1)       # f32 (O, 1)
    s_idx = edges_indices[0].astype(jnp.int32)                            # (T,)
    o_idx = edges_indices[1].astype(jnp.int32)                            # (T,)
    idx2t = jnp.concatenate([s_idx, o_idx])                               # (2T,)
    obj_iota = jnp.arange(O, dtype=jnp.int32)
    gather_oh = (idx2t[:, None] == obj_iota[None, :]).astype(matmul_dtype)  # (2T, O)
    scat_s = (obj_iota[:, None] == s_idx[None, :]).astype(matmul_dtype)      # (O, T)
    scat_o = (obj_iota[:, None] == o_idx[None, :]).astype(matmul_dtype)      # (O, T)

    # --- weights stacked over layers and pre-cast to matmul_dtype; biases stay f32 ---
    def stack_w(k):
        return jnp.stack([p[k] for p in layer_params], axis=0).astype(matmul_dtype)

    w1 = stack_w("w1")                                                     # (L, 3D, H)
    w2a = stack_w("w2a")                                                   # (L, H, H)
    w2b = stack_w("w2b")                                                   # (L, H, D)
    # net1 layer-2 weight split into the reference column blocks [s | p | o]:
    w1b_s = jnp.stack([p["w1b"][:, :H] for p in layer_params]).astype(matmul_dtype)
    w1b_p = jnp.stack([p["w1b"][:, H:H + D] for p in layer_params]).astype(matmul_dtype)
    w1b_o = jnp.stack([p["w1b"][:, H + D:] for p in layer_params]).astype(matmul_dtype)

    b_h = jnp.stack([jnp.stack([p["b1"][0], p["b1b"][0, :H],
                                p["b1b"][0, H + D:], p["b2a"][0]], axis=0)
                     for p in layer_params], axis=0).astype(jnp.float32)   # (L, 4, H)
    b_d = jnp.stack([jnp.stack([p["b1b"][0, H:H + D], p["b2b"][0]], axis=0)
                     for p in layer_params], axis=0).astype(jnp.float32)   # (L, 2, D)

    inputs = (
        gather_oh, scat_s, scat_o, counts_inv,
        node, edge,                                  # indices 4, 5 (aliased to outputs)
        w1, w1b_s, w1b_o, w1b_p, w2a, w2b,
        b_h, b_d,
    )

    # Advisory cost estimate so XLA can overlap this tiny, overhead-bound call.
    flops = 2 * L * (2 * T * O * D + 3 * T * D * H + T * H * (2 * H + D)
                     + 2 * O * T * H + O * H * H + O * H * D)
    bytes_accessed = sum(int(x.size) * x.dtype.itemsize for x in inputs) \
        + (O * D + T * D) * 4

    vmem = pl.BlockSpec(memory_space=pltpu.MemorySpace.VMEM)
    kernel = functools.partial(_gconv_net_kernel, matmul_dtype=matmul_dtype)
    return pl.pallas_call(
        kernel,
        out_shape=(jax.ShapeDtypeStruct((O, D), jnp.float32),
                   jax.ShapeDtypeStruct((T, D), jnp.float32)),
        in_specs=[vmem] * len(inputs),
        out_specs=(vmem, vmem),
        input_output_aliases={4: 0, 5: 1},           # node -> out0, edge -> out1
        cost_estimate=pl.CostEstimate(flops=flops, transcendentals=0,
                                      bytes_accessed=bytes_accessed),
    )(*inputs)


# ---------------------------------------------------------------------------
# Parameter init (mimics kaiming_normal_ weights + default PyTorch bias init)
# and a pure-JAX reference mirroring the PyTorch forward.
# ---------------------------------------------------------------------------
def init_layer_params(key, D, H):
    ks = jax.random.split(key, 8)

    def lin(kw, kb, fan_in, fan_out):
        w = jax.random.normal(kw, (fan_in, fan_out), jnp.float32) * (2.0 / fan_in) ** 0.5
        b = jax.random.uniform(kb, (1, fan_out), jnp.float32, -1.0, 1.0) * (1.0 / fan_in) ** 0.5
        return w, b

    w1, b1 = lin(ks[0], ks[1], 3 * D, H)            # Linear(2*Din + Dout, H)
    w1b, b1b = lin(ks[2], ks[3], H, 2 * H + D)      # Linear(H, 2H + Dout)
    w2a, b2a = lin(ks[4], ks[5], H, H)              # Linear(H, H)
    w2b, b2b = lin(ks[6], ks[7], H, D)              # Linear(H, Dout)
    return dict(w1=w1, b1=b1, w1b=w1b, b1b=b1b, w2a=w2a, b2a=b2a, w2b=w2b, b2b=b2b)


def graph_triple_conv_net_ref(node, edge, edges_indices, layer_params, matmul_dtype=None):
    """Pure-JAX mirror of the PyTorch forward (incl. the 4-increment count quirk).
    If matmul_dtype is set, matmul operands (and the scatter-pool inputs) are rounded
    to it, modeling the kernel's bf16 MXU path; accumulation stays f32."""
    f32 = jnp.float32
    O, D = node.shape
    counts_inv = compute_counts_inv(edges_indices, O)
    s_idx = edges_indices[0]
    o_idx = edges_indices[1]

    def mm(a, b):
        if matmul_dtype is not None:
            a = a.astype(matmul_dtype)
            b = b.astype(matmul_dtype)
        return jnp.dot(a, b, precision=jax.lax.Precision.HIGHEST,
                       preferred_element_type=f32)

    def rnd(x):
        return x if matmul_dtype is None else x.astype(matmul_dtype).astype(f32)

    for p in layer_params:
        H = p["w2a"].shape[0]
        cur_t = jnp.concatenate([node[s_idx], edge, node[o_idx]], axis=1)
        h1 = jax.nn.relu(mm(cur_t, p["w1"]) + p["b1"])
        new_t = jax.nn.relu(mm(h1, p["w1b"]) + p["b1b"])
        new_s = new_t[:, :H]
        new_p = new_t[:, H:H + D]
        new_o = new_t[:, H + D:]
        pooled = jnp.zeros((O, H), f32).at[s_idx].add(rnd(new_s)).at[o_idx].add(rnd(new_o))
        pooled = pooled * counts_inv[:, None]
        h2 = jax.nn.relu(mm(pooled, p["w2a"]) + p["b2a"])
        node = jax.nn.relu(mm(h2, p["w2b"]) + p["b2b"])
        edge = new_p
    return node, edge


if __name__ == "__main__":
    D, H = 32, 64          # input_dim / hidden_dim (output_dim = input_dim, as in the module)
    O, T = 16, 8           # num objects / num triples
    NUM_LAYERS = 3

    key = jax.random.PRNGKey(0)
    k_node, k_edge, k_idx, k_par = jax.random.split(key, 4)
    node_feature = jax.random.normal(k_node, (O, D), jnp.float32)
    edge_feature = jax.random.normal(k_edge, (T, D), jnp.float32)
    edges_indices = jax.random.randint(k_idx, (2, T), 0, O, dtype=jnp.int32)

    layer_params = [init_layer_params(jax.random.fold_in(k_par, l), D, H)
                    for l in range(NUM_LAYERS)]

    ok = True

    # (1) f32 MXU-operand path vs the f32 reference (kernel uses default MXU precision,
    #     so this is close-but-not-bit-exact; tolerance covers the emulation difference).
    node_f32, edge_f32 = graph_triple_conv_net_pallas(
        node_feature, edge_feature, edges_indices, layer_params,
        matmul_dtype=jnp.float32)
    jax.block_until_ready((node_f32, edge_f32))
    node_r, edge_r = graph_triple_conv_net_ref(
        node_feature, edge_feature, edges_indices, layer_params, matmul_dtype=None)
    jax.block_until_ready((node_r, edge_r))
    ok &= bool(jnp.allclose(node_f32, node_r, rtol=2e-2, atol=2e-2))
    ok &= bool(jnp.allclose(edge_f32, edge_r, rtol=2e-2, atol=2e-2))

    # (2) fast path: bf16 MXU operands (default on all generations) vs a bf16-matched ref.
    node_bf, edge_bf = graph_triple_conv_net_pallas(
        node_feature, edge_feature, edges_indices, layer_params,
        matmul_dtype=jnp.bfloat16)
    jax.block_until_ready((node_bf, edge_bf))
    node_rb, edge_rb = graph_triple_conv_net_ref(
        node_feature, edge_feature, edges_indices, layer_params,
        matmul_dtype=jnp.bfloat16)
    jax.block_until_ready((node_rb, edge_rb))
    ok &= bool(jnp.allclose(node_bf, node_rb, rtol=2e-2, atol=2e-2))
    ok &= bool(jnp.allclose(edge_bf, edge_rb, rtol=2e-2, atol=2e-2))

    if not ok:
        raise AssertionError("Pallas kernel output does not match JAX reference")
    print("KERNEL_OK")
</pallas_src>

<mosaic_0001>
module attributes {stable_mosaic.version = 11 : i64} {
  func.func @_gconv_net_kernel(%arg0: memref<16x16xf32, #tpu.memory_space<vmem>>, %arg1: memref<16x8xf32, #tpu.memory_space<vmem>>, %arg2: memref<16x8xf32, #tpu.memory_space<vmem>>, %arg3: memref<16x1xf32, #tpu.memory_space<vmem>>, %arg4: memref<16x32xf32, #tpu.memory_space<vmem>>, %arg5: memref<8x32xf32, #tpu.memory_space<vmem>>, %arg6: memref<3x96x64xf32, #tpu.memory_space<vmem>>, %arg7: memref<3x64x64xf32, #tpu.memory_space<vmem>>, %arg8: memref<3x64x64xf32, #tpu.memory_space<vmem>>, %arg9: memref<3x64x32xf32, #tpu.memory_space<vmem>>, %arg10: memref<3x64x64xf32, #tpu.memory_space<vmem>>, %arg11: memref<3x64x32xf32, #tpu.memory_space<vmem>>, %arg12: memref<3x4x64xf32, #tpu.memory_space<vmem>>, %arg13: memref<3x2x32xf32, #tpu.memory_space<vmem>>, %arg14: memref<16x32xf32, #tpu.memory_space<vmem>>, %arg15: memref<8x32xf32, #tpu.memory_space<vmem>>) attributes {dimension_semantics = [], scalar_prefetch = 0 : i64, scratch_operands = 0 : i64, tpu.core_type = #tpu.core_type<tc>} {
    %c0 = arith.constant 0 : index
    %c0_0 = arith.constant 0 : index
    %0 = vector.load %arg0[%c0, %c0_0] : memref<16x16xf32, #tpu.memory_space<vmem>>, vector<16x16xf32>
    %c0_1 = arith.constant 0 : index
    %c0_2 = arith.constant 0 : index
    %1 = vector.load %arg1[%c0_1, %c0_2] : memref<16x8xf32, #tpu.memory_space<vmem>>, vector<16x8xf32>
    %c0_3 = arith.constant 0 : index
    %c0_4 = arith.constant 0 : index
    %2 = vector.load %arg2[%c0_3, %c0_4] : memref<16x8xf32, #tpu.memory_space<vmem>>, vector<16x8xf32>
    %c0_5 = arith.constant 0 : index
    %c0_6 = arith.constant 0 : index
    %3 = vector.load %arg3[%c0_5, %c0_6] : memref<16x1xf32, #tpu.memory_space<vmem>>, vector<16x1xf32>
    %c0_7 = arith.constant 0 : index
    %c0_8 = arith.constant 0 : index
    %4 = vector.load %arg4[%c0_7, %c0_8] : memref<16x32xf32, #tpu.memory_space<vmem>>, vector<16x32xf32>
    %c0_9 = arith.constant 0 : index
    %c0_10 = arith.constant 0 : index
    %5 = vector.load %arg5[%c0_9, %c0_10] : memref<8x32xf32, #tpu.memory_space<vmem>>, vector<8x32xf32>
    %c0_11 = arith.constant 0 : index
    %c0_12 = arith.constant 0 : index
    %c0_13 = arith.constant 0 : index
    %6 = vector.load %arg12[%c0_11, %c0_12, %c0_13] : memref<3x4x64xf32, #tpu.memory_space<vmem>>, vector<1x4x64xf32>
    %7 = vector.shape_cast %6 : vector<1x4x64xf32> to vector<4x64xf32>
    %c0_14 = arith.constant 0 : index
    %c0_15 = arith.constant 0 : index
    %c0_16 = arith.constant 0 : index
    %8 = vector.load %arg13[%c0_14, %c0_15, %c0_16] : memref<3x2x32xf32, #tpu.memory_space<vmem>>, vector<1x2x32xf32>
    %9 = vector.shape_cast %8 : vector<1x2x32xf32> to vector<2x32xf32>
    %cst = arith.constant dense<0.000000e+00> : vector<16x32xf32>
    %10 = tpu.matmul %0, %4, %cst {dimension_numbers = #tpu.dot_dimension_numbers<[1], [0], [0], [1], [0, 0, 1, 1], [], []>} : vector<16x16xf32>, vector<16x32xf32>, vector<16x32xf32> -> vector<16x32xf32>
    %11 = vector.extract_strided_slice %10 {offsets = [0, 0], sizes = [8, 32], strides = [1, 1]} : vector<16x32xf32> to vector<8x32xf32>
    %12 = vector.extract_strided_slice %10 {offsets = [8, 0], sizes = [8, 32], strides = [1, 1]} : vector<16x32xf32> to vector<8x32xf32>
    %c0_17 = arith.constant 0 : index
    %c0_18 = arith.constant 0 : index
    %c0_19 = arith.constant 0 : index
    %13 = vector.load %arg6[%c0_17, %c0_18, %c0_19] : memref<3x96x64xf32, #tpu.memory_space<vmem>>, vector<1x96x64xf32>
    %14 = vector.shape_cast %13 : vector<1x96x64xf32> to vector<96x64xf32>
    %15 = vector.extract_strided_slice %14 {offsets = [0, 0], sizes = [32, 64], strides = [1, 1]} : vector<96x64xf32> to vector<32x64xf32>
    %cst_20 = arith.constant dense<0.000000e+00> : vector<8x64xf32>
    %16 = tpu.matmul %11, %15, %cst_20 {dimension_numbers = #tpu.dot_dimension_numbers<[1], [0], [0], [1], [0, 0, 1, 1], [], []>} : vector<8x32xf32>, vector<32x64xf32>, vector<8x64xf32> -> vector<8x64xf32>
    %17 = vector.extract_strided_slice %14 {offsets = [32, 0], sizes = [32, 64], strides = [1, 1]} : vector<96x64xf32> to vector<32x64xf32>
    %cst_21 = arith.constant dense<0.000000e+00> : vector<8x64xf32>
    %18 = tpu.matmul %5, %17, %cst_21 {dimension_numbers = #tpu.dot_dimension_numbers<[1], [0], [0], [1], [0, 0, 1, 1], [], []>} : vector<8x32xf32>, vector<32x64xf32>, vector<8x64xf32> -> vector<8x64xf32>
    %19 = arith.addf %16, %18 : vector<8x64xf32>
    %20 = vector.extract_strided_slice %14 {offsets = [64, 0], sizes = [32, 64], strides = [1, 1]} : vector<96x64xf32> to vector<32x64xf32>
    %cst_22 = arith.constant dense<0.000000e+00> : vector<8x64xf32>
    %21 = tpu.matmul %12, %20, %cst_22 {dimension_numbers = #tpu.dot_dimension_numbers<[1], [0], [0], [1], [0, 0, 1, 1], [], []>} : vector<8x32xf32>, vector<32x64xf32>, vector<8x64xf32> -> vector<8x64xf32>
    %22 = arith.addf %19, %21 : vector<8x64xf32>
    %23 = vector.extract_strided_slice %7 {offsets = [0, 0], sizes = [1, 64], strides = [1, 1]} : vector<4x64xf32> to vector<1x64xf32>
    %24 = vector.broadcast %23 : vector<1x64xf32> to vector<8x64xf32>
    %25 = arith.addf %22, %24 : vector<8x64xf32>
    %cst_23 = arith.constant 0.000000e+00 : f32
    %26 = vector.broadcast %cst_23 : f32 to vector<8x64xf32>
    %27 = arith.maximumf %25, %26 : vector<8x64xf32>
    %c0_24 = arith.constant 0 : index
    %c0_25 = arith.constant 0 : index
    %c0_26 = arith.constant 0 : index
    %28 = vector.load %arg7[%c0_24, %c0_25, %c0_26] : memref<3x64x64xf32, #tpu.memory_space<vmem>>, vector<1x64x64xf32>
    %29 = vector.shape_cast %28 : vector<1x64x64xf32> to vector<64x64xf32>
    %cst_27 = arith.constant dense<0.000000e+00> : vector<8x64xf32>
    %30 = tpu.matmul %27, %29, %cst_27 {dimension_numbers = #tpu.dot_dimension_numbers<[1], [0], [0], [1], [0, 0, 1, 1], [], []>} : vector<8x64xf32>, vector<64x64xf32>, vector<8x64xf32> -> vector<8x64xf32>
    %31 = vector.extract_strided_slice %7 {offsets = [1, 0], sizes = [1, 64], strides = [1, 1]} : vector<4x64xf32> to vector<1x64xf32>
    %32 = vector.broadcast %31 : vector<1x64xf32> to vector<8x64xf32>
    %33 = arith.addf %30, %32 : vector<8x64xf32>
    %cst_28 = arith.constant 0.000000e+00 : f32
    %34 = vector.broadcast %cst_28 : f32 to vector<8x64xf32>
    %35 = arith.maximumf %33, %34 : vector<8x64xf32>
    %c0_29 = arith.constant 0 : index
    %c0_30 = arith.constant 0 : index
    %c0_31 = arith.constant 0 : index
    %36 = vector.load %arg8[%c0_29, %c0_30, %c0_31] : memref<3x64x64xf32, #tpu.memory_space<vmem>>, vector<1x64x64xf32>
    %37 = vector.shape_cast %36 : vector<1x64x64xf32> to vector<64x64xf32>
    %cst_32 = arith.constant dense<0.000000e+00> : vector<8x64xf32>
    %38 = tpu.matmul %27, %37, %cst_32 {dimension_numbers = #tpu.dot_dimension_numbers<[1], [0], [0], [1], [0, 0, 1, 1], [], []>} : vector<8x64xf32>, vector<64x64xf32>, vector<8x64xf32> -> vector<8x64xf32>
    %39 = vector.extract_strided_slice %7 {offsets = [2, 0], sizes = [1, 64], strides = [1, 1]} : vector<4x64xf32> to vector<1x64xf32>
    %40 = vector.broadcast %39 : vector<1x64xf32> to vector<8x64xf32>
    %41 = arith.addf %38, %40 : vector<8x64xf32>
    %cst_33 = arith.constant 0.000000e+00 : f32
    %42 = vector.broadcast %cst_33 : f32 to vector<8x64xf32>
    %43 = arith.maximumf %41, %42 : vector<8x64xf32>
    %c0_34 = arith.constant 0 : index
    %c0_35 = arith.constant 0 : index
    %c0_36 = arith.constant 0 : index
    %44 = vector.load %arg9[%c0_34, %c0_35, %c0_36] : memref<3x64x32xf32, #tpu.memory_space<vmem>>, vector<1x64x32xf32>
    %45 = vector.shape_cast %44 : vector<1x64x32xf32> to vector<64x32xf32>
    %cst_37 = arith.constant dense<0.000000e+00> : vector<8x32xf32>
    %46 = tpu.matmul %27, %45, %cst_37 {dimension_numbers = #tpu.dot_dimension_numbers<[1], [0], [0], [1], [0, 0, 1, 1], [], []>} : vector<8x64xf32>, vector<64x32xf32>, vector<8x32xf32> -> vector<8x32xf32>
    %47 = vector.extract_strided_slice %9 {offsets = [0, 0], sizes = [1, 32], strides = [1, 1]} : vector<2x32xf32> to vector<1x32xf32>
    %48 = vector.broadcast %47 : vector<1x32xf32> to vector<8x32xf32>
    %49 = arith.addf %46, %48 : vector<8x32xf32>
    %cst_38 = arith.constant 0.000000e+00 : f32
    %50 = vector.broadcast %cst_38 : f32 to vector<8x32xf32>
    %51 = arith.maximumf %49, %50 : vector<8x32xf32>
    %cst_39 = arith.constant dense<0.000000e+00> : vector<16x64xf32>
    %52 = tpu.matmul %1, %35, %cst_39 {dimension_numbers = #tpu.dot_dimension_numbers<[1], [0], [0], [1], [0, 0, 1, 1], [], []>} : vector<16x8xf32>, vector<8x64xf32>, vector<16x64xf32> -> vector<16x64xf32>
    %cst_40 = arith.constant dense<0.000000e+00> : vector<16x64xf32>
    %53 = tpu.matmul %2, %43, %cst_40 {dimension_numbers = #tpu.dot_dimension_numbers<[1], [0], [0], [1], [0, 0, 1, 1], [], []>} : vector<16x8xf32>, vector<8x64xf32>, vector<16x64xf32> -> vector<16x64xf32>
    %54 = arith.addf %52, %53 : vector<16x64xf32>
    %55 = vector.broadcast %3 : vector<16x1xf32> to vector<16x64xf32>
    %56 = arith.mulf %54, %55 : vector<16x64xf32>
    %c0_41 = arith.constant 0 : index
    %c0_42 = arith.constant 0 : index
    %c0_43 = arith.constant 0 : index
    %57 = vector.load %arg10[%c0_41, %c0_42, %c0_43] : memref<3x64x64xf32, #tpu.memory_space<vmem>>, vector<1x64x64xf32>
    %58 = vector.shape_cast %57 : vector<1x64x64xf32> to vector<64x64xf32>
    %cst_44 = arith.constant dense<0.000000e+00> : vector<16x64xf32>
    %59 = tpu.matmul %56, %58, %cst_44 {dimension_numbers = #tpu.dot_dimension_numbers<[1], [0], [0], [1], [0, 0, 1, 1], [], []>} : vector<16x64xf32>, vector<64x64xf32>, vector<16x64xf32> -> vector<16x64xf32>
    %60 = vector.extract_strided_slice %7 {offsets = [3, 0], sizes = [1, 64], strides = [1, 1]} : vector<4x64xf32> to vector<1x64xf32>
    %61 = vector.broadcast %60 : vector<1x64xf32> to vector<16x64xf32>
    %62 = arith.addf %59, %61 : vector<16x64xf32>
    %cst_45 = arith.constant 0.000000e+00 : f32
    %63 = vector.broadcast %cst_45 : f32 to vector<16x64xf32>
    %64 = arith.maximumf %62, %63 : vector<16x64xf32>
    %c0_46 = arith.constant 0 : index
    %c0_47 = arith.constant 0 : index
    %c0_48 = arith.constant 0 : index
    %65 = vector.load %arg11[%c0_46, %c0_47, %c0_48] : memref<3x64x32xf32, #tpu.memory_space<vmem>>, vector<1x64x32xf32>
    %66 = vector.shape_cast %65 : vector<1x64x32xf32> to vector<64x32xf32>
    %cst_49 = arith.constant dense<0.000000e+00> : vector<16x32xf32>
    %67 = tpu.matmul %64, %66, %cst_49 {dimension_numbers = #tpu.dot_dimension_numbers<[1], [0], [0], [1], [0, 0, 1, 1], [], []>} : vector<16x64xf32>, vector<64x32xf32>, vector<16x32xf32> -> vector<16x32xf32>
    %68 = vector.extract_strided_slice %9 {offsets = [1, 0], sizes = [1, 32], strides = [1, 1]} : vector<2x32xf32> to vector<1x32xf32>
    %69 = vector.broadcast %68 : vector<1x32xf32> to vector<16x32xf32>
    %70 = arith.addf %67, %69 : vector<16x32xf32>
    %cst_50 = arith.constant 0.000000e+00 : f32
    %71 = vector.broadcast %cst_50 : f32 to vector<16x32xf32>
    %72 = arith.maximumf %70, %71 : vector<16x32xf32>
    %c1 = arith.constant 1 : index
    %c0_51 = arith.constant 0 : index
    %c0_52 = arith.constant 0 : index
    %73 = vector.load %arg12[%c1, %c0_51, %c0_52] : memref<3x4x64xf32, #tpu.memory_space<vmem>>, vector<1x4x64xf32>
    %74 = vector.shape_cast %73 : vector<1x4x64xf32> to vector<4x64xf32>
    %c1_53 = arith.constant 1 : index
    %c0_54 = arith.constant 0 : index
    %c0_55 = arith.constant 0 : index
    %75 = vector.load %arg13[%c1_53, %c0_54, %c0_55] : memref<3x2x32xf32, #tpu.memory_space<vmem>>, vector<1x2x32xf32>
    %76 = vector.shape_cast %75 : vector<1x2x32xf32> to vector<2x32xf32>
    %cst_56 = arith.constant dense<0.000000e+00> : vector<16x32xf32>
    %77 = tpu.matmul %0, %72, %cst_56 {dimension_numbers = #tpu.dot_dimension_numbers<[1], [0], [0], [1], [0, 0, 1, 1], [], []>} : vector<16x16xf32>, vector<16x32xf32>, vector<16x32xf32> -> vector<16x32xf32>
    %78 = vector.extract_strided_slice %77 {offsets = [0, 0], sizes = [8, 32], strides = [1, 1]} : vector<16x32xf32> to vector<8x32xf32>
    %79 = vector.extract_strided_slice %77 {offsets = [8, 0], sizes = [8, 32], strides = [1, 1]} : vector<16x32xf32> to vector<8x32xf32>
    %c1_57 = arith.constant 1 : index
    %c0_58 = arith.constant 0 : index
    %c0_59 = arith.constant 0 : index
    %80 = vector.load %arg6[%c1_57, %c0_58, %c0_59] : memref<3x96x64xf32, #tpu.memory_space<vmem>>, vector<1x96x64xf32>
    %81 = vector.shape_cast %80 : vector<1x96x64xf32> to vector<96x64xf32>
    %82 = vector.extract_strided_slice %81 {offsets = [0, 0], sizes = [32, 64], strides = [1, 1]} : vector<96x64xf32> to vector<32x64xf32>
    %cst_60 = arith.constant dense<0.000000e+00> : vector<8x64xf32>
    %83 = tpu.matmul %78, %82, %cst_60 {dimension_numbers = #tpu.dot_dimension_numbers<[1], [0], [0], [1], [0, 0, 1, 1], [], []>} : vector<8x32xf32>, vector<32x64xf32>, vector<8x64xf32> -> vector<8x64xf32>
    %84 = vector.extract_strided_slice %81 {offsets = [32, 0], sizes = [32, 64], strides = [1, 1]} : vector<96x64xf32> to vector<32x64xf32>
    %cst_61 = arith.constant dense<0.000000e+00> : vector<8x64xf32>
    %85 = tpu.matmul %51, %84, %cst_61 {dimension_numbers = #tpu.dot_dimension_numbers<[1], [0], [0], [1], [0, 0, 1, 1], [], []>} : vector<8x32xf32>, vector<32x64xf32>, vector<8x64xf32> -> vector<8x64xf32>
    %86 = arith.addf %83, %85 : vector<8x64xf32>
    %87 = vector.extract_strided_slice %81 {offsets = [64, 0], sizes = [32, 64], strides = [1, 1]} : vector<96x64xf32> to vector<32x64xf32>
    %cst_62 = arith.constant dense<0.000000e+00> : vector<8x64xf32>
    %88 = tpu.matmul %79, %87, %cst_62 {dimension_numbers = #tpu.dot_dimension_numbers<[1], [0], [0], [1], [0, 0, 1, 1], [], []>} : vector<8x32xf32>, vector<32x64xf32>, vector<8x64xf32> -> vector<8x64xf32>
    %89 = arith.addf %86, %88 : vector<8x64xf32>
    %90 = vector.extract_strided_slice %74 {offsets = [0, 0], sizes = [1, 64], strides = [1, 1]} : vector<4x64xf32> to vector<1x64xf32>
    %91 = vector.broadcast %90 : vector<1x64xf32> to vector<8x64xf32>
    %92 = arith.addf %89, %91 : vector<8x64xf32>
    %cst_63 = arith.constant 0.000000e+00 : f32
    %93 = vector.broadcast %cst_63 : f32 to vector<8x64xf32>
    %94 = arith.maximumf %92, %93 : vector<8x64xf32>
    %c1_64 = arith.constant 1 : index
    %c0_65 = arith.constant 0 : index
    %c0_66 = arith.constant 0 : index
    %95 = vector.load %arg7[%c1_64, %c0_65, %c0_66] : memref<3x64x64xf32, #tpu.memory_space<vmem>>, vector<1x64x64xf32>
    %96 = vector.shape_cast %95 : vector<1x64x64xf32> to vector<64x64xf32>
    %cst_67 = arith.constant dense<0.000000e+00> : vector<8x64xf32>
    %97 = tpu.matmul %94, %96, %cst_67 {dimension_numbers = #tpu.dot_dimension_numbers<[1], [0], [0], [1], [0, 0, 1, 1], [], []>} : vector<8x64xf32>, vector<64x64xf32>, vector<8x64xf32> -> vector<8x64xf32>
    %98 = vector.extract_strided_slice %74 {offsets = [1, 0], sizes = [1, 64], strides = [1, 1]} : vector<4x64xf32> to vector<1x64xf32>
    %99 = vector.broadcast %98 : vector<1x64xf32> to vector<8x64xf32>
    %100 = arith.addf %97, %99 : vector<8x64xf32>
    %cst_68 = arith.constant 0.000000e+00 : f32
    %101 = vector.broadcast %cst_68 : f32 to vector<8x64xf32>
    %102 = arith.maximumf %100, %101 : vector<8x64xf32>
    %c1_69 = arith.constant 1 : index
    %c0_70 = arith.constant 0 : index
    %c0_71 = arith.constant 0 : index
    %103 = vector.load %arg8[%c1_69, %c0_70, %c0_71] : memref<3x64x64xf32, #tpu.memory_space<vmem>>, vector<1x64x64xf32>
    %104 = vector.shape_cast %103 : vector<1x64x64xf32> to vector<64x64xf32>
    %cst_72 = arith.constant dense<0.000000e+00> : vector<8x64xf32>
    %105 = tpu.matmul %94, %104, %cst_72 {dimension_numbers = #tpu.dot_dimension_numbers<[1], [0], [0], [1], [0, 0, 1, 1], [], []>} : vector<8x64xf32>, vector<64x64xf32>, vector<8x64xf32> -> vector<8x64xf32>
    %106 = vector.extract_strided_slice %74 {offsets = [2, 0], sizes = [1, 64], strides = [1, 1]} : vector<4x64xf32> to vector<1x64xf32>
    %107 = vector.broadcast %106 : vector<1x64xf32> to vector<8x64xf32>
    %108 = arith.addf %105, %107 : vector<8x64xf32>
    %cst_73 = arith.constant 0.000000e+00 : f32
    %109 = vector.broadcast %cst_73 : f32 to vector<8x64xf32>
    %110 = arith.maximumf %108, %109 : vector<8x64xf32>
    %c1_74 = arith.constant 1 : index
    %c0_75 = arith.constant 0 : index
    %c0_76 = arith.constant 0 : index
    %111 = vector.load %arg9[%c1_74, %c0_75, %c0_76] : memref<3x64x32xf32, #tpu.memory_space<vmem>>, vector<1x64x32xf32>
    %112 = vector.shape_cast %111 : vector<1x64x32xf32> to vector<64x32xf32>
    %cst_77 = arith.constant dense<0.000000e+00> : vector<8x32xf32>
    %113 = tpu.matmul %94, %112, %cst_77 {dimension_numbers = #tpu.dot_dimension_numbers<[1], [0], [0], [1], [0, 0, 1, 1], [], []>} : vector<8x64xf32>, vector<64x32xf32>, vector<8x32xf32> -> vector<8x32xf32>
    %114 = vector.extract_strided_slice %76 {offsets = [0, 0], sizes = [1, 32], strides = [1, 1]} : vector<2x32xf32> to vector<1x32xf32>
    %115 = vector.broadcast %114 : vector<1x32xf32> to vector<8x32xf32>
    %116 = arith.addf %113, %115 : vector<8x32xf32>
    %cst_78 = arith.constant 0.000000e+00 : f32
    %117 = vector.broadcast %cst_78 : f32 to vector<8x32xf32>
    %118 = arith.maximumf %116, %117 : vector<8x32xf32>
    %cst_79 = arith.constant dense<0.000000e+00> : vector<16x64xf32>
    %119 = tpu.matmul %1, %102, %cst_79 {dimension_numbers = #tpu.dot_dimension_numbers<[1], [0], [0], [1], [0, 0, 1, 1], [], []>} : vector<16x8xf32>, vector<8x64xf32>, vector<16x64xf32> -> vector<16x64xf32>
    %cst_80 = arith.constant dense<0.000000e+00> : vector<16x64xf32>
    %120 = tpu.matmul %2, %110, %cst_80 {dimension_numbers = #tpu.dot_dimension_numbers<[1], [0], [0], [1], [0, 0, 1, 1], [], []>} : vector<16x8xf32>, vector<8x64xf32>, vector<16x64xf32> -> vector<16x64xf32>
    %121 = arith.addf %119, %120 : vector<16x64xf32>
    %122 = vector.broadcast %3 : vector<16x1xf32> to vector<16x64xf32>
    %123 = arith.mulf %121, %122 : vector<16x64xf32>
    %c1_81 = arith.constant 1 : index
    %c0_82 = arith.constant 0 : index
    %c0_83 = arith.constant 0 : index
    %124 = vector.load %arg10[%c1_81, %c0_82, %c0_83] : memref<3x64x64xf32, #tpu.memory_space<vmem>>, vector<1x64x64xf32>
    %125 = vector.shape_cast %124 : vector<1x64x64xf32> to vector<64x64xf32>
    %cst_84 = arith.constant dense<0.000000e+00> : vector<16x64xf32>
    %126 = tpu.matmul %123, %125, %cst_84 {dimension_numbers = #tpu.dot_dimension_numbers<[1], [0], [0], [1], [0, 0, 1, 1], [], []>} : vector<16x64xf32>, vector<64x64xf32>, vector<16x64xf32> -> vector<16x64xf32>
    %127 = vector.extract_strided_slice %74 {offsets = [3, 0], sizes = [1, 64], strides = [1, 1]} : vector<4x64xf32> to vector<1x64xf32>
    %128 = vector.broadcast %127 : vector<1x64xf32> to vector<16x64xf32>
    %129 = arith.addf %126, %128 : vector<16x64xf32>
    %cst_85 = arith.constant 0.000000e+00 : f32
    %130 = vector.broadcast %cst_85 : f32 to vector<16x64xf32>
    %131 = arith.maximumf %129, %130 : vector<16x64xf32>
    %c1_86 = arith.constant 1 : index
    %c0_87 = arith.constant 0 : index
    %c0_88 = arith.constant 0 : index
    %132 = vector.load %arg11[%c1_86, %c0_87, %c0_88] : memref<3x64x32xf32, #tpu.memory_space<vmem>>, vector<1x64x32xf32>
    %133 = vector.shape_cast %132 : vector<1x64x32xf32> to vector<64x32xf32>
    %cst_89 = arith.constant dense<0.000000e+00> : vector<16x32xf32>
    %134 = tpu.matmul %131, %133, %cst_89 {dimension_numbers = #tpu.dot_dimension_numbers<[1], [0], [0], [1], [0, 0, 1, 1], [], []>} : vector<16x64xf32>, vector<64x32xf32>, vector<16x32xf32> -> vector<16x32xf32>
    %135 = vector.extract_strided_slice %76 {offsets = [1, 0], sizes = [1, 32], strides = [1, 1]} : vector<2x32xf32> to vector<1x32xf32>
    %136 = vector.broadcast %135 : vector<1x32xf32> to vector<16x32xf32>
    %137 = arith.addf %134, %136 : vector<16x32xf32>
    %cst_90 = arith.constant 0.000000e+00 : f32
    %138 = vector.broadcast %cst_90 : f32 to vector<16x32xf32>
    %139 = arith.maximumf %137, %138 : vector<16x32xf32>
    %c2 = arith.constant 2 : index
    %c0_91 = arith.constant 0 : index
    %c0_92 = arith.constant 0 : index
    %140 = vector.load %arg12[%c2, %c0_91, %c0_92] : memref<3x4x64xf32, #tpu.memory_space<vmem>>, vector<1x4x64xf32>
    %141 = vector.shape_cast %140 : vector<1x4x64xf32> to vector<4x64xf32>
    %c2_93 = arith.constant 2 : index
    %c0_94 = arith.constant 0 : index
    %c0_95 = arith.constant 0 : index
    %142 = vector.load %arg13[%c2_93, %c0_94, %c0_95] : memref<3x2x32xf32, #tpu.memory_space<vmem>>, vector<1x2x32xf32>
    %143 = vector.shape_cast %142 : vector<1x2x32xf32> to vector<2x32xf32>
    %cst_96 = arith.constant dense<0.000000e+00> : vector<16x32xf32>
    %144 = tpu.matmul %0, %139, %cst_96 {dimension_numbers = #tpu.dot_dimension_numbers<[1], [0], [0], [1], [0, 0, 1, 1], [], []>} : vector<16x16xf32>, vector<16x32xf32>, vector<16x32xf32> -> vector<16x32xf32>
    %145 = vector.extract_strided_slice %144 {offsets = [0, 0], sizes = [8, 32], strides = [1, 1]} : vector<16x32xf32> to vector<8x32xf32>
    %146 = vector.extract_strided_slice %144 {offsets = [8, 0], sizes = [8, 32], strides = [1, 1]} : vector<16x32xf32> to vector<8x32xf32>
    %c2_97 = arith.constant 2 : index
    %c0_98 = arith.constant 0 : index
    %c0_99 = arith.constant 0 : index
    %147 = vector.load %arg6[%c2_97, %c0_98, %c0_99] : memref<3x96x64xf32, #tpu.memory_space<vmem>>, vector<1x96x64xf32>
    %148 = vector.shape_cast %147 : vector<1x96x64xf32> to vector<96x64xf32>
    %149 = vector.extract_strided_slice %148 {offsets = [0, 0], sizes = [32, 64], strides = [1, 1]} : vector<96x64xf32> to vector<32x64xf32>
    %cst_100 = arith.constant dense<0.000000e+00> : vector<8x64xf32>
    %150 = tpu.matmul %145, %149, %cst_100 {dimension_numbers = #tpu.dot_dimension_numbers<[1], [0], [0], [1], [0, 0, 1, 1], [], []>} : vector<8x32xf32>, vector<32x64xf32>, vector<8x64xf32> -> vector<8x64xf32>
    %151 = vector.extract_strided_slice %148 {offsets = [32, 0], sizes = [32, 64], strides = [1, 1]} : vector<96x64xf32> to vector<32x64xf32>
    %cst_101 = arith.constant dense<0.000000e+00> : vector<8x64xf32>
    %152 = tpu.matmul %118, %151, %cst_101 {dimension_numbers = #tpu.dot_dimension_numbers<[1], [0], [0], [1], [0, 0, 1, 1], [], []>} : vector<8x32xf32>, vector<32x64xf32>, vector<8x64xf32> -> vector<8x64xf32>
    %153 = arith.addf %150, %152 : vector<8x64xf32>
    %154 = vector.extract_strided_slice %148 {offsets = [64, 0], sizes = [32, 64], strides = [1, 1]} : vector<96x64xf32> to vector<32x64xf32>
    %cst_102 = arith.constant dense<0.000000e+00> : vector<8x64xf32>
    %155 = tpu.matmul %146, %154, %cst_102 {dimension_numbers = #tpu.dot_dimension_numbers<[1], [0], [0], [1], [0, 0, 1, 1], [], []>} : vector<8x32xf32>, vector<32x64xf32>, vector<8x64xf32> -> vector<8x64xf32>
    %156 = arith.addf %153, %155 : vector<8x64xf32>
    %157 = vector.extract_strided_slice %141 {offsets = [0, 0], sizes = [1, 64], strides = [1, 1]} : vector<4x64xf32> to vector<1x64xf32>
    %158 = vector.broadcast %157 : vector<1x64xf32> to vector<8x64xf32>
    %159 = arith.addf %156, %158 : vector<8x64xf32>
    %cst_103 = arith.constant 0.000000e+00 : f32
    %160 = vector.broadcast %cst_103 : f32 to vector<8x64xf32>
    %161 = arith.maximumf %159, %160 : vector<8x64xf32>
    %c2_104 = arith.constant 2 : index
    %c0_105 = arith.constant 0 : index
    %c0_106 = arith.constant 0 : index
    %162 = vector.load %arg7[%c2_104, %c0_105, %c0_106] : memref<3x64x64xf32, #tpu.memory_space<vmem>>, vector<1x64x64xf32>
    %163 = vector.shape_cast %162 : vector<1x64x64xf32> to vector<64x64xf32>
    %cst_107 = arith.constant dense<0.000000e+00> : vector<8x64xf32>
    %164 = tpu.matmul %161, %163, %cst_107 {dimension_numbers = #tpu.dot_dimension_numbers<[1], [0], [0], [1], [0, 0, 1, 1], [], []>} : vector<8x64xf32>, vector<64x64xf32>, vector<8x64xf32> -> vector<8x64xf32>
    %165 = vector.extract_strided_slice %141 {offsets = [1, 0], sizes = [1, 64], strides = [1, 1]} : vector<4x64xf32> to vector<1x64xf32>
    %166 = vector.broadcast %165 : vector<1x64xf32> to vector<8x64xf32>
    %167 = arith.addf %164, %166 : vector<8x64xf32>
    %cst_108 = arith.constant 0.000000e+00 : f32
    %168 = vector.broadcast %cst_108 : f32 to vector<8x64xf32>
    %169 = arith.maximumf %167, %168 : vector<8x64xf32>
    %c2_109 = arith.constant 2 : index
    %c0_110 = arith.constant 0 : index
    %c0_111 = arith.constant 0 : index
    %170 = vector.load %arg8[%c2_109, %c0_110, %c0_111] : memref<3x64x64xf32, #tpu.memory_space<vmem>>, vector<1x64x64xf32>
    %171 = vector.shape_cast %170 : vector<1x64x64xf32> to vector<64x64xf32>
    %cst_112 = arith.constant dense<0.000000e+00> : vector<8x64xf32>
    %172 = tpu.matmul %161, %171, %cst_112 {dimension_numbers = #tpu.dot_dimension_numbers<[1], [0], [0], [1], [0, 0, 1, 1], [], []>} : vector<8x64xf32>, vector<64x64xf32>, vector<8x64xf32> -> vector<8x64xf32>
    %173 = vector.extract_strided_slice %141 {offsets = [2, 0], sizes = [1, 64], strides = [1, 1]} : vector<4x64xf32> to vector<1x64xf32>
    %174 = vector.broadcast %173 : vector<1x64xf32> to vector<8x64xf32>
    %175 = arith.addf %172, %174 : vector<8x64xf32>
    %cst_113 = arith.constant 0.000000e+00 : f32
    %176 = vector.broadcast %cst_113 : f32 to vector<8x64xf32>
    %177 = arith.maximumf %175, %176 : vector<8x64xf32>
    %c2_114 = arith.constant 2 : index
    %c0_115 = arith.constant 0 : index
    %c0_116 = arith.constant 0 : index
    %178 = vector.load %arg9[%c2_114, %c0_115, %c0_116] : memref<3x64x32xf32, #tpu.memory_space<vmem>>, vector<1x64x32xf32>
    %179 = vector.shape_cast %178 : vector<1x64x32xf32> to vector<64x32xf32>
    %cst_117 = arith.constant dense<0.000000e+00> : vector<8x32xf32>
    %180 = tpu.matmul %161, %179, %cst_117 {dimension_numbers = #tpu.dot_dimension_numbers<[1], [0], [0], [1], [0, 0, 1, 1], [], []>} : vector<8x64xf32>, vector<64x32xf32>, vector<8x32xf32> -> vector<8x32xf32>
    %181 = vector.extract_strided_slice %143 {offsets = [0, 0], sizes = [1, 32], strides = [1, 1]} : vector<2x32xf32> to vector<1x32xf32>
    %182 = vector.broadcast %181 : vector<1x32xf32> to vector<8x32xf32>
    %183 = arith.addf %180, %182 : vector<8x32xf32>
    %cst_118 = arith.constant 0.000000e+00 : f32
    %184 = vector.broadcast %cst_118 : f32 to vector<8x32xf32>
    %185 = arith.maximumf %183, %184 : vector<8x32xf32>
    %cst_119 = arith.constant dense<0.000000e+00> : vector<16x64xf32>
    %186 = tpu.matmul %1, %169, %cst_119 {dimension_numbers = #tpu.dot_dimension_numbers<[1], [0], [0], [1], [0, 0, 1, 1], [], []>} : vector<16x8xf32>, vector<8x64xf32>, vector<16x64xf32> -> vector<16x64xf32>
    %cst_120 = arith.constant dense<0.000000e+00> : vector<16x64xf32>
    %187 = tpu.matmul %2, %177, %cst_120 {dimension_numbers = #tpu.dot_dimension_numbers<[1], [0], [0], [1], [0, 0, 1, 1], [], []>} : vector<16x8xf32>, vector<8x64xf32>, vector<16x64xf32> -> vector<16x64xf32>
    %188 = arith.addf %186, %187 : vector<16x64xf32>
    %189 = vector.broadcast %3 : vector<16x1xf32> to vector<16x64xf32>
    %190 = arith.mulf %188, %189 : vector<16x64xf32>
    %c2_121 = arith.constant 2 : index
    %c0_122 = arith.constant 0 : index
    %c0_123 = arith.constant 0 : index
    %191 = vector.load %arg10[%c2_121, %c0_122, %c0_123] : memref<3x64x64xf32, #tpu.memory_space<vmem>>, vector<1x64x64xf32>
    %192 = vector.shape_cast %191 : vector<1x64x64xf32> to vector<64x64xf32>
    %cst_124 = arith.constant dense<0.000000e+00> : vector<16x64xf32>
    %193 = tpu.matmul %190, %192, %cst_124 {dimension_numbers = #tpu.dot_dimension_numbers<[1], [0], [0], [1], [0, 0, 1, 1], [], []>} : vector<16x64xf32>, vector<64x64xf32>, vector<16x64xf32> -> vector<16x64xf32>
    %194 = vector.extract_strided_slice %141 {offsets = [3, 0], sizes = [1, 64], strides = [1, 1]} : vector<4x64xf32> to vector<1x64xf32>
    %195 = vector.broadcast %194 : vector<1x64xf32> to vector<16x64xf32>
    %196 = arith.addf %193, %195 : vector<16x64xf32>
    %cst_125 = arith.constant 0.000000e+00 : f32
    %197 = vector.broadcast %cst_125 : f32 to vector<16x64xf32>
    %198 = arith.maximumf %196, %197 : vector<16x64xf32>
    %c2_126 = arith.constant 2 : index
    %c0_127 = arith.constant 0 : index
    %c0_128 = arith.constant 0 : index
    %199 = vector.load %arg11[%c2_126, %c0_127, %c0_128] : memref<3x64x32xf32, #tpu.memory_space<vmem>>, vector<1x64x32xf32>
    %200 = vector.shape_cast %199 : vector<1x64x32xf32> to vector<64x32xf32>
    %cst_129 = arith.constant dense<0.000000e+00> : vector<16x32xf32>
    %201 = tpu.matmul %198, %200, %cst_129 {dimension_numbers = #tpu.dot_dimension_numbers<[1], [0], [0], [1], [0, 0, 1, 1], [], []>} : vector<16x64xf32>, vector<64x32xf32>, vector<16x32xf32> -> vector<16x32xf32>
    %202 = vector.extract_strided_slice %143 {offsets = [1, 0], sizes = [1, 32], strides = [1, 1]} : vector<2x32xf32> to vector<1x32xf32>
    %203 = vector.broadcast %202 : vector<1x32xf32> to vector<16x32xf32>
    %204 = arith.addf %201, %203 : vector<16x32xf32>
    %cst_130 = arith.constant 0.000000e+00 : f32
    %205 = vector.broadcast %cst_130 : f32 to vector<16x32xf32>
    %206 = arith.maximumf %204, %205 : vector<16x32xf32>
    %c0_131 = arith.constant 0 : index
    %c0_132 = arith.constant 0 : index
    %207 = vector.load %arg14[%c0_131, %c0_132] : memref<16x32xf32, #tpu.memory_space<vmem>>, vector<16x32xf32>
    tpu.vector_store %arg14[%c0_131, %c0_132], %206 {strides = array<i32>} : memref<16x32xf32, #tpu.memory_space<vmem>>, vector<16x32xf32>,
    %c0_133 = arith.constant 0 : index
    %c0_134 = arith.constant 0 : index
    %208 = vector.load %arg15[%c0_133, %c0_134] : memref<8x32xf32, #tpu.memory_space<vmem>>, vector<8x32xf32>
    tpu.vector_store %arg15[%c0_133, %c0_134], %185 {strides = array<i32>} : memref<8x32xf32, #tpu.memory_space<vmem>>, vector<8x32xf32>,
    return
  }
}

</mosaic_0001>

<llo_original>
// kernel: tpu_custom_call.1
$region0: #{tpu_custom_call.1}
  #allocation0 [shape = 'u32[]', space=smem, size = 0x4, offset = 0x4, fixed_abs, tag = 'smem constant byte address 0x4 - core index']
  #allocation1 [shape = 'u32[144,128]{1,0:T(1,128)}', space=vmem, size = 0x12000, scoped, tag = 'internal scratch']
  %s0 = inlined_call_operand.vmem [shape: f32[16,16], index: 0, kind: input, shape index: {}]
  %s1 = inlined_call_operand.vmem [shape: f32[16,8], index: 1, kind: input, shape index: {}]
  %s2 = inlined_call_operand.vmem [shape: f32[16,8], index: 2, kind: input, shape index: {}]
  %s3 = inlined_call_operand.vmem [shape: f32[16,1], index: 3, kind: input, shape index: {}]
  %s4 = inlined_call_operand.hbm [shape: f32[16,32], index: 4, kind: input, shape index: {}, may-alias: {4,14}]
  %s5 = inlined_call_operand.hbm [shape: f32[8,32], index: 5, kind: input, shape index: {}, may-alias: {5,15}]
  %s6 = inlined_call_operand.vmem [shape: f32[3,96,64], index: 6, kind: input, shape index: {}]
  %s7 = inlined_call_operand.vmem [shape: f32[3,64,64], index: 7, kind: input, shape index: {}]
  %s8 = inlined_call_operand.vmem [shape: f32[3,64,64], index: 8, kind: input, shape index: {}]
  %s9 = inlined_call_operand.vmem [shape: f32[3,64,32], index: 9, kind: input, shape index: {}]
  %s10 = inlined_call_operand.vmem [shape: f32[3,64,64], index: 10, kind: input, shape index: {}]
  %s11 = inlined_call_operand.vmem [shape: f32[3,64,32], index: 11, kind: input, shape index: {}]
  %s12 = inlined_call_operand.vmem [shape: f32[3,4,64], index: 12, kind: input, shape index: {}]
  %s13 = inlined_call_operand.vmem [shape: f32[3,2,32], index: 13, kind: input, shape index: {}]
  %s14 = inlined_call_operand.hbm [shape: f32[16,32], index: 14, kind: output, shape index: {0}, may-alias: {4,14}]
  %s15 = inlined_call_operand.hbm [shape: f32[8,32], index: 15, kind: output, shape index: {1}, may-alias: {5,15}]
  %16 = xla_tuple %s14, %s15
  %s17 = sld [smem:[#allocation0]]
  $region82: #{tpu_custom_call.1} parent=0
    _
  %s19 = ssub.s32 1, %s17
  %s20 = scalar_select 0, %s19, %s17
  $region1: #{tpu_custom_call.1} parent=0
    #allocation2 [shape = 'u8[8192]{0}', space=vmem, size = 0x2000, scoped, tag = 'input window, operand 4, single buffered']
    #allocation3 [shape = 's32[1]{0}', space=sflag, size = 0x4, scoped, tag = 'scoped memory for tpu_custom_call.1']
    #allocation4 [shape = 's32[1]{0}', space=sflag, size = 0x4, scoped, tag = 'scoped memory for tpu_custom_call.1']
    #allocation5 [shape = 'u8[4096]{0}', space=vmem, size = 0x1000, scoped, tag = 'input window, operand 5, single buffered']
    #allocation6 [shape = 's32[1]{0}', space=sflag, size = 0x4, scoped, tag = 'scoped memory for tpu_custom_call.1']
    #allocation7 [shape = 'u8[8192]{0}', space=vmem, size = 0x2000, scoped, tag = 'output window, operand 0, single buffered']
    #allocation8 [shape = 'u8[4096]{0}', space=vmem, size = 0x1000, scoped, tag = 'output window, operand 1, single buffered']
    #allocation9 [shape = 's32[1]{0}', space=sflag, size = 0x4, scoped, tag = 'scoped memory for tpu_custom_call.1']
    %21 = vsyncpa [#allocation3], 0
    %22 = vsyncpa [#allocation6], 0
    %23 = vsyncpa [#allocation4], 0
    %24 = vsyncpa [#allocation9], 0
    // Predicated region
    $region2: #{tpu_custom_call.1} parent=1 // pred_check
      _
    $region3: #{tpu_custom_call.1} parent=1 // pred_check_branch
      %26 = sbr.rel (0) target = $region5
    $region4: #{tpu_custom_call.1} parent=1 // pred_region
      _
    $region5: #{tpu_custom_call.1} parent=1 // pred_fallthru
      _
    // Predicated region
    $region6: #{tpu_custom_call.1} parent=1 // pred_check
      _
    $region7: #{tpu_custom_call.1} parent=1 // pred_check_branch
      %28 = sbr.rel (0) target = $region9
    $region8: #{tpu_custom_call.1} parent=1 // pred_region
      _
    $region9: #{tpu_custom_call.1} parent=1 // pred_fallthru
      _
    // Predicated region
    $region10: #{tpu_custom_call.1} parent=1 // pred_check
      _
    $region11: #{tpu_custom_call.1} parent=1 // pred_check_branch
      %30 = sbr.rel (0) target = $region13
    $region12: #{tpu_custom_call.1} parent=1 // pred_region
      _
    $region13: #{tpu_custom_call.1} parent=1 // pred_fallthru
      _
    // Predicated region
    $region14: #{tpu_custom_call.1} parent=1 // pred_check
      _
    $region15: #{tpu_custom_call.1} parent=1 // pred_check_branch
      %32 = sbr.rel (0) target = $region17
    $region16: #{tpu_custom_call.1} parent=1 // pred_region
      _
    $region17: #{tpu_custom_call.1} parent=1 // pred_fallthru
      _
    // Predicated region
    $region18: #{tpu_custom_call.1} parent=1 // pred_check
      _
    $region19: #{tpu_custom_call.1} parent=1 // pred_check_branch
      %34 = sbr.rel (0) target = $region21
    $region20: #{tpu_custom_call.1} parent=1 // pred_region
      %s36 = ssub.s32 256, 256
      %37 = vsyncadd [#allocation3], %s36
      %s38 = sshll.u32 [#allocation2], 4
      %s39 = int_to_ptr.vmem [resolvable:$true] %s38
      %44 = dma.hbm_to_vmem [thread:$0]  %s4, 256, %s39, [#allocation3], 128, 128, 8
    $region21: #{tpu_custom_call.1} parent=1 // pred_fallthru
      _
    // Predicated region
    $region22: #{tpu_custom_call.1} parent=1 // pred_check
      _
    $region23: #{tpu_custom_call.1} parent=1 // pred_check_branch
      %46 = sbr.rel (0) target = $region25
    $region24: #{tpu_custom_call.1} parent=1 // pred_region
      %s48 = ssub.s32 128, 128
      %49 = vsyncadd [#allocation6], %s48
      %s51 = sshll.u32 [#allocation5], 4
      %s52 = int_to_ptr.vmem [resolvable:$true] %s51
      %54 = dma.hbm_to_vmem [thread:$0]  %s5, 128, %s52, [#allocation6]
    $region25: #{tpu_custom_call.1} parent=1 // pred_fallthru
      _
    // Predicated region
    $region26: #{tpu_custom_call.1} parent=1 // pred_check
      _
    $region27: #{tpu_custom_call.1} parent=1 // pred_check_branch
      %56 = sbr.rel (0) target = $region29
    $region28: #{tpu_custom_call.1} parent=1 // pred_region
      _
    $region29: #{tpu_custom_call.1} parent=1 // pred_fallthru
      _
    // Predicated region
    $region30: #{tpu_custom_call.1} parent=1 // pred_check
      _
    $region31: #{tpu_custom_call.1} parent=1 // pred_check_branch
      %58 = sbr.rel (0) target = $region33
    $region32: #{tpu_custom_call.1} parent=1 // pred_region
      _
    $region33: #{tpu_custom_call.1} parent=1 // pred_fallthru
      _
    // Predicated region
    $region34: #{tpu_custom_call.1} parent=1 // pred_check
      _
    $region35: #{tpu_custom_call.1} parent=1 // pred_check_branch
      %60 = sbr.rel (0) target = $region37
    $region36: #{tpu_custom_call.1} parent=1 // pred_region
      _
    $region37: #{tpu_custom_call.1} parent=1 // pred_fallthru
      _
    // Predicated region
    $region38: #{tpu_custom_call.1} parent=1 // pred_check
      _
    $region39: #{tpu_custom_call.1} parent=1 // pred_check_branch
      %62 = sbr.rel (0) target = $region41
    $region40: #{tpu_custom_call.1} parent=1 // pred_region
      _
    $region41: #{tpu_custom_call.1} parent=1 // pred_fallthru
      _
    // Predicated region
    $region42: #{tpu_custom_call.1} parent=1 // pred_check
      _
    $region43: #{tpu_custom_call.1} parent=1 // pred_check_branch
      %64 = sbr.rel (0) target = $region45
    $region44: #{tpu_custom_call.1} parent=1 // pred_region
      _
    $region45: #{tpu_custom_call.1} parent=1 // pred_fallthru
      _
    // Predicated region
    $region46: #{tpu_custom_call.1} parent=1 // pred_check
      _
    $region47: #{tpu_custom_call.1} parent=1 // pred_check_branch
      %66 = sbr.rel (0) target = $region49
    $region48: #{tpu_custom_call.1} parent=1 // pred_region
      _
    $region49: #{tpu_custom_call.1} parent=1 // pred_fallthru
      _
    // Predicated region
    $region50: #{tpu_custom_call.1} parent=1 // pred_check
      _
    $region51: #{tpu_custom_call.1} parent=1 // pred_check_branch
      %68 = sbr.rel (0) target = $region53
    $region52: #{tpu_custom_call.1} parent=1 // pred_region
      _
    $region53: #{tpu_custom_call.1} parent=1 // pred_fallthru
      _
    // Predicated region
    $region54: #{tpu_custom_call.1} parent=1 // pred_check
      _
    $region55: #{tpu_custom_call.1} parent=1 // pred_check_branch
      %70 = sbr.rel (0) target = $region57
    $region56: #{tpu_custom_call.1} parent=1 // pred_region
      _
    $region57: #{tpu_custom_call.1} parent=1 // pred_fallthru
      _
    // Predicated region
    $region58: #{tpu_custom_call.1} parent=1 // pred_check
      _
    $region59: #{tpu_custom_call.1} parent=1 // pred_check_branch
      %72 = sbr.rel (0) target = $region61
    $region60: #{tpu_custom_call.1} parent=1 // pred_region
      %73 = dma.done [#allocation3], 256
    $region61: #{tpu_custom_call.1} parent=1 // pred_fallthru
      _
    // Predicated region
    $region62: #{tpu_custom_call.1} parent=1 // pred_check
      _
    $region63: #{tpu_custom_call.1} parent=1 // pred_check_branch
      %75 = sbr.rel (0) target = $region65
    $region64: #{tpu_custom_call.1} parent=1 // pred_region
      %76 = dma.done [#allocation6], 128
    $region65: #{tpu_custom_call.1} parent=1 // pred_fallthru
      _
    %v77 = vld [vmem:[%s0] sm:$0xff]
    %v78 = vld [vmem:[%s0 + $0x8] sm:$0xff]
    %v79 = vld [vmem:[%s1] sm:$0xff]
    %v80 = vld [vmem:[%s1 + $0x8] sm:$0xff]
    %v81 = vld [vmem:[%s2] sm:$0xff]
    %v82 = vld [vmem:[%s2 + $0x8] sm:$0xff]
    %v83 = vld [vmem:[%s3] sm:$0xff]
    %v84 = vld [vmem:[%s3 + $0x8] sm:$0xff]
    %v85 = vld [vmem:[#allocation2] sm:$0xff]
    %v86 = vld [vmem:[#allocation2 + $0x8] sm:$0xff]
    %v87 = vld [vmem:[#allocation5] sm:$0xff]
    %v88 = vld [vmem:[%s12] sm:$0xf]
    %v89 = vld [vmem:[%s13] sm:$0x3]
    %vm90 = vcmask 130048
    %v92 = vsel %vm90, %v77, 0
    %v95 = vsel %vm90, %v78, 0
    %97 = vmatprep.subr.mxu0 0.0
    %98 = vmatpush1.msra.mxu0 %v85
    %99 = vmatprep.subr.mxu0 0.0
    %100 = vmatpush1.msra.mxu0 %v86
    %101 = vmatprep.subr.mxu0 0.0
    %102 = vmatpush1.msra.mxu0 0.0
    %103 = vmatprep.subr.mxu0 0.0
    %104 = vmatpush1.msra.mxu0 0.0
    %105 = vmatprep.subr.mxu0 0.0
    %106 = vmatpush1.msra.mxu0 0.0
    %107 = vmatprep.subr.mxu0 0.0
    %108 = vmatpush1.msra.mxu0 0.0
    %109 = vmatprep.subr.mxu0 0.0
    %110 = vmatpush1.msra.mxu0 0.0
    %111 = vmatprep.subr.mxu0 0.0
    %112 = vmatpush1.msra.mxu0 0.0
    %113 = vmatprep.subr.mxu0 0.0
    %114 = vmatpush1.msra.mxu0 0.0
    %115 = vmatprep.subr.mxu0 0.0
    %116 = vmatpush1.msra.mxu0 0.0
    %117 = vmatprep.subr.mxu0 0.0
    %118 = vmatpush1.msra.mxu0 0.0
    %119 = vmatprep.subr.mxu0 0.0
    %120 = vmatpush1.msra.mxu0 0.0
    %121 = vmatprep.subr.mxu0 0.0
    %122 = vmatpush1.msra.mxu0 0.0
    %123 = vmatprep.subr.mxu0 0.0
    %124 = vmatpush1.msra.mxu0 0.0
    %125 = vmatprep.subr.mxu0 0.0
    %126 = vmatpush1.msra.mxu0 0.0
    %127 = vmatprep.subr.mxu0 0.0
    %128 = vmatpush1.msra.mxu0 0.0
    %129 = vmatprep.subr.mxu0 0.0
    %130 = vmatpush1.msra.mxu0 0.0
    %131 = vmatprep.subr.mxu0 0.0
    %132 = vmatpush1.msra.mxu0 0.0
    %133 = vmatprep.subr.mxu0 0.0
    %134 = vmatpush1.msra.mxu0 0.0
    %135 = vmatprep.subr.mxu0 0.0
    %136 = vmatpush1.msra.mxu0 0.0
    %137 = vmatprep.subr.mxu0 0.0
    %138 = vmatpush1.msra.mxu0 0.0
    %139 = vmatprep.subr.mxu0 0.0
    %140 = vmatpush1.msra.mxu0 0.0
    %141 = vmatprep.subr.mxu0 0.0
    %142 = vmatpush1.msra.mxu0 0.0
    %143 = vmatprep.subr.mxu0 0.0
    %144 = vmatpush1.msra.mxu0 0.0
    %145 = vmatprep.subr.mxu0 0.0
    %146 = vmatpush1.msra.mxu0 0.0
    %147 = vmatprep.subr.mxu0 0.0
    %148 = vmatpush1.msra.mxu0 0.0
    %149 = vmatprep.subr.mxu0 0.0
    %150 = vmatpush1.msra.mxu0 0.0
    %151 = vmatprep.subr.mxu0 0.0
    %152 = vmatpush1.msra.mxu0 0.0
    %153 = vmatprep.subr.mxu0 0.0
    %154 = vmatpush1.msra.mxu0 0.0
    %155 = vmatprep.subr.mxu0 0.0
    %156 = vmatpush1.msra.mxu0 0.0
    %157 = vmatprep.subr.mxu0 0.0
    %158 = vmatpush1.msra.mxu0 0.0
    %159 = vmatprep.subr.mxu0 0.0
    %160 = vmatpush1.msra.mxu0 0.0
    %161 = vmatprep.mubr.f32.mxu0 0.0
    %162 = vmatmul.mubr.f32.gmra.mrb[0].mxu0 %v92
    %v163 = vpop.f32.mrb[0].mxu0
    %v164 = vadd.f32 0.0, %v163
    %v165 = vpop.f32.mrb[0].mxu0
    %166 = vmatprep.mubr.f32.mxu0 0.0
    %167 = vmatmul.mubr.f32.gmra.mrb[0].mxu0 %v95
    %v168 = vpop.f32.mrb[0].mxu0
    %v169 = vadd.f32 0.0, %v168
    %v170 = vpop.f32.mrb[0].mxu0
    %171 = vdwg.mxu0
    %v172 = vld [vmem:[%s6] sm:$0xff]
    %v173 = vld [vmem:[%s6 + $0x8] sm:$0xff]
    %v174 = vld [vmem:[%s6 + $0x10] sm:$0xff]
    %v175 = vld [vmem:[%s6 + $0x18] sm:$0xff]
    %v176 = vld [vmem:[%s6 + $0x20] sm:$0xff]
    %v177 = vld [vmem:[%s6 + $0x28] sm:$0xff]
    %v178 = vld [vmem:[%s6 + $0x30] sm:$0xff]
    %v179 = vld [vmem:[%s6 + $0x38] sm:$0xff]
    %v180 = vld [vmem:[%s6 + $0x40] sm:$0xff]
    %v181 = vld [vmem:[%s6 + $0x48] sm:$0xff]
    %v182 = vld [vmem:[%s6 + $0x50] sm:$0xff]
    %v183 = vld [vmem:[%s6 + $0x58] sm:$0xff]
    %vm184 = vcmask 261120
    %v186 = vsel %vm184, %v87, 0
    %188 = vmatprep.subr.mxu0 0.0
    %189 = vmatpush1.msra.mxu0 %v176
    %190 = vmatprep.subr.mxu0 0.0
    %191 = vmatpush1.msra.mxu0 %v177
    %192 = vmatprep.subr.mxu0 0.0
    %193 = vmatpush1.msra.mxu0 %v178
    %194 = vmatprep.subr.mxu0 0.0
    %195 = vmatpush1.msra.mxu0 %v179
    %196 = vmatprep.subr.mxu0 0.0
    %197 = vmatpush1.msra.mxu0 0.0
    %198 = vmatprep.subr.mxu0 0.0
    %199 = vmatpush1.msra.mxu0 0.0
    %200 = vmatprep.subr.mxu0 0.0
    %201 = vmatpush1.msra.mxu0 0.0
    %202 = vmatprep.subr.mxu0 0.0
    %203 = vmatpush1.msra.mxu0 0.0
    %204 = vmatprep.subr.mxu0 0.0
    %205 = vmatpush1.msra.mxu0 0.0
    %206 = vmatprep.subr.mxu0 0.0
    %207 = vmatpush1.msra.mxu0 0.0
    %208 = vmatprep.subr.mxu0 0.0
    %209 = vmatpush1.msra.mxu0 0.0
    %210 = vmatprep.subr.mxu0 0.0
    %211 = vmatpush1.msra.mxu0 0.0
    %212 = vmatprep.subr.mxu0 0.0
    %213 = vmatpush1.msra.mxu0 0.0
    %214 = vmatprep.subr.mxu0 0.0
    %215 = vmatpush1.msra.mxu0 0.0
    %216 = vmatprep.subr.mxu0 0.0
    %217 = vmatpush1.msra.mxu0 0.0
    %218 = vmatprep.subr.mxu0 0.0
    %219 = vmatpush1.msra.mxu0 0.0
    %220 = vmatprep.subr.mxu0 0.0
    %221 = vmatpush1.msra.mxu0 0.0
    %222 = vmatprep.subr.mxu0 0.0
    %223 = vmatpush1.msra.mxu0 0.0
    %224 = vmatprep.subr.mxu0 0.0
    %225 = vmatpush1.msra.mxu0 0.0
    %226 = vmatprep.subr.mxu0 0.0
    %227 = vmatpush1.msra.mxu0 0.0
    %228 = vmatprep.subr.mxu0 0.0
    %229 = vmatpush1.msra.mxu0 0.0
    %230 = vmatprep.subr.mxu0 0.0
    %231 = vmatpush1.msra.mxu0 0.0
    %232 = vmatprep.subr.mxu0 0.0
    %233 = vmatpush1.msra.mxu0 0.0
    %234 = vmatprep.subr.mxu0 0.0
    %235 = vmatpush1.msra.mxu0 0.0
    %236 = vmatprep.subr.mxu0 0.0
    %237 = vmatpush1.msra.mxu0 0.0
    %238 = vmatprep.subr.mxu0 0.0
    %239 = vmatpush1.msra.mxu0 0.0
    %240 = vmatprep.subr.mxu0 0.0
    %241 = vmatpush1.msra.mxu0 0.0
    %242 = vmatprep.subr.mxu0 0.0
    %243 = vmatpush1.msra.mxu0 0.0
    %244 = vmatprep.subr.mxu0 0.0
    %245 = vmatpush1.msra.mxu0 0.0
    %246 = vmatprep.subr.mxu0 0.0
    %247 = vmatpush1.msra.mxu0 0.0
    %248 = vmatprep.subr.mxu0 0.0
    %249 = vmatpush1.msra.mxu0 0.0
    %250 = vmatprep.subr.mxu0 0.0
    %251 = vmatpush1.msra.mxu0 0.0
    %252 = vmatprep.mubr.f32.mxu0 0.0
    %253 = vmatmul.mubr.f32.gmra.mrb[0].mxu0 %v186
    %v254 = vpop.f32.mrb[0].mxu0
    %v255 = vadd.f32 0.0, %v254
    %v256 = vpop.f32.mrb[0].mxu0
    %257 = vdwg.mxu0
    %v259 = vsel %vm184, %v164, 0
    %261 = vmatprep.subr.mxu0 0.0
    %262 = vmatpush1.msra.mxu0 %v172
    %263 = vmatprep.subr.mxu0 0.0
    %264 = vmatpush1.msra.mxu0 %v173
    %265 = vmatprep.subr.mxu0 0.0
    %266 = vmatpush1.msra.mxu0 %v174
    %267 = vmatprep.subr.mxu0 0.0
    %268 = vmatpush1.msra.mxu0 %v175
    %269 = vmatprep.subr.mxu0 0.0
    %270 = vmatpush1.msra.mxu0 0.0
    %271 = vmatprep.subr.mxu0 0.0
    %272 = vmatpush1.msra.mxu0 0.0
    %273 = vmatprep.subr.mxu0 0.0
    %274 = vmatpush1.msra.mxu0 0.0
    %275 = vmatprep.subr.mxu0 0.0
    %276 = vmatpush1.msra.mxu0 0.0
    %277 = vmatprep.subr.mxu0 0.0
    %278 = vmatpush1.msra.mxu0 0.0
    %279 = vmatprep.subr.mxu0 0.0
    %280 = vmatpush1.msra.mxu0 0.0
    %281 = vmatprep.subr.mxu0 0.0
    %282 = vmatpush1.msra.mxu0 0.0
    %283 = vmatprep.subr.mxu0 0.0
    %284 = vmatpush1.msra.mxu0 0.0
    %285 = vmatprep.subr.mxu0 0.0
    %286 = vmatpush1.msra.mxu0 0.0
    %287 = vmatprep.subr.mxu0 0.0
    %288 = vmatpush1.msra.mxu0 0.0
    %289 = vmatprep.subr.mxu0 0.0
    %290 = vmatpush1.msra.mxu0 0.0
    %291 = vmatprep.subr.mxu0 0.0
    %292 = vmatpush1.msra.mxu0 0.0
    %293 = vmatprep.subr.mxu0 0.0
    %294 = vmatpush1.msra.mxu0 0.0
    %295 = vmatprep.subr.mxu0 0.0
    %296 = vmatpush1.msra.mxu0 0.0
    %297 = vmatprep.subr.mxu0 0.0
    %298 = vmatpush1.msra.mxu0 0.0
    %299 = vmatprep.subr.mxu0 0.0
    %300 = vmatpush1.msra.mxu0 0.0
    %301 = vmatprep.subr.mxu0 0.0
    %302 = vmatpush1.msra.mxu0 0.0
    %303 = vmatprep.subr.mxu0 0.0
    %304 = vmatpush1.msra.mxu0 0.0
    %305 = vmatprep.subr.mxu0 0.0
    %306 = vmatpush1.msra.mxu0 0.0
    %307 = vmatprep.subr.mxu0 0.0
    %308 = vmatpush1.msra.mxu0 0.0
    %309 = vmatprep.subr.mxu0 0.0
    %310 = vmatpush1.msra.mxu0 0.0
    %311 = vmatprep.subr.mxu0 0.0
    %312 = vmatpush1.msra.mxu0 0.0
    %313 = vmatprep.subr.mxu0 0.0
    %314 = vmatpush1.msra.mxu0 0.0
    %315 = vmatprep.subr.mxu0 0.0
    %316 = vmatpush1.msra.mxu0 0.0
    %317 = vmatprep.subr.mxu0 0.0
    %318 = vmatpush1.msra.mxu0 0.0
    %319 = vmatprep.subr.mxu0 0.0
    %320 = vmatpush1.msra.mxu0 0.0
    %321 = vmatprep.subr.mxu0 0.0
    %322 = vmatpush1.msra.mxu0 0.0
    %323 = vmatprep.subr.mxu0 0.0
    %324 = vmatpush1.msra.mxu0 0.0
    %325 = vmatprep.mubr.f32.mxu0 0.0
    %326 = vmatmul.mubr.f32.gmra.mrb[0].mxu0 %v259
    %v327 = vpop.f32.mrb[0].mxu0
    %v328 = vadd.f32 %v255, %v327
    %v329 = vpop.f32.mrb[0].mxu0
    %330 = vdwg.mxu0
    %v332 = vsel %vm184, %v169, 0
    %334 = vmatprep.subr.mxu0 0.0
    %335 = vmatpush1.msra.mxu0 %v180
    %336 = vmatprep.subr.mxu0 0.0
    %337 = vmatpush1.msra.mxu0 %v181
    %338 = vmatprep.subr.mxu0 0.0
    %339 = vmatpush1.msra.mxu0 %v182
    %340 = vmatprep.subr.mxu0 0.0
    %341 = vmatpush1.msra.mxu0 %v183
    %342 = vmatprep.subr.mxu0 0.0
    %343 = vmatpush1.msra.mxu0 0.0
    %344 = vmatprep.subr.mxu0 0.0
    %345 = vmatpush1.msra.mxu0 0.0
    %346 = vmatprep.subr.mxu0 0.0
    %347 = vmatpush1.msra.mxu0 0.0
    %348 = vmatprep.subr.mxu0 0.0
    %349 = vmatpush1.msra.mxu0 0.0
    %350 = vmatprep.subr.mxu0 0.0
    %351 = vmatpush1.msra.mxu0 0.0
    %352 = vmatprep.subr.mxu0 0.0
    %353 = vmatpush1.msra.mxu0 0.0
    %354 = vmatprep.subr.mxu0 0.0
    %355 = vmatpush1.msra.mxu0 0.0
    %356 = vmatprep.subr.mxu0 0.0
    %357 = vmatpush1.msra.mxu0 0.0
    %358 = vmatprep.subr.mxu0 0.0
    %359 = vmatpush1.msra.mxu0 0.0
    %360 = vmatprep.subr.mxu0 0.0
    %361 = vmatpush1.msra.mxu0 0.0
    %362 = vmatprep.subr.mxu0 0.0
    %363 = vmatpush1.msra.mxu0 0.0
    %364 = vmatprep.subr.mxu0 0.0
    %365 = vmatpush1.msra.mxu0 0.0
    %366 = vmatprep.subr.mxu0 0.0
    %367 = vmatpush1.msra.mxu0 0.0
    %368 = vmatprep.subr.mxu0 0.0
    %369 = vmatpush1.msra.mxu0 0.0
    %370 = vmatprep.subr.mxu0 0.0
    %371 = vmatpush1.msra.mxu0 0.0
    %372 = vmatprep.subr.mxu0 0.0
    %373 = vmatpush1.msra.mxu0 0.0
    %374 = vmatprep.subr.mxu0 0.0
    %375 = vmatpush1.msra.mxu0 0.0
    %376 = vmatprep.subr.mxu0 0.0
    %377 = vmatpush1.msra.mxu0 0.0
    %378 = vmatprep.subr.mxu0 0.0
    %379 = vmatpush1.msra.mxu0 0.0
    %380 = vmatprep.subr.mxu0 0.0
    %381 = vmatpush1.msra.mxu0 0.0
    %382 = vmatprep.subr.mxu0 0.0
    %383 = vmatpush1.msra.mxu0 0.0
    %384 = vmatprep.subr.mxu0 0.0
    %385 = vmatpush1.msra.mxu0 0.0
    %386 = vmatprep.subr.mxu0 0.0
    %387 = vmatpush1.msra.mxu0 0.0
    %388 = vmatprep.subr.mxu0 0.0
    %389 = vmatpush1.msra.mxu0 0.0
    %390 = vmatprep.subr.mxu0 0.0
    %391 = vmatpush1.msra.mxu0 0.0
    %392 = vmatprep.subr.mxu0 0.0
    %393 = vmatpush1.msra.mxu0 0.0
    %394 = vmatprep.subr.mxu0 0.0
    %395 = vmatpush1.msra.mxu0 0.0
    %396 = vmatprep.subr.mxu0 0.0
    %397 = vmatpush1.msra.mxu0 0.0
    %398 = vmatprep.mubr.f32.mxu0 0.0
    %399 = vmatmul.mubr.f32.gmra.mrb[0].mxu0 %v332
    %v400 = vpop.f32.mrb[0].mxu0
    %v401 = vadd.f32 0.0, %v400
    %v402 = vpop.f32.mrb[0].mxu0
    %403 = vdwg.mxu0
    %v404 = vadd.f32 %v328, %v401
    %v405 = vlaneseq
    %v406 = vshrl.u32 %v405, 7
    %v407 = vsub.s32 0, %v406
    %v408 = vrot.slane %v88, %v407
    %v409 = vadd.f32 %v404, %v408
    %v410 = vmax.f32 %v409, 0.0
    %v411 = vld [vmem:[%s7] sm:$0xff]
    %v412 = vld [vmem:[%s7 + $0x8] sm:$0xff]
    %v413 = vld [vmem:[%s7 + $0x10] sm:$0xff]
    %v414 = vld [vmem:[%s7 + $0x18] sm:$0xff]
    %v415 = vld [vmem:[%s7 + $0x20] sm:$0xff]
    %v416 = vld [vmem:[%s7 + $0x28] sm:$0xff]
    %v417 = vld [vmem:[%s7 + $0x30] sm:$0xff]
    %v418 = vld [vmem:[%s7 + $0x38] sm:$0xff]
    %v419 = vlaneseq
    %v420 = vshrl.u32 %v419, 7
    %v421 = vsub.s32 1, %v420
    %v422 = vrot.slane %v88, %v421
    %vm423 = vcmask 523264
    %v425 = vsel %vm423, %v410, 0
    %427 = vmatprep.subr.mxu0 0.0
    %428 = vmatpush1.msra.mxu0 %v411
    %429 = vmatprep.subr.mxu0 0.0
    %430 = vmatpush1.msra.mxu0 %v412
    %431 = vmatprep.subr.mxu0 0.0
    %432 = vmatpush1.msra.mxu0 %v413
    %433 = vmatprep.subr.mxu0 0.0
    %434 = vmatpush1.msra.mxu0 %v414
    %435 = vmatprep.subr.mxu0 0.0
    %436 = vmatpush1.msra.mxu0 %v415
    %437 = vmatprep.subr.mxu0 0.0
    %438 = vmatpush1.msra.mxu0 %v416
    %439 = vmatprep.subr.mxu0 0.0
    %440 = vmatpush1.msra.mxu0 %v417
    %441 = vmatprep.subr.mxu0 0.0
    %442 = vmatpush1.msra.mxu0 %v418
    %443 = vmatprep.subr.mxu0 0.0
    %444 = vmatpush1.msra.mxu0 0.0
    %445 = vmatprep.subr.mxu0 0.0
    %446 = vmatpush1.msra.mxu0 0.0
    %447 = vmatprep.subr.mxu0 0.0
    %448 = vmatpush1.msra.mxu0 0.0
    %449 = vmatprep.subr.mxu0 0.0
    %450 = vmatpush1.msra.mxu0 0.0
    %451 = vmatprep.subr.mxu0 0.0
    %452 = vmatpush1.msra.mxu0 0.0
    %453 = vmatprep.subr.mxu0 0.0
    %454 = vmatpush1.msra.mxu0 0.0
    %455 = vmatprep.subr.mxu0 0.0
    %456 = vmatpush1.msra.mxu0 0.0
    %457 = vmatprep.subr.mxu0 0.0
    %458 = vmatpush1.msra.mxu0 0.0
    %459 = vmatprep.subr.mxu0 0.0
    %460 = vmatpush1.msra.mxu0 0.0
    %461 = vmatprep.subr.mxu0 0.0
    %462 = vmatpush1.msra.mxu0 0.0
    %463 = vmatprep.subr.mxu0 0.0
    %464 = vmatpush1.msra.mxu0 0.0
    %465 = vmatprep.subr.mxu0 0.0
    %466 = vmatpush1.msra.mxu0 0.0
    %467 = vmatprep.subr.mxu0 0.0
    %468 = vmatpush1.msra.mxu0 0.0
    %469 = vmatprep.subr.mxu0 0.0
    %470 = vmatpush1.msra.mxu0 0.0
    %471 = vmatprep.subr.mxu0 0.0
    %472 = vmatpush1.msra.mxu0 0.0
    %473 = vmatprep.subr.mxu0 0.0
    %474 = vmatpush1.msra.mxu0 0.0
    %475 = vmatprep.subr.mxu0 0.0
    %476 = vmatpush1.msra.mxu0 0.0
    %477 = vmatprep.subr.mxu0 0.0
    %478 = vmatpush1.msra.mxu0 0.0
    %479 = vmatprep.subr.mxu0 0.0
    %480 = vmatpush1.msra.mxu0 0.0
    %481 = vmatprep.subr.mxu0 0.0
    %482 = vmatpush1.msra.mxu0 0.0
    %483 = vmatprep.subr.mxu0 0.0
    %484 = vmatpush1.msra.mxu0 0.0
    %485 = vmatprep.subr.mxu0 0.0
    %486 = vmatpush1.msra.mxu0 0.0
    %487 = vmatprep.subr.mxu0 0.0
    %488 = vmatpush1.msra.mxu0 0.0
    %489 = vmatprep.subr.mxu0 0.0
    %490 = vmatpush1.msra.mxu0 0.0
    %491 = vmatprep.mubr.f32.mxu0 0.0
    %492 = vmatmul.mubr.f32.gmra.mrb[0].mxu0 %v425
    %v493 = vpop.f32.mrb[0].mxu0
    %v494 = vadd.f32 %v422, %v493
    %v495 = vpop.f32.mrb[0].mxu0
    %496 = vdwg.mxu0
    %v497 = vmax.f32 %v494, 0.0
    %v498 = vld [vmem:[%s8] sm:$0xff]
    %v499 = vld [vmem:[%s8 + $0x8] sm:$0xff]
    %v500 = vld [vmem:[%s8 + $0x10] sm:$0xff]
    %v501 = vld [vmem:[%s8 + $0x18] sm:$0xff]
    %v502 = vld [vmem:[%s8 + $0x20] sm:$0xff]
    %v503 = vld [vmem:[%s8 + $0x28] sm:$0xff]
    %v504 = vld [vmem:[%s8 + $0x30] sm:$0xff]
    %v505 = vld [vmem:[%s8 + $0x38] sm:$0xff]
    %v506 = vlaneseq
    %v507 = vshrl.u32 %v506, 7
    %v508 = vsub.s32 2, %v507
    %v509 = vrot.slane %v88, %v508
    %510 = vmatprep.subr.mxu0 0.0
    %511 = vmatpush1.msra.mxu0 %v498
    %512 = vmatprep.subr.mxu0 0.0
    %513 = vmatpush1.msra.mxu0 %v499
    %514 = vmatprep.subr.mxu0 0.0
    %515 = vmatpush1.msra.mxu0 %v500
    %516 = vmatprep.subr.mxu0 0.0
    %517 = vmatpush1.msra.mxu0 %v501
    %518 = vmatprep.subr.mxu0 0.0
    %519 = vmatpush1.msra.mxu0 %v502
    %520 = vmatprep.subr.mxu0 0.0
    %521 = vmatpush1.msra.mxu0 %v503
    %522 = vmatprep.subr.mxu0 0.0
    %523 = vmatpush1.msra.mxu0 %v504
    %524 = vmatprep.subr.mxu0 0.0
    %525 = vmatpush1.msra.mxu0 %v505
    %526 = vmatprep.subr.mxu0 0.0
    %527 = vmatpush1.msra.mxu0 0.0
    %528 = vmatprep.subr.mxu0 0.0
    %529 = vmatpush1.msra.mxu0 0.0
    %530 = vmatprep.subr.mxu0 0.0
    %531 = vmatpush1.msra.mxu0 0.0
    %532 = vmatprep.subr.mxu0 0.0
    %533 = vmatpush1.msra.mxu0 0.0
    %534 = vmatprep.subr.mxu0 0.0
    %535 = vmatpush1.msra.mxu0 0.0
    %536 = vmatprep.subr.mxu0 0.0
    %537 = vmatpush1.msra.mxu0 0.0
    %538 = vmatprep.subr.mxu0 0.0
    %539 = vmatpush1.msra.mxu0 0.0
    %540 = vmatprep.subr.mxu0 0.0
    %541 = vmatpush1.msra.mxu0 0.0
    %542 = vmatprep.subr.mxu0 0.0
    %543 = vmatpush1.msra.mxu0 0.0
    %544 = vmatprep.subr.mxu0 0.0
    %545 = vmatpush1.msra.mxu0 0.0
    %546 = vmatprep.subr.mxu0 0.0
    %547 = vmatpush1.msra.mxu0 0.0
    %548 = vmatprep.subr.mxu0 0.0
    %549 = vmatpush1.msra.mxu0 0.0
    %550 = vmatprep.subr.mxu0 0.0
    %551 = vmatpush1.msra.mxu0 0.0
    %552 = vmatprep.subr.mxu0 0.0
    %553 = vmatpush1.msra.mxu0 0.0
    %554 = vmatprep.subr.mxu0 0.0
    %555 = vmatpush1.msra.mxu0 0.0
    %556 = vmatprep.subr.mxu0 0.0
    %557 = vmatpush1.msra.mxu0 0.0
    %558 = vmatprep.subr.mxu0 0.0
    %559 = vmatpush1.msra.mxu0 0.0
    %560 = vmatprep.subr.mxu0 0.0
    %561 = vmatpush1.msra.mxu0 0.0
    %562 = vmatprep.subr.mxu0 0.0
    %563 = vmatpush1.msra.mxu0 0.0
    %564 = vmatprep.subr.mxu0 0.0
    %565 = vmatpush1.msra.mxu0 0.0
    %566 = vmatprep.subr.mxu0 0.0
    %567 = vmatpush1.msra.mxu0 0.0
    %568 = vmatprep.subr.mxu0 0.0
    %569 = vmatpush1.msra.mxu0 0.0
    %570 = vmatprep.subr.mxu0 0.0
    %571 = vmatpush1.msra.mxu0 0.0
    %572 = vmatprep.subr.mxu0 0.0
    %573 = vmatpush1.msra.mxu0 0.0
    %574 = vmatprep.mubr.f32.mxu0 0.0
    %575 = vmatmul.mubr.f32.gmra.mrb[0].mxu0 %v425
    %v576 = vpop.f32.mrb[0].mxu0
    %v577 = vadd.f32 %v509, %v576
    %v578 = vpop.f32.mrb[0].mxu0
    %579 = vdwg.mxu0
    %v580 = vmax.f32 %v577, 0.0
    %v581 = vld [vmem:[%s9] sm:$0xff]
    %v582 = vld [vmem:[%s9 + $0x8] sm:$0xff]
    %v583 = vld [vmem:[%s9 + $0x10] sm:$0xff]
    %v584 = vld [vmem:[%s9 + $0x18] sm:$0xff]
    %v585 = vld [vmem:[%s9 + $0x20] sm:$0xff]
    %v586 = vld [vmem:[%s9 + $0x28] sm:$0xff]
    %v587 = vld [vmem:[%s9 + $0x30] sm:$0xff]
    %v588 = vld [vmem:[%s9 + $0x38] sm:$0xff]
    %v589 = vlaneseq
    %v590 = vshrl.u32 %v589, 7
    %v591 = vsub.s32 0, %v590
    %v592 = vrot.slane %v89, %v591
    %593 = vmatprep.subr.mxu0 0.0
    %594 = vmatpush1.msra.mxu0 %v581
    %595 = vmatprep.subr.mxu0 0.0
    %596 = vmatpush1.msra.mxu0 %v582
    %597 = vmatprep.subr.mxu0 0.0
    %598 = vmatpush1.msra.mxu0 %v583
    %599 = vmatprep.subr.mxu0 0.0
    %600 = vmatpush1.msra.mxu0 %v584
    %601 = vmatprep.subr.mxu0 0.0
    %602 = vmatpush1.msra.mxu0 %v585
    %603 = vmatprep.subr.mxu0 0.0
    %604 = vmatpush1.msra.mxu0 %v586
    %605 = vmatprep.subr.mxu0 0.0
    %606 = vmatpush1.msra.mxu0 %v587
    %607 = vmatprep.subr.mxu0 0.0
    %608 = vmatpush1.msra.mxu0 %v588
    %609 = vmatprep.subr.mxu0 0.0
    %610 = vmatpush1.msra.mxu0 0.0
    %611 = vmatprep.subr.mxu0 0.0
    %612 = vmatpush1.msra.mxu0 0.0
    %613 = vmatprep.subr.mxu0 0.0
    %614 = vmatpush1.msra.mxu0 0.0
    %615 = vmatprep.subr.mxu0 0.0
    %616 = vmatpush1.msra.mxu0 0.0
    %617 = vmatprep.subr.mxu0 0.0
    %618 = vmatpush1.msra.mxu0 0.0
    %619 = vmatprep.subr.mxu0 0.0
    %620 = vmatpush1.msra.mxu0 0.0
    %621 = vmatprep.subr.mxu0 0.0
    %622 = vmatpush1.msra.mxu0 0.0
    %623 = vmatprep.subr.mxu0 0.0
    %624 = vmatpush1.msra.mxu0 0.0
    %625 = vmatprep.subr.mxu0 0.0
    %626 = vmatpush1.msra.mxu0 0.0
    %627 = vmatprep.subr.mxu0 0.0
    %628 = vmatpush1.msra.mxu0 0.0
    %629 = vmatprep.subr.mxu0 0.0
    %630 = vmatpush1.msra.mxu0 0.0
    %631 = vmatprep.subr.mxu0 0.0
    %632 = vmatpush1.msra.mxu0 0.0
    %633 = vmatprep.subr.mxu0 0.0
    %634 = vmatpush1.msra.mxu0 0.0
    %635 = vmatprep.subr.mxu0 0.0
    %636 = vmatpush1.msra.mxu0 0.0
    %637 = vmatprep.subr.mxu0 0.0
    %638 = vmatpush1.msra.mxu0 0.0
    %639 = vmatprep.subr.mxu0 0.0
    %640 = vmatpush1.msra.mxu0 0.0
    %641 = vmatprep.subr.mxu0 0.0
    %642 = vmatpush1.msra.mxu0 0.0
    %643 = vmatprep.subr.mxu0 0.0
    %644 = vmatpush1.msra.mxu0 0.0
    %645 = vmatprep.subr.mxu0 0.0
    %646 = vmatpush1.msra.mxu0 0.0
    %647 = vmatprep.subr.mxu0 0.0
    %648 = vmatpush1.msra.mxu0 0.0
    %649 = vmatprep.subr.mxu0 0.0
    %650 = vmatpush1.msra.mxu0 0.0
    %651 = vmatprep.subr.mxu0 0.0
    %652 = vmatpush1.msra.mxu0 0.0
    %653 = vmatprep.subr.mxu0 0.0
    %654 = vmatpush1.msra.mxu0 0.0
    %655 = vmatprep.subr.mxu0 0.0
    %656 = vmatpush1.msra.mxu0 0.0
    %657 = vmatprep.mubr.f32.mxu0 0.0
    %658 = vmatmul.mubr.f32.gmra.mrb[0].mxu0 %v425
    %v659 = vpop.f32.mrb[0].mxu0
    %v660 = vadd.f32 %v592, %v659
    %v661 = vpop.f32.mrb[0].mxu0
    %662 = vdwg.mxu0
    %v663 = vmax.f32 %v660, 0.0
    %vm664 = vcmask 64512
    %v666 = vsel %vm664, %v81, 0
    %v669 = vsel %vm664, %v82, 0
    %671 = vmatprep.subr.mxu0 0.0
    %672 = vmatpush1.msra.mxu0 %v580
    %673 = vmatprep.subr.mxu0 0.0
    %674 = vmatpush1.msra.mxu0 0.0
    %675 = vmatprep.subr.mxu0 0.0
    %676 = vmatpush1.msra.mxu0 0.0
    %677 = vmatprep.subr.mxu0 0.0
    %678 = vmatpush1.msra.mxu0 0.0
    %679 = vmatprep.subr.mxu0 0.0
    %680 = vmatpush1.msra.mxu0 0.0
    %681 = vmatprep.subr.mxu0 0.0
    %682 = vmatpush1.msra.mxu0 0.0
    %683 = vmatprep.subr.mxu0 0.0
    %684 = vmatpush1.msra.mxu0 0.0
    %685 = vmatprep.subr.mxu0 0.0
    %686 = vmatpush1.msra.mxu0 0.0
    %687 = vmatprep.subr.mxu0 0.0
    %688 = vmatpush1.msra.mxu0 0.0
    %689 = vmatprep.subr.mxu0 0.0
    %690 = vmatpush1.msra.mxu0 0.0
    %691 = vmatprep.subr.mxu0 0.0
    %692 = vmatpush1.msra.mxu0 0.0
    %693 = vmatprep.subr.mxu0 0.0
    %694 = vmatpush1.msra.mxu0 0.0
    %695 = vmatprep.subr.mxu0 0.0
    %696 = vmatpush1.msra.mxu0 0.0
    %697 = vmatprep.subr.mxu0 0.0
    %698 = vmatpush1.msra.mxu0 0.0
    %699 = vmatprep.subr.mxu0 0.0
    %700 = vmatpush1.msra.mxu0 0.0
    %701 = vmatprep.subr.mxu0 0.0
    %702 = vmatpush1.msra.mxu0 0.0
    %703 = vmatprep.subr.mxu0 0.0
    %704 = vmatpush1.msra.mxu0 0.0
    %705 = vmatprep.subr.mxu0 0.0
    %706 = vmatpush1.msra.mxu0 0.0
    %707 = vmatprep.subr.mxu0 0.0
    %708 = vmatpush1.msra.mxu0 0.0
    %709 = vmatprep.subr.mxu0 0.0
    %710 = vmatpush1.msra.mxu0 0.0
    %711 = vmatprep.subr.mxu0 0.0
    %712 = vmatpush1.msra.mxu0 0.0
    %713 = vmatprep.subr.mxu0 0.0
    %714 = vmatpush1.msra.mxu0 0.0
    %715 = vmatprep.subr.mxu0 0.0
    %716 = vmatpush1.msra.mxu0 0.0
    %717 = vmatprep.subr.mxu0 0.0
    %718 = vmatpush1.msra.mxu0 0.0
    %719 = vmatprep.subr.mxu0 0.0
    %720 = vmatpush1.msra.mxu0 0.0
    %721 = vmatprep.subr.mxu0 0.0
    %722 = vmatpush1.msra.mxu0 0.0
    %723 = vmatprep.subr.mxu0 0.0
    %724 = vmatpush1.msra.mxu0 0.0
    %725 = vmatprep.subr.mxu0 0.0
    %726 = vmatpush1.msra.mxu0 0.0
    %727 = vmatprep.subr.mxu0 0.0
    %728 = vmatpush1.msra.mxu0 0.0
    %729 = vmatprep.subr.mxu0 0.0
    %730 = vmatpush1.msra.mxu0 0.0
    %731 = vmatprep.subr.mxu0 0.0
    %732 = vmatpush1.msra.mxu0 0.0
    %733 = vmatprep.subr.mxu0 0.0
    %734 = vmatpush1.msra.mxu0 0.0
    %735 = vmatprep.mubr.f32.mxu0 0.0
    %736 = vmatmul.mubr.f32.gmra.mrb[0].mxu0 %v666
    %v737 = vpop.f32.mrb[0].mxu0
    %v738 = vadd.f32 0.0, %v737
    %v739 = vpop.f32.mrb[0].mxu0
    %740 = vmatprep.mubr.f32.mxu0 0.0
    %741 = vmatmul.mubr.f32.gmra.mrb[0].mxu0 %v669
    %v742 = vpop.f32.mrb[0].mxu0
    %v743 = vadd.f32 0.0, %v742
    %v744 = vpop.f32.mrb[0].mxu0
    %745 = vdwg.mxu0
    %v747 = vsel %vm664, %v79, 0
    %v750 = vsel %vm664, %v80, 0
    %752 = vmatprep.subr.mxu0 0.0
    %753 = vmatpush1.msra.mxu0 %v497
    %754 = vmatprep.subr.mxu0 0.0
    %755 = vmatpush1.msra.mxu0 0.0
    %756 = vmatprep.subr.mxu0 0.0
    %757 = vmatpush1.msra.mxu0 0.0
    %758 = vmatprep.subr.mxu0 0.0
    %759 = vmatpush1.msra.mxu0 0.0
    %760 = vmatprep.subr.mxu0 0.0
    %761 = vmatpush1.msra.mxu0 0.0
    %762 = vmatprep.subr.mxu0 0.0
    %763 = vmatpush1.msra.mxu0 0.0
    %764 = vmatprep.subr.mxu0 0.0
    %765 = vmatpush1.msra.mxu0 0.0
    %766 = vmatprep.subr.mxu0 0.0
    %767 = vmatpush1.msra.mxu0 0.0
    %768 = vmatprep.subr.mxu0 0.0
    %769 = vmatpush1.msra.mxu0 0.0
    %770 = vmatprep.subr.mxu0 0.0
    %771 = vmatpush1.msra.mxu0 0.0
    %772 = vmatprep.subr.mxu0 0.0
    %773 = vmatpush1.msra.mxu0 0.0
    %774 = vmatprep.subr.mxu0 0.0
    %775 = vmatpush1.msra.mxu0 0.0
    %776 = vmatprep.subr.mxu0 0.0
    %777 = vmatpush1.msra.mxu0 0.0
    %778 = vmatprep.subr.mxu0 0.0
    %779 = vmatpush1.msra.mxu0 0.0
    %780 = vmatprep.subr.mxu0 0.0
    %781 = vmatpush1.msra.mxu0 0.0
    %782 = vmatprep.subr.mxu0 0.0
    %783 = vmatpush1.msra.mxu0 0.0
    %784 = vmatprep.subr.mxu0 0.0
    %785 = vmatpush1.msra.mxu0 0.0
    %786 = vmatprep.subr.mxu0 0.0
    %787 = vmatpush1.msra.mxu0 0.0
    %788 = vmatprep.subr.mxu0 0.0
    %789 = vmatpush1.msra.mxu0 0.0
    %790 = vmatprep.subr.mxu0 0.0
    %791 = vmatpush1.msra.mxu0 0.0
    %792 = vmatprep.subr.mxu0 0.0
    %793 = vmatpush1.msra.mxu0 0.0
    %794 = vmatprep.subr.mxu0 0.0
    %795 = vmatpush1.msra.mxu0 0.0
    %796 = vmatprep.subr.mxu0 0.0
    %797 = vmatpush1.msra.mxu0 0.0
    %798 = vmatprep.subr.mxu0 0.0
    %799 = vmatpush1.msra.mxu0 0.0
    %800 = vmatprep.subr.mxu0 0.0
    %801 = vmatpush1.msra.mxu0 0.0
    %802 = vmatprep.subr.mxu0 0.0
    %803 = vmatpush1.msra.mxu0 0.0
    %804 = vmatprep.subr.mxu0 0.0
    %805 = vmatpush1.msra.mxu0 0.0
    %806 = vmatprep.subr.mxu0 0.0
    %807 = vmatpush1.msra.mxu0 0.0
    %808 = vmatprep.subr.mxu0 0.0
    %809 = vmatpush1.msra.mxu0 0.0
    %810 = vmatprep.subr.mxu0 0.0
    %811 = vmatpush1.msra.mxu0 0.0
    %812 = vmatprep.subr.mxu0 0.0
    %813 = vmatpush1.msra.mxu0 0.0
    %814 = vmatprep.subr.mxu0 0.0
    %815 = vmatpush1.msra.mxu0 0.0
    %816 = vmatprep.mubr.f32.mxu0 0.0
    %817 = vmatmul.mubr.f32.gmra.mrb[0].mxu0 %v747
    %v818 = vpop.f32.mrb[0].mxu0
    %v819 = vadd.f32 %v738, %v818
    %v820 = vpop.f32.mrb[0].mxu0
    %821 = vmatprep.mubr.f32.mxu0 0.0
    %822 = vmatmul.mubr.f32.gmra.mrb[0].mxu0 %v750
    %v823 = vpop.f32.mrb[0].mxu0
    %v824 = vadd.f32 %v743, %v823
    %v825 = vpop.f32.mrb[0].mxu0
    %826 = vdwg.mxu0
    %828 = vset.pattern.permute.xlu0 0
    %829 = vperm.xlu0 %828, %v83
    %v830 = vpop.permute.xlu0 %829
    %833 = vset.pattern.permute.xlu0 0
    %834 = vperm.xlu0 %833, %v84
    %v835 = vpop.permute.xlu0 %834
    %v837 = vmul.f32 %v819, %v830
    %v838 = vmul.f32 %v824, %v835
    %v839 = vld [vmem:[%s10] sm:$0xff]
    %v840 = vld [vmem:[%s10 + $0x8] sm:$0xff]
    %v841 = vld [vmem:[%s10 + $0x10] sm:$0xff]
    %v842 = vld [vmem:[%s10 + $0x18] sm:$0xff]
    %v843 = vld [vmem:[%s10 + $0x20] sm:$0xff]
    %v844 = vld [vmem:[%s10 + $0x28] sm:$0xff]
    %v845 = vld [vmem:[%s10 + $0x30] sm:$0xff]
    %v846 = vld [vmem:[%s10 + $0x38] sm:$0xff]
    %v847 = vlaneseq
    %v848 = vshrl.u32 %v847, 7
    %v849 = vsub.s32 3, %v848
    %v850 = vrot.slane %v88, %v849
    %v852 = vsel %vm423, %v837, 0
    %v855 = vsel %vm423, %v838, 0
    %857 = vmatprep.subr.mxu0 0.0
    %858 = vmatpush1.msra.mxu0 %v839
    %859 = vmatprep.subr.mxu0 0.0
    %860 = vmatpush1.msra.mxu0 %v840
    %861 = vmatprep.subr.mxu0 0.0
    %862 = vmatpush1.msra.mxu0 %v841
    %863 = vmatprep.subr.mxu0 0.0
    %864 = vmatpush1.msra.mxu0 %v842
    %865 = vmatprep.subr.mxu0 0.0
    %866 = vmatpush1.msra.mxu0 %v843
    %867 = vmatprep.subr.mxu0 0.0
    %868 = vmatpush1.msra.mxu0 %v844
    %869 = vmatprep.subr.mxu0 0.0
    %870 = vmatpush1.msra.mxu0 %v845
    %871 = vmatprep.subr.mxu0 0.0
    %872 = vmatpush1.msra.mxu0 %v846
    %873 = vmatprep.subr.mxu0 0.0
    %874 = vmatpush1.msra.mxu0 0.0
    %875 = vmatprep.subr.mxu0 0.0
    %876 = vmatpush1.msra.mxu0 0.0
    %877 = vmatprep.subr.mxu0 0.0
    %878 = vmatpush1.msra.mxu0 0.0
    %879 = vmatprep.subr.mxu0 0.0
    %880 = vmatpush1.msra.mxu0 0.0
    %881 = vmatprep.subr.mxu0 0.0
    %882 = vmatpush1.msra.mxu0 0.0
    %883 = vmatprep.subr.mxu0 0.0
    %884 = vmatpush1.msra.mxu0 0.0
    %885 = vmatprep.subr.mxu0 0.0
    %886 = vmatpush1.msra.mxu0 0.0
    %887 = vmatprep.subr.mxu0 0.0
    %888 = vmatpush1.msra.mxu0 0.0
    %889 = vmatprep.subr.mxu0 0.0
    %890 = vmatpush1.msra.mxu0 0.0
    %891 = vmatprep.subr.mxu0 0.0
    %892 = vmatpush1.msra.mxu0 0.0
    %893 = vmatprep.subr.mxu0 0.0
    %894 = vmatpush1.msra.mxu0 0.0
    %895 = vmatprep.subr.mxu0 0.0
    %896 = vmatpush1.msra.mxu0 0.0
    %897 = vmatprep.subr.mxu0 0.0
    %898 = vmatpush1.msra.mxu0 0.0
    %899 = vmatprep.subr.mxu0 0.0
    %900 = vmatpush1.msra.mxu0 0.0
    %901 = vmatprep.subr.mxu0 0.0
    %902 = vmatpush1.msra.mxu0 0.0
    %903 = vmatprep.subr.mxu0 0.0
    %904 = vmatpush1.msra.mxu0 0.0
    %905 = vmatprep.subr.mxu0 0.0
    %906 = vmatpush1.msra.mxu0 0.0
    %907 = vmatprep.subr.mxu0 0.0
    %908 = vmatpush1.msra.mxu0 0.0
    %909 = vmatprep.subr.mxu0 0.0
    %910 = vmatpush1.msra.mxu0 0.0
    %911 = vmatprep.subr.mxu0 0.0
    %912 = vmatpush1.msra.mxu0 0.0
    %913 = vmatprep.subr.mxu0 0.0
    %914 = vmatpush1.msra.mxu0 0.0
    %915 = vmatprep.subr.mxu0 0.0
    %916 = vmatpush1.msra.mxu0 0.0
    %917 = vmatprep.subr.mxu0 0.0
    %918 = vmatpush1.msra.mxu0 0.0
    %919 = vmatprep.subr.mxu0 0.0
    %920 = vmatpush1.msra.mxu0 0.0
    %921 = vmatprep.mubr.f32.mxu0 0.0
    %922 = vmatmul.mubr.f32.gmra.mrb[0].mxu0 %v852
    %v923 = vpop.f32.mrb[0].mxu0
    %v924 = vadd.f32 %v850, %v923
    %v925 = vpop.f32.mrb[0].mxu0
    %926 = vmatprep.mubr.f32.mxu0 0.0
    %927 = vmatmul.mubr.f32.gmra.mrb[0].mxu0 %v855
    %v928 = vpop.f32.mrb[0].mxu0
    %v929 = vadd.f32 %v850, %v928
    %v930 = vpop.f32.mrb[0].mxu0
    %931 = vdwg.mxu0
    %v932 = vmax.f32 %v924, 0.0
    %v933 = vmax.f32 %v929, 0.0
    %v934 = vld [vmem:[%s11] sm:$0xff]
    %v935 = vld [vmem:[%s11 + $0x8] sm:$0xff]
    %v936 = vld [vmem:[%s11 + $0x10] sm:$0xff]
    %v937 = vld [vmem:[%s11 + $0x18] sm:$0xff]
    %v938 = vld [vmem:[%s11 + $0x20] sm:$0xff]
    %v939 = vld [vmem:[%s11 + $0x28] sm:$0xff]
    %v940 = vld [vmem:[%s11 + $0x30] sm:$0xff]
    %v941 = vld [vmem:[%s11 + $0x38] sm:$0xff]
    %v942 = vlaneseq
    %v943 = vshrl.u32 %v942, 7
    %v944 = vsub.s32 1, %v943
    %v945 = vrot.slane %v89, %v944
    %v947 = vsel %vm423, %v932, 0
    %v950 = vsel %vm423, %v933, 0
    %952 = vmatprep.subr.mxu0 0.0
    %953 = vmatpush1.msra.mxu0 %v934
    %954 = vmatprep.subr.mxu0 0.0
    %955 = vmatpush1.msra.mxu0 %v935
    %956 = vmatprep.subr.mxu0 0.0
    %957 = vmatpush1.msra.mxu0 %v936
    %958 = vmatprep.subr.mxu0 0.0
    %959 = vmatpush1.msra.mxu0 %v937
    %960 = vmatprep.subr.mxu0 0.0
    %961 = vmatpush1.msra.mxu0 %v938
    %962 = vmatprep.subr.mxu0 0.0
    %963 = vmatpush1.msra.mxu0 %v939
    %964 = vmatprep.subr.mxu0 0.0
    %965 = vmatpush1.msra.mxu0 %v940
    %966 = vmatprep.subr.mxu0 0.0
    %967 = vmatpush1.msra.mxu0 %v941
    %968 = vmatprep.subr.mxu0 0.0
    %969 = vmatpush1.msra.mxu0 0.0
    %970 = vmatprep.subr.mxu0 0.0
    %971 = vmatpush1.msra.mxu0 0.0
    %972 = vmatprep.subr.mxu0 0.0
    %973 = vmatpush1.msra.mxu0 0.0
    %974 = vmatprep.subr.mxu0 0.0
    %975 = vmatpush1.msra.mxu0 0.0
    %976 = vmatprep.subr.mxu0 0.0
    %977 = vmatpush1.msra.mxu0 0.0
    %978 = vmatprep.subr.mxu0 0.0
    %979 = vmatpush1.msra.mxu0 0.0
    %980 = vmatprep.subr.mxu0 0.0
    %981 = vmatpush1.msra.mxu0 0.0
    %982 = vmatprep.subr.mxu0 0.0
    %983 = vmatpush1.msra.mxu0 0.0
    %984 = vmatprep.subr.mxu0 0.0
    %985 = vmatpush1.msra.mxu0 0.0
    %986 = vmatprep.subr.mxu0 0.0
    %987 = vmatpush1.msra.mxu0 0.0
    %988 = vmatprep.subr.mxu0 0.0
    %989 = vmatpush1.msra.mxu0 0.0
    %990 = vmatprep.subr.mxu0 0.0
    %991 = vmatpush1.msra.mxu0 0.0
    %992 = vmatprep.subr.mxu0 0.0
    %993 = vmatpush1.msra.mxu0 0.0
    %994 = vmatprep.subr.mxu0 0.0
    %995 = vmatpush1.msra.mxu0 0.0
    %996 = vmatprep.subr.mxu0 0.0
    %997 = vmatpush1.msra.mxu0 0.0
    %998 = vmatprep.subr.mxu0 0.0
    %999 = vmatpush1.msra.mxu0 0.0
    %1000 = vmatprep.subr.mxu0 0.0
    %1001 = vmatpush1.msra.mxu0 0.0
    %1002 = vmatprep.subr.mxu0 0.0
    %1003 = vmatpush1.msra.mxu0 0.0
    %1004 = vmatprep.subr.mxu0 0.0
    %1005 = vmatpush1.msra.mxu0 0.0
    %1006 = vmatprep.subr.mxu0 0.0
    %1007 = vmatpush1.msra.mxu0 0.0
    %1008 = vmatprep.subr.mxu0 0.0
    %1009 = vmatpush1.msra.mxu0 0.0
    %1010 = vmatprep.subr.mxu0 0.0
    %1011 = vmatpush1.msra.mxu0 0.0
    %1012 = vmatprep.subr.mxu0 0.0
    %1013 = vmatpush1.msra.mxu0 0.0
    %1014 = vmatprep.subr.mxu0 0.0
    %1015 = vmatpush1.msra.mxu0 0.0
    %1016 = vmatprep.mubr.f32.mxu0 0.0
    %1017 = vmatmul.mubr.f32.gmra.mrb[0].mxu0 %v947
    %v1018 = vpop.f32.mrb[0].mxu0
    %v1019 = vadd.f32 %v945, %v1018
    %v1020 = vpop.f32.mrb[0].mxu0
    %1021 = vmatprep.mubr.f32.mxu0 0.0
    %1022 = vmatmul.mubr.f32.gmra.mrb[0].mxu0 %v950
    %v1023 = vpop.f32.mrb[0].mxu0
    %v1024 = vadd.f32 %v945, %v1023
    %v1025 = vpop.f32.mrb[0].mxu0
    %1026 = vdwg.mxu0
    %v1027 = vmax.f32 %v1019, 0.0
    %v1028 = vmax.f32 %v1024, 0.0
    %s1029 = scalar_lea.vmem %s12, 4
    %v1030 = vld [vmem:[%s1029] sm:$0xf]
    %s1031 = scalar_lea.vmem %s13, 2
    %v1032 = vld [vmem:[%s1031] sm:$0x3]
    %1033 = vmatprep.subr.mxu0 0.0
    %1034 = vmatpush1.msra.mxu0 %v1027
    %1035 = vmatprep.subr.mxu0 0.0
    %1036 = vmatpush1.msra.mxu0 %v1028
    %1037 = vmatprep.subr.mxu0 0.0
    %1038 = vmatpush1.msra.mxu0 0.0
    %1039 = vmatprep.subr.mxu0 0.0
    %1040 = vmatpush1.msra.mxu0 0.0
    %1041 = vmatprep.subr.mxu0 0.0
    %1042 = vmatpush1.msra.mxu0 0.0
    %1043 = vmatprep.subr.mxu0 0.0
    %1044 = vmatpush1.msra.mxu0 0.0
    %1045 = vmatprep.subr.mxu0 0.0
    %1046 = vmatpush1.msra.mxu0 0.0
    %1047 = vmatprep.subr.mxu0 0.0
    %1048 = vmatpush1.msra.mxu0 0.0
    %1049 = vmatprep.subr.mxu0 0.0
    %1050 = vmatpush1.msra.mxu0 0.0
    %1051 = vmatprep.subr.mxu0 0.0
    %1052 = vmatpush1.msra.mxu0 0.0
    %1053 = vmatprep.subr.mxu0 0.0
    %1054 = vmatpush1.msra.mxu0 0.0
    %1055 = vmatprep.subr.mxu0 0.0
    %1056 = vmatpush1.msra.mxu0 0.0
    %1057 = vmatprep.subr.mxu0 0.0
    %1058 = vmatpush1.msra.mxu0 0.0
    %1059 = vmatprep.subr.mxu0 0.0
    %1060 = vmatpush1.msra.mxu0 0.0
    %1061 = vmatprep.subr.mxu0 0.0
    %1062 = vmatpush1.msra.mxu0 0.0
    %1063 = vmatprep.subr.mxu0 0.0
    %1064 = vmatpush1.msra.mxu0 0.0
    %1065 = vmatprep.subr.mxu0 0.0
    %1066 = vmatpush1.msra.mxu0 0.0
    %1067 = vmatprep.subr.mxu0 0.0
    %1068 = vmatpush1.msra.mxu0 0.0
    %1069 = vmatprep.subr.mxu0 0.0
    %1070 = vmatpush1.msra.mxu0 0.0
    %1071 = vmatprep.subr.mxu0 0.0
    %1072 = vmatpush1.msra.mxu0 0.0
    %1073 = vmatprep.subr.mxu0 0.0
    %1074 = vmatpush1.msra.mxu0 0.0
    %1075 = vmatprep.subr.mxu0 0.0
    %1076 = vmatpush1.msra.mxu0 0.0
    %1077 = vmatprep.subr.mxu0 0.0
    %1078 = vmatpush1.msra.mxu0 0.0
    %1079 = vmatprep.subr.mxu0 0.0
    %1080 = vmatpush1.msra.mxu0 0.0
    %1081 = vmatprep.subr.mxu0 0.0
    %1082 = vmatpush1.msra.mxu0 0.0
    %1083 = vmatprep.subr.mxu0 0.0
    %1084 = vmatpush1.msra.mxu0 0.0
    %1085 = vmatprep.subr.mxu0 0.0
    %1086 = vmatpush1.msra.mxu0 0.0
    %1087 = vmatprep.subr.mxu0 0.0
    %1088 = vmatpush1.msra.mxu0 0.0
    %1089 = vmatprep.subr.mxu0 0.0
    %1090 = vmatpush1.msra.mxu0 0.0
    %1091 = vmatprep.subr.mxu0 0.0
    %1092 = vmatpush1.msra.mxu0 0.0
    %1093 = vmatprep.subr.mxu0 0.0
    %1094 = vmatpush1.msra.mxu0 0.0
    %1095 = vmatprep.subr.mxu0 0.0
    %1096 = vmatpush1.msra.mxu0 0.0
    %1097 = vmatprep.mubr.f32.mxu0 0.0
    %1098 = vmatmul.mubr.f32.gmra.mrb[0].mxu0 %v92
    %v1099 = vpop.f32.mrb[0].mxu0
    %v1100 = vadd.f32 0.0, %v1099
    %v1101 = vpop.f32.mrb[0].mxu0
    %1102 = vmatprep.mubr.f32.mxu0 0.0
    %1103 = vmatmul.mubr.f32.gmra.mrb[0].mxu0 %v95
    %v1104 = vpop.f32.mrb[0].mxu0
    %v1105 = vadd.f32 0.0, %v1104
    %v1106 = vpop.f32.mrb[0].mxu0
    %1107 = vdwg.mxu0
    %s1108 = scalar_lea.vmem %s6, 96
    %v1109 = vld [vmem:[%s1108] sm:$0xff]
    %v1110 = vld [vmem:[%s1108 + $0x8] sm:$0xff]
    %v1111 = vld [vmem:[%s1108 + $0x10] sm:$0xff]
    %v1112 = vld [vmem:[%s1108 + $0x18] sm:$0xff]
    %v1113 = vld [vmem:[%s1108 + $0x20] sm:$0xff]
    %v1114 = vld [vmem:[%s1108 + $0x28] sm:$0xff]
    %v1115 = vld [vmem:[%s1108 + $0x30] sm:$0xff]
    %v1116 = vld [vmem:[%s1108 + $0x38] sm:$0xff]
    %v1117 = vld [vmem:[%s1108 + $0x40] sm:$0xff]
    %v1118 = vld [vmem:[%s1108 + $0x48] sm:$0xff]
    %v1119 = vld [vmem:[%s1108 + $0x50] sm:$0xff]
    %v1120 = vld [vmem:[%s1108 + $0x58] sm:$0xff]
    %v1122 = vsel %vm184, %v663, 0
    %1124 = vmatprep.subr.mxu0 0.0
    %1125 = vmatpush1.msra.mxu0 %v1113
    %1126 = vmatprep.subr.mxu0 0.0
    %1127 = vmatpush1.msra.mxu0 %v1114
    %1128 = vmatprep.subr.mxu0 0.0
    %1129 = vmatpush1.msra.mxu0 %v1115
    %1130 = vmatprep.subr.mxu0 0.0
    %1131 = vmatpush1.msra.mxu0 %v1116
    %1132 = vmatprep.subr.mxu0 0.0
    %1133 = vmatpush1.msra.mxu0 0.0
    %1134 = vmatprep.subr.mxu0 0.0
    %1135 = vmatpush1.msra.mxu0 0.0
    %1136 = vmatprep.subr.mxu0 0.0
    %1137 = vmatpush1.msra.mxu0 0.0
    %1138 = vmatprep.subr.mxu0 0.0
    %1139 = vmatpush1.msra.mxu0 0.0
    %1140 = vmatprep.subr.mxu0 0.0
    %1141 = vmatpush1.msra.mxu0 0.0
    %1142 = vmatprep.subr.mxu0 0.0
    %1143 = vmatpush1.msra.mxu0 0.0
    %1144 = vmatprep.subr.mxu0 0.0
    %1145 = vmatpush1.msra.mxu0 0.0
    %1146 = vmatprep.subr.mxu0 0.0
    %1147 = vmatpush1.msra.mxu0 0.0
    %1148 = vmatprep.subr.mxu0 0.0
    %1149 = vmatpush1.msra.mxu0 0.0
    %1150 = vmatprep.subr.mxu0 0.0
    %1151 = vmatpush1.msra.mxu0 0.0
    %1152 = vmatprep.subr.mxu0 0.0
    %1153 = vmatpush1.msra.mxu0 0.0
    %1154 = vmatprep.subr.mxu0 0.0
    %1155 = vmatpush1.msra.mxu0 0.0
    %1156 = vmatprep.subr.mxu0 0.0
    %1157 = vmatpush1.msra.mxu0 0.0
    %1158 = vmatprep.subr.mxu0 0.0
    %1159 = vmatpush1.msra.mxu0 0.0
    %1160 = vmatprep.subr.mxu0 0.0
    %1161 = vmatpush1.msra.mxu0 0.0
    %1162 = vmatprep.subr.mxu0 0.0
    %1163 = vmatpush1.msra.mxu0 0.0
    %1164 = vmatprep.subr.mxu0 0.0
    %1165 = vmatpush1.msra.mxu0 0.0
    %1166 = vmatprep.subr.mxu0 0.0
    %1167 = vmatpush1.msra.mxu0 0.0
    %1168 = vmatprep.subr.mxu0 0.0
    %1169 = vmatpush1.msra.mxu0 0.0
    %1170 = vmatprep.subr.mxu0 0.0
    %1171 = vmatpush1.msra.mxu0 0.0
    %1172 = vmatprep.subr.mxu0 0.0
    %1173 = vmatpush1.msra.mxu0 0.0
    %1174 = vmatprep.subr.mxu0 0.0
    %1175 = vmatpush1.msra.mxu0 0.0
    %1176 = vmatprep.subr.mxu0 0.0
    %1177 = vmatpush1.msra.mxu0 0.0
    %1178 = vmatprep.subr.mxu0 0.0
    %1179 = vmatpush1.msra.mxu0 0.0
    %1180 = vmatprep.subr.mxu0 0.0
    %1181 = vmatpush1.msra.mxu0 0.0
    %1182 = vmatprep.subr.mxu0 0.0
    %1183 = vmatpush1.msra.mxu0 0.0
    %1184 = vmatprep.subr.mxu0 0.0
    %1185 = vmatpush1.msra.mxu0 0.0
    %1186 = vmatprep.subr.mxu0 0.0
    %1187 = vmatpush1.msra.mxu0 0.0
    %1188 = vmatprep.mubr.f32.mxu0 0.0
    %1189 = vmatmul.mubr.f32.gmra.mrb[0].mxu0 %v1122
    %v1190 = vpop.f32.mrb[0].mxu0
    %v1191 = vadd.f32 0.0, %v1190
    %v1192 = vpop.f32.mrb[0].mxu0
    %1193 = vdwg.mxu0
    %v1195 = vsel %vm184, %v1100, 0
    %1197 = vmatprep.subr.mxu0 0.0
    %1198 = vmatpush1.msra.mxu0 %v1109
    %1199 = vmatprep.subr.mxu0 0.0
    %1200 = vmatpush1.msra.mxu0 %v1110
    %1201 = vmatprep.subr.mxu0 0.0
    %1202 = vmatpush1.msra.mxu0 %v1111
    %1203 = vmatprep.subr.mxu0 0.0
    %1204 = vmatpush1.msra.mxu0 %v1112
    %1205 = vmatprep.subr.mxu0 0.0
    %1206 = vmatpush1.msra.mxu0 0.0
    %1207 = vmatprep.subr.mxu0 0.0
    %1208 = vmatpush1.msra.mxu0 0.0
    %1209 = vmatprep.subr.mxu0 0.0
    %1210 = vmatpush1.msra.mxu0 0.0
    %1211 = vmatprep.subr.mxu0 0.0
    %1212 = vmatpush1.msra.mxu0 0.0
    %1213 = vmatprep.subr.mxu0 0.0
    %1214 = vmatpush1.msra.mxu0 0.0
    %1215 = vmatprep.subr.mxu0 0.0
    %1216 = vmatpush1.msra.mxu0 0.0
    %1217 = vmatprep.subr.mxu0 0.0
    %1218 = vmatpush1.msra.mxu0 0.0
    %1219 = vmatprep.subr.mxu0 0.0
    %1220 = vmatpush1.msra.mxu0 0.0
    %1221 = vmatprep.subr.mxu0 0.0
    %1222 = vmatpush1.msra.mxu0 0.0
    %1223 = vmatprep.subr.mxu0 0.0
    %1224 = vmatpush1.msra.mxu0 0.0
    %1225 = vmatprep.subr.mxu0 0.0
    %1226 = vmatpush1.msra.mxu0 0.0
    %1227 = vmatprep.subr.mxu0 0.0
    %1228 = vmatpush1.msra.mxu0 0.0
    %1229 = vmatprep.subr.mxu0 0.0
    %1230 = vmatpush1.msra.mxu0 0.0
    %1231 = vmatprep.subr.mxu0 0.0
    %1232 = vmatpush1.msra.mxu0 0.0
    %1233 = vmatprep.subr.mxu0 0.0
    %1234 = vmatpush1.msra.mxu0 0.0
    %1235 = vmatprep.subr.mxu0 0.0
    %1236 = vmatpush1.msra.mxu0 0.0
    %1237 = vmatprep.subr.mxu0 0.0
    %1238 = vmatpush1.msra.mxu0 0.0
    %1239 = vmatprep.subr.mxu0 0.0
    %1240 = vmatpush1.msra.mxu0 0.0
    %1241 = vmatprep.subr.mxu0 0.0
    %1242 = vmatpush1.msra.mxu0 0.0
    %1243 = vmatprep.subr.mxu0 0.0
    %1244 = vmatpush1.msra.mxu0 0.0
    %1245 = vmatprep.subr.mxu0 0.0
    %1246 = vmatpush1.msra.mxu0 0.0
    %1247 = vmatprep.subr.mxu0 0.0
    %1248 = vmatpush1.msra.mxu0 0.0
    %1249 = vmatprep.subr.mxu0 0.0
    %1250 = vmatpush1.msra.mxu0 0.0
    %1251 = vmatprep.subr.mxu0 0.0
    %1252 = vmatpush1.msra.mxu0 0.0
    %1253 = vmatprep.subr.mxu0 0.0
    %1254 = vmatpush1.msra.mxu0 0.0
    %1255 = vmatprep.subr.mxu0 0.0
    %1256 = vmatpush1.msra.mxu0 0.0
    %1257 = vmatprep.subr.mxu0 0.0
    %1258 = vmatpush1.msra.mxu0 0.0
    %1259 = vmatprep.subr.mxu0 0.0
    %1260 = vmatpush1.msra.mxu0 0.0
    %1261 = vmatprep.mubr.f32.mxu0 0.0
    %1262 = vmatmul.mubr.f32.gmra.mrb[0].mxu0 %v1195
    %v1263 = vpop.f32.mrb[0].mxu0
    %v1264 = vadd.f32 %v1191, %v1263
    %v1265 = vpop.f32.mrb[0].mxu0
    %1266 = vdwg.mxu0
    %v1268 = vsel %vm184, %v1105, 0
    %1270 = vmatprep.subr.mxu0 0.0
    %1271 = vmatpush1.msra.mxu0 %v1117
    %1272 = vmatprep.subr.mxu0 0.0
    %1273 = vmatpush1.msra.mxu0 %v1118
    %1274 = vmatprep.subr.mxu0 0.0
    %1275 = vmatpush1.msra.mxu0 %v1119
    %1276 = vmatprep.subr.mxu0 0.0
    %1277 = vmatpush1.msra.mxu0 %v1120
    %1278 = vmatprep.subr.mxu0 0.0
    %1279 = vmatpush1.msra.mxu0 0.0
    %1280 = vmatprep.subr.mxu0 0.0
    %1281 = vmatpush1.msra.mxu0 0.0
    %1282 = vmatprep.subr.mxu0 0.0
    %1283 = vmatpush1.msra.mxu0 0.0
    %1284 = vmatprep.subr.mxu0 0.0
    %1285 = vmatpush1.msra.mxu0 0.0
    %1286 = vmatprep.subr.mxu0 0.0
    %1287 = vmatpush1.msra.mxu0 0.0
    %1288 = vmatprep.subr.mxu0 0.0
    %1289 = vmatpush1.msra.mxu0 0.0
    %1290 = vmatprep.subr.mxu0 0.0
    %1291 = vmatpush1.msra.mxu0 0.0
    %1292 = vmatprep.subr.mxu0 0.0
    %1293 = vmatpush1.msra.mxu0 0.0
    %1294 = vmatprep.subr.mxu0 0.0
    %1295 = vmatpush1.msra.mxu0 0.0
    %1296 = vmatprep.subr.mxu0 0.0
    %1297 = vmatpush1.msra.mxu0 0.0
    %1298 = vmatprep.subr.mxu0 0.0
    %1299 = vmatpush1.msra.mxu0 0.0
    %1300 = vmatprep.subr.mxu0 0.0
    %1301 = vmatpush1.msra.mxu0 0.0
    %1302 = vmatprep.subr.mxu0 0.0
    %1303 = vmatpush1.msra.mxu0 0.0
    %1304 = vmatprep.subr.mxu0 0.0
    %1305 = vmatpush1.msra.mxu0 0.0
    %1306 = vmatprep.subr.mxu0 0.0
    %1307 = vmatpush1.msra.mxu0 0.0
    %1308 = vmatprep.subr.mxu0 0.0
    %1309 = vmatpush1.msra.mxu0 0.0
    %1310 = vmatprep.subr.mxu0 0.0
    %1311 = vmatpush1.msra.mxu0 0.0
    %1312 = vmatprep.subr.mxu0 0.0
    %1313 = vmatpush1.msra.mxu0 0.0
    %1314 = vmatprep.subr.mxu0 0.0
    %1315 = vmatpush1.msra.mxu0 0.0
    %1316 = vmatprep.subr.mxu0 0.0
    %1317 = vmatpush1.msra.mxu0 0.0
    %1318 = vmatprep.subr.mxu0 0.0
    %1319 = vmatpush1.msra.mxu0 0.0
    %1320 = vmatprep.subr.mxu0 0.0
    %1321 = vmatpush1.msra.mxu0 0.0
    %1322 = vmatprep.subr.mxu0 0.0
    %1323 = vmatpush1.msra.mxu0 0.0
    %1324 = vmatprep.subr.mxu0 0.0
    %1325 = vmatpush1.msra.mxu0 0.0
    %1326 = vmatprep.subr.mxu0 0.0
    %1327 = vmatpush1.msra.mxu0 0.0
    %1328 = vmatprep.subr.mxu0 0.0
    %1329 = vmatpush1.msra.mxu0 0.0
    %1330 = vmatprep.subr.mxu0 0.0
    %1331 = vmatpush1.msra.mxu0 0.0
    %1332 = vmatprep.subr.mxu0 0.0
    %1333 = vmatpush1.msra.mxu0 0.0
    %1334 = vmatprep.mubr.f32.mxu0 0.0
    %1335 = vmatmul.mubr.f32.gmra.mrb[0].mxu0 %v1268
    %v1336 = vpop.f32.mrb[0].mxu0
    %v1337 = vadd.f32 0.0, %v1336
    %v1338 = vpop.f32.mrb[0].mxu0
    %1339 = vdwg.mxu0
    %v1340 = vadd.f32 %v1264, %v1337
    %v1341 = vlaneseq
    %v1342 = vshrl.u32 %v1341, 7
    %v1343 = vsub.s32 0, %v1342
    %v1344 = vrot.slane %v1030, %v1343
    %v1345 = vadd.f32 %v1340, %v1344
    %v1346 = vmax.f32 %v1345, 0.0
    %s1347 = scalar_lea.vmem %s7, 64
    %v1348 = vld [vmem:[%s1347] sm:$0xff]
    %v1349 = vld [vmem:[%s1347 + $0x8] sm:$0xff]
    %v1350 = vld [vmem:[%s1347 + $0x10] sm:$0xff]
    %v1351 = vld [vmem:[%s1347 + $0x18] sm:$0xff]
    %v1352 = vld [vmem:[%s1347 + $0x20] sm:$0xff]
    %v1353 = vld [vmem:[%s1347 + $0x28] sm:$0xff]
    %v1354 = vld [vmem:[%s1347 + $0x30] sm:$0xff]
    %v1355 = vld [vmem:[%s1347 + $0x38] sm:$0xff]
    %v1356 = vlaneseq
    %v1357 = vshrl.u32 %v1356, 7
    %v1358 = vsub.s32 1, %v1357
    %v1359 = vrot.slane %v1030, %v1358
    %v1361 = vsel %vm423, %v1346, 0
    %1363 = vmatprep.subr.mxu0 0.0
    %1364 = vmatpush1.msra.mxu0 %v1348
    %1365 = vmatprep.subr.mxu0 0.0
    %1366 = vmatpush1.msra.mxu0 %v1349
    %1367 = vmatprep.subr.mxu0 0.0
    %1368 = vmatpush1.msra.mxu0 %v1350
    %1369 = vmatprep.subr.mxu0 0.0
    %1370 = vmatpush1.msra.mxu0 %v1351
    %1371 = vmatprep.subr.mxu0 0.0
    %1372 = vmatpush1.msra.mxu0 %v1352
    %1373 = vmatprep.subr.mxu0 0.0
    %1374 = vmatpush1.msra.mxu0 %v1353
    %1375 = vmatprep.subr.mxu0 0.0
    %1376 = vmatpush1.msra.mxu0 %v1354
    %1377 = vmatprep.subr.mxu0 0.0
    %1378 = vmatpush1.msra.mxu0 %v1355
    %1379 = vmatprep.subr.mxu0 0.0
    %1380 = vmatpush1.msra.mxu0 0.0
    %1381 = vmatprep.subr.mxu0 0.0
    %1382 = vmatpush1.msra.mxu0 0.0
    %1383 = vmatprep.subr.mxu0 0.0
    %1384 = vmatpush1.msra.mxu0 0.0
    %1385 = vmatprep.subr.mxu0 0.0
    %1386 = vmatpush1.msra.mxu0 0.0
    %1387 = vmatprep.subr.mxu0 0.0
    %1388 = vmatpush1.msra.mxu0 0.0
    %1389 = vmatprep.subr.mxu0 0.0
    %1390 = vmatpush1.msra.mxu0 0.0
    %1391 = vmatprep.subr.mxu0 0.0
    %1392 = vmatpush1.msra.mxu0 0.0
    %1393 = vmatprep.subr.mxu0 0.0
    %1394 = vmatpush1.msra.mxu0 0.0
    %1395 = vmatprep.subr.mxu0 0.0
    %1396 = vmatpush1.msra.mxu0 0.0
    %1397 = vmatprep.subr.mxu0 0.0
    %1398 = vmatpush1.msra.mxu0 0.0
    %1399 = vmatprep.subr.mxu0 0.0
    %1400 = vmatpush1.msra.mxu0 0.0
    %1401 = vmatprep.subr.mxu0 0.0
    %1402 = vmatpush1.msra.mxu0 0.0
    %1403 = vmatprep.subr.mxu0 0.0
    %1404 = vmatpush1.msra.mxu0 0.0
    %1405 = vmatprep.subr.mxu0 0.0
    %1406 = vmatpush1.msra.mxu0 0.0
    %1407 = vmatprep.subr.mxu0 0.0
    %1408 = vmatpush1.msra.mxu0 0.0
    %1409 = vmatprep.subr.mxu0 0.0
    %1410 = vmatpush1.msra.mxu0 0.0
    %1411 = vmatprep.subr.mxu0 0.0
    %1412 = vmatpush1.msra.mxu0 0.0
    %1413 = vmatprep.subr.mxu0 0.0
    %1414 = vmatpush1.msra.mxu0 0.0
    %1415 = vmatprep.subr.mxu0 0.0
    %1416 = vmatpush1.msra.mxu0 0.0
    %1417 = vmatprep.subr.mxu0 0.0
    %1418 = vmatpush1.msra.mxu0 0.0
    %1419 = vmatprep.subr.mxu0 0.0
    %1420 = vmatpush1.msra.mxu0 0.0
    %1421 = vmatprep.subr.mxu0 0.0
    %1422 = vmatpush1.msra.mxu0 0.0
    %1423 = vmatprep.subr.mxu0 0.0
    %1424 = vmatpush1.msra.mxu0 0.0
    %1425 = vmatprep.subr.mxu0 0.0
    %1426 = vmatpush1.msra.mxu0 0.0
    %1427 = vmatprep.mubr.f32.mxu0 0.0
    %1428 = vmatmul.mubr.f32.gmra.mrb[0].mxu0 %v1361
    %v1429 = vpop.f32.mrb[0].mxu0
    %v1430 = vadd.f32 %v1359, %v1429
    %v1431 = vpop.f32.mrb[0].mxu0
    %1432 = vdwg.mxu0
    %v1433 = vmax.f32 %v1430, 0.0
    %s1434 = scalar_lea.vmem %s8, 64
    %v1435 = vld [vmem:[%s1434] sm:$0xff]
    %v1436 = vld [vmem:[%s1434 + $0x8] sm:$0xff]
    %v1437 = vld [vmem:[%s1434 + $0x10] sm:$0xff]
    %v1438 = vld [vmem:[%s1434 + $0x18] sm:$0xff]
    %v1439 = vld [vmem:[%s1434 + $0x20] sm:$0xff]
    %v1440 = vld [vmem:[%s1434 + $0x28] sm:$0xff]
    %v1441 = vld [vmem:[%s1434 + $0x30] sm:$0xff]
    %v1442 = vld [vmem:[%s1434 + $0x38] sm:$0xff]
    %v1443 = vlaneseq
    %v1444 = vshrl.u32 %v1443, 7
    %v1445 = vsub.s32 2, %v1444
    %v1446 = vrot.slane %v1030, %v1445
    %1447 = vmatprep.subr.mxu0 0.0
    %1448 = vmatpush1.msra.mxu0 %v1435
    %1449 = vmatprep.subr.mxu0 0.0
    %1450 = vmatpush1.msra.mxu0 %v1436
    %1451 = vmatprep.subr.mxu0 0.0
    %1452 = vmatpush1.msra.mxu0 %v1437
    %1453 = vmatprep.subr.mxu0 0.0
    %1454 = vmatpush1.msra.mxu0 %v1438
    %1455 = vmatprep.subr.mxu0 0.0
    %1456 = vmatpush1.msra.mxu0 %v1439
    %1457 = vmatprep.subr.mxu0 0.0
    %1458 = vmatpush1.msra.mxu0 %v1440
    %1459 = vmatprep.subr.mxu0 0.0
    %1460 = vmatpush1.msra.mxu0 %v1441
    %1461 = vmatprep.subr.mxu0 0.0
    %1462 = vmatpush1.msra.mxu0 %v1442
    %1463 = vmatprep.subr.mxu0 0.0
    %1464 = vmatpush1.msra.mxu0 0.0
    %1465 = vmatprep.subr.mxu0 0.0
    %1466 = vmatpush1.msra.mxu0 0.0
    %1467 = vmatprep.subr.mxu0 0.0
    %1468 = vmatpush1.msra.mxu0 0.0
    %1469 = vmatprep.subr.mxu0 0.0
    %1470 = vmatpush1.msra.mxu0 0.0
    %1471 = vmatprep.subr.mxu0 0.0
    %1472 = vmatpush1.msra.mxu0 0.0
    %1473 = vmatprep.subr.mxu0 0.0
    %1474 = vmatpush1.msra.mxu0 0.0
    %1475 = vmatprep.subr.mxu0 0.0
    %1476 = vmatpush1.msra.mxu0 0.0
    %1477 = vmatprep.subr.mxu0 0.0
    %1478 = vmatpush1.msra.mxu0 0.0
    %1479 = vmatprep.subr.mxu0 0.0
    %1480 = vmatpush1.msra.mxu0 0.0
    %1481 = vmatprep.subr.mxu0 0.0
    %1482 = vmatpush1.msra.mxu0 0.0
    %1483 = vmatprep.subr.mxu0 0.0
    %1484 = vmatpush1.msra.mxu0 0.0
    %1485 = vmatprep.subr.mxu0 0.0
    %1486 = vmatpush1.msra.mxu0 0.0
    %1487 = vmatprep.subr.mxu0 0.0
    %1488 = vmatpush1.msra.mxu0 0.0
    %1489 = vmatprep.subr.mxu0 0.0
    %1490 = vmatpush1.msra.mxu0 0.0
    %1491 = vmatprep.subr.mxu0 0.0
    %1492 = vmatpush1.msra.mxu0 0.0
    %1493 = vmatprep.subr.mxu0 0.0
    %1494 = vmatpush1.msra.mxu0 0.0
    %1495 = vmatprep.subr.mxu0 0.0
    %1496 = vmatpush1.msra.mxu0 0.0
    %1497 = vmatprep.subr.mxu0 0.0
    %1498 = vmatpush1.msra.mxu0 0.0
    %1499 = vmatprep.subr.mxu0 0.0
    %1500 = vmatpush1.msra.mxu0 0.0
    %1501 = vmatprep.subr.mxu0 0.0
    %1502 = vmatpush1.msra.mxu0 0.0
    %1503 = vmatprep.subr.mxu0 0.0
    %1504 = vmatpush1.msra.mxu0 0.0
    %1505 = vmatprep.subr.mxu0 0.0
    %1506 = vmatpush1.msra.mxu0 0.0
    %1507 = vmatprep.subr.mxu0 0.0
    %1508 = vmatpush1.msra.mxu0 0.0
    %1509 = vmatprep.subr.mxu0 0.0
    %1510 = vmatpush1.msra.mxu0 0.0
    %1511 = vmatprep.mubr.f32.mxu0 0.0
    %1512 = vmatmul.mubr.f32.gmra.mrb[0].mxu0 %v1361
    %v1513 = vpop.f32.mrb[0].mxu0
    %v1514 = vadd.f32 %v1446, %v1513
    %v1515 = vpop.f32.mrb[0].mxu0
    %1516 = vdwg.mxu0
    %v1517 = vmax.f32 %v1514, 0.0
    %s1518 = scalar_lea.vmem %s9, 64
    %v1519 = vld [vmem:[%s1518] sm:$0xff]
    %v1520 = vld [vmem:[%s1518 + $0x8] sm:$0xff]
    %v1521 = vld [vmem:[%s1518 + $0x10] sm:$0xff]
    %v1522 = vld [vmem:[%s1518 + $0x18] sm:$0xff]
    %v1523 = vld [vmem:[%s1518 + $0x20] sm:$0xff]
    %v1524 = vld [vmem:[%s1518 + $0x28] sm:$0xff]
    %v1525 = vld [vmem:[%s1518 + $0x30] sm:$0xff]
    %v1526 = vld [vmem:[%s1518 + $0x38] sm:$0xff]
    %v1527 = vlaneseq
    %v1528 = vshrl.u32 %v1527, 7
    %v1529 = vsub.s32 0, %v1528
    %v1530 = vrot.slane %v1032, %v1529
    %1531 = vmatprep.subr.mxu0 0.0
    %1532 = vmatpush1.msra.mxu0 %v1519
    %1533 = vmatprep.subr.mxu0 0.0
    %1534 = vmatpush1.msra.mxu0 %v1520
    %1535 = vmatprep.subr.mxu0 0.0
    %1536 = vmatpush1.msra.mxu0 %v1521
    %1537 = vmatprep.subr.mxu0 0.0
    %1538 = vmatpush1.msra.mxu0 %v1522
    %1539 = vmatprep.subr.mxu0 0.0
    %1540 = vmatpush1.msra.mxu0 %v1523
    %1541 = vmatprep.subr.mxu0 0.0
    %1542 = vmatpush1.msra.mxu0 %v1524
    %1543 = vmatprep.subr.mxu0 0.0
    %1544 = vmatpush1.msra.mxu0 %v1525
    %1545 = vmatprep.subr.mxu0 0.0
    %1546 = vmatpush1.msra.mxu0 %v1526
    %1547 = vmatprep.subr.mxu0 0.0
    %1548 = vmatpush1.msra.mxu0 0.0
    %1549 = vmatprep.subr.mxu0 0.0
    %1550 = vmatpush1.msra.mxu0 0.0
    %1551 = vmatprep.subr.mxu0 0.0
    %1552 = vmatpush1.msra.mxu0 0.0
    %1553 = vmatprep.subr.mxu0 0.0
    %1554 = vmatpush1.msra.mxu0 0.0
    %1555 = vmatprep.subr.mxu0 0.0
    %1556 = vmatpush1.msra.mxu0 0.0
    %1557 = vmatprep.subr.mxu0 0.0
    %1558 = vmatpush1.msra.mxu0 0.0
    %1559 = vmatprep.subr.mxu0 0.0
    %1560 = vmatpush1.msra.mxu0 0.0
    %1561 = vmatprep.subr.mxu0 0.0
    %1562 = vmatpush1.msra.mxu0 0.0
    %1563 = vmatprep.subr.mxu0 0.0
    %1564 = vmatpush1.msra.mxu0 0.0
    %1565 = vmatprep.subr.mxu0 0.0
    %1566 = vmatpush1.msra.mxu0 0.0
    %1567 = vmatprep.subr.mxu0 0.0
    %1568 = vmatpush1.msra.mxu0 0.0
    %1569 = vmatprep.subr.mxu0 0.0
    %1570 = vmatpush1.msra.mxu0 0.0
    %1571 = vmatprep.subr.mxu0 0.0
    %1572 = vmatpush1.msra.mxu0 0.0
    %1573 = vmatprep.subr.mxu0 0.0
    %1574 = vmatpush1.msra.mxu0 0.0
    %1575 = vmatprep.subr.mxu0 0.0
    %1576 = vmatpush1.msra.mxu0 0.0
    %1577 = vmatprep.subr.mxu0 0.0
    %1578 = vmatpush1.msra.mxu0 0.0
    %1579 = vmatprep.subr.mxu0 0.0
    %1580 = vmatpush1.msra.mxu0 0.0
    %1581 = vmatprep.subr.mxu0 0.0
    %1582 = vmatpush1.msra.mxu0 0.0
    %1583 = vmatprep.subr.mxu0 0.0
    %1584 = vmatpush1.msra.mxu0 0.0
    %1585 = vmatprep.subr.mxu0 0.0
    %1586 = vmatpush1.msra.mxu0 0.0
    %1587 = vmatprep.subr.mxu0 0.0
    %1588 = vmatpush1.msra.mxu0 0.0
    %1589 = vmatprep.subr.mxu0 0.0
    %1590 = vmatpush1.msra.mxu0 0.0
    %1591 = vmatprep.subr.mxu0 0.0
    %1592 = vmatpush1.msra.mxu0 0.0
    %1593 = vmatprep.subr.mxu0 0.0
    %1594 = vmatpush1.msra.mxu0 0.0
    %1595 = vmatprep.mubr.f32.mxu0 0.0
    %1596 = vmatmul.mubr.f32.gmra.mrb[0].mxu0 %v1361
    %v1597 = vpop.f32.mrb[0].mxu0
    %v1598 = vadd.f32 %v1530, %v1597
    %v1599 = vpop.f32.mrb[0].mxu0
    %1600 = vdwg.mxu0
    %v1601 = vmax.f32 %v1598, 0.0
    %1602 = vmatprep.subr.mxu0 0.0
    %1603 = vmatpush1.msra.mxu0 %v1517
    %1604 = vmatprep.subr.mxu0 0.0
    %1605 = vmatpush1.msra.mxu0 0.0
    %1606 = vmatprep.subr.mxu0 0.0
    %1607 = vmatpush1.msra.mxu0 0.0
    %1608 = vmatprep.subr.mxu0 0.0
    %1609 = vmatpush1.msra.mxu0 0.0
    %1610 = vmatprep.subr.mxu0 0.0
    %1611 = vmatpush1.msra.mxu0 0.0
    %1612 = vmatprep.subr.mxu0 0.0
    %1613 = vmatpush1.msra.mxu0 0.0
    %1614 = vmatprep.subr.mxu0 0.0
    %1615 = vmatpush1.msra.mxu0 0.0
    %1616 = vmatprep.subr.mxu0 0.0
    %1617 = vmatpush1.msra.mxu0 0.0
    %1618 = vmatprep.subr.mxu0 0.0
    %1619 = vmatpush1.msra.mxu0 0.0
    %1620 = vmatprep.subr.mxu0 0.0
    %1621 = vmatpush1.msra.mxu0 0.0
    %1622 = vmatprep.subr.mxu0 0.0
    %1623 = vmatpush1.msra.mxu0 0.0
    %1624 = vmatprep.subr.mxu0 0.0
    %1625 = vmatpush1.msra.mxu0 0.0
    %1626 = vmatprep.subr.mxu0 0.0
    %1627 = vmatpush1.msra.mxu0 0.0
    %1628 = vmatprep.subr.mxu0 0.0
    %1629 = vmatpush1.msra.mxu0 0.0
    %1630 = vmatprep.subr.mxu0 0.0
    %1631 = vmatpush1.msra.mxu0 0.0
    %1632 = vmatprep.subr.mxu0 0.0
    %1633 = vmatpush1.msra.mxu0 0.0
    %1634 = vmatprep.subr.mxu0 0.0
    %1635 = vmatpush1.msra.mxu0 0.0
    %1636 = vmatprep.subr.mxu0 0.0
    %1637 = vmatpush1.msra.mxu0 0.0
    %1638 = vmatprep.subr.mxu0 0.0
    %1639 = vmatpush1.msra.mxu0 0.0
    %1640 = vmatprep.subr.mxu0 0.0
    %1641 = vmatpush1.msra.mxu0 0.0
    %1642 = vmatprep.subr.mxu0 0.0
    %1643 = vmatpush1.msra.mxu0 0.0
    %1644 = vmatprep.subr.mxu0 0.0
    %1645 = vmatpush1.msra.mxu0 0.0
    %1646 = vmatprep.subr.mxu0 0.0
    %1647 = vmatpush1.msra.mxu0 0.0
    %1648 = vmatprep.subr.mxu0 0.0
    %1649 = vmatpush1.msra.mxu0 0.0
    %1650 = vmatprep.subr.mxu0 0.0
    %1651 = vmatpush1.msra.mxu0 0.0
    %1652 = vmatprep.subr.mxu0 0.0
    %1653 = vmatpush1.msra.mxu0 0.0
    %1654 = vmatprep.subr.mxu0 0.0
    %1655 = vmatpush1.msra.mxu0 0.0
    %1656 = vmatprep.subr.mxu0 0.0
    %1657 = vmatpush1.msra.mxu0 0.0
    %1658 = vmatprep.subr.mxu0 0.0
    %1659 = vmatpush1.msra.mxu0 0.0
    %1660 = vmatprep.subr.mxu0 0.0
    %1661 = vmatpush1.msra.mxu0 0.0
    %1662 = vmatprep.subr.mxu0 0.0
    %1663 = vmatpush1.msra.mxu0 0.0
    %1664 = vmatprep.subr.mxu0 0.0
    %1665 = vmatpush1.msra.mxu0 0.0
    %1666 = vmatprep.mubr.f32.mxu0 0.0
    %1667 = vmatmul.mubr.f32.gmra.mrb[0].mxu0 %v666
    %v1668 = vpop.f32.mrb[0].mxu0
    %v1669 = vadd.f32 0.0, %v1668
    %v1670 = vpop.f32.mrb[0].mxu0
    %1671 = vmatprep.mubr.f32.mxu0 0.0
    %1672 = vmatmul.mubr.f32.gmra.mrb[0].mxu0 %v669
    %v1673 = vpop.f32.mrb[0].mxu0
    %v1674 = vadd.f32 0.0, %v1673
    %v1675 = vpop.f32.mrb[0].mxu0
    %1676 = vdwg.mxu0
    %1677 = vmatprep.subr.mxu0 0.0
    %1678 = vmatpush1.msra.mxu0 %v1433
    %1679 = vmatprep.subr.mxu0 0.0
    %1680 = vmatpush1.msra.mxu0 0.0
    %1681 = vmatprep.subr.mxu0 0.0
    %1682 = vmatpush1.msra.mxu0 0.0
    %1683 = vmatprep.subr.mxu0 0.0
    %1684 = vmatpush1.msra.mxu0 0.0
    %1685 = vmatprep.subr.mxu0 0.0
    %1686 = vmatpush1.msra.mxu0 0.0
    %1687 = vmatprep.subr.mxu0 0.0
    %1688 = vmatpush1.msra.mxu0 0.0
    %1689 = vmatprep.subr.mxu0 0.0
    %1690 = vmatpush1.msra.mxu0 0.0
    %1691 = vmatprep.subr.mxu0 0.0
    %1692 = vmatpush1.msra.mxu0 0.0
    %1693 = vmatprep.subr.mxu0 0.0
    %1694 = vmatpush1.msra.mxu0 0.0
    %1695 = vmatprep.subr.mxu0 0.0
    %1696 = vmatpush1.msra.mxu0 0.0
    %1697 = vmatprep.subr.mxu0 0.0
    %1698 = vmatpush1.msra.mxu0 0.0
    %1699 = vmatprep.subr.mxu0 0.0
    %1700 = vmatpush1.msra.mxu0 0.0
    %1701 = vmatprep.subr.mxu0 0.0
    %1702 = vmatpush1.msra.mxu0 0.0
    %1703 = vmatprep.subr.mxu0 0.0
    %1704 = vmatpush1.msra.mxu0 0.0
    %1705 = vmatprep.subr.mxu0 0.0
    %1706 = vmatpush1.msra.mxu0 0.0
    %1707 = vmatprep.subr.mxu0 0.0
    %1708 = vmatpush1.msra.mxu0 0.0
    %1709 = vmatprep.subr.mxu0 0.0
    %1710 = vmatpush1.msra.mxu0 0.0
    %1711 = vmatprep.subr.mxu0 0.0
    %1712 = vmatpush1.msra.mxu0 0.0
    %1713 = vmatprep.subr.mxu0 0.0
    %1714 = vmatpush1.msra.mxu0 0.0
    %1715 = vmatprep.subr.mxu0 0.0
    %1716 = vmatpush1.msra.mxu0 0.0
    %1717 = vmatprep.subr.mxu0 0.0
    %1718 = vmatpush1.msra.mxu0 0.0
    %1719 = vmatprep.subr.mxu0 0.0
    %1720 = vmatpush1.msra.mxu0 0.0
    %1721 = vmatprep.subr.mxu0 0.0
    %1722 = vmatpush1.msra.mxu0 0.0
    %1723 = vmatprep.subr.mxu0 0.0
    %1724 = vmatpush1.msra.mxu0 0.0
    %1725 = vmatprep.subr.mxu0 0.0
    %1726 = vmatpush1.msra.mxu0 0.0
    %1727 = vmatprep.subr.mxu0 0.0
    %1728 = vmatpush1.msra.mxu0 0.0
    %1729 = vmatprep.subr.mxu0 0.0
    %1730 = vmatpush1.msra.mxu0 0.0
    %1731 = vmatprep.subr.mxu0 0.0
    %1732 = vmatpush1.msra.mxu0 0.0
    %1733 = vmatprep.subr.mxu0 0.0
    %1734 = vmatpush1.msra.mxu0 0.0
    %1735 = vmatprep.subr.mxu0 0.0
    %1736 = vmatpush1.msra.mxu0 0.0
    %1737 = vmatprep.subr.mxu0 0.0
    %1738 = vmatpush1.msra.mxu0 0.0
    %1739 = vmatprep.subr.mxu0 0.0
    %1740 = vmatpush1.msra.mxu0 0.0
    %1741 = vmatprep.mubr.f32.mxu0 0.0
    %1742 = vmatmul.mubr.f32.gmra.mrb[0].mxu0 %v747
    %v1743 = vpop.f32.mrb[0].mxu0
    %v1744 = vadd.f32 %v1669, %v1743
    %v1745 = vpop.f32.mrb[0].mxu0
    %1746 = vmatprep.mubr.f32.mxu0 0.0
    %1747 = vmatmul.mubr.f32.gmra.mrb[0].mxu0 %v750
    %v1748 = vpop.f32.mrb[0].mxu0
    %v1749 = vadd.f32 %v1674, %v1748
    %v1750 = vpop.f32.mrb[0].mxu0
    %1751 = vdwg.mxu0
    %v1752 = vmul.f32 %v1744, %v830
    %v1753 = vmul.f32 %v1749, %v835
    %s1754 = scalar_lea.vmem %s10, 64
    %v1755 = vld [vmem:[%s1754] sm:$0xff]
    %v1756 = vld [vmem:[%s1754 + $0x8] sm:$0xff]
    %v1757 = vld [vmem:[%s1754 + $0x10] sm:$0xff]
    %v1758 = vld [vmem:[%s1754 + $0x18] sm:$0xff]
    %v1759 = vld [vmem:[%s1754 + $0x20] sm:$0xff]
    %v1760 = vld [vmem:[%s1754 + $0x28] sm:$0xff]
    %v1761 = vld [vmem:[%s1754 + $0x30] sm:$0xff]
    %v1762 = vld [vmem:[%s1754 + $0x38] sm:$0xff]
    %v1763 = vlaneseq
    %v1764 = vshrl.u32 %v1763, 7
    %v1765 = vsub.s32 3, %v1764
    %v1766 = vrot.slane %v1030, %v1765
    %v1768 = vsel %vm423, %v1752, 0
    %v1771 = vsel %vm423, %v1753, 0
    %1773 = vmatprep.subr.mxu0 0.0
    %1774 = vmatpush1.msra.mxu0 %v1755
    %1775 = vmatprep.subr.mxu0 0.0
    %1776 = vmatpush1.msra.mxu0 %v1756
    %1777 = vmatprep.subr.mxu0 0.0
    %1778 = vmatpush1.msra.mxu0 %v1757
    %1779 = vmatprep.subr.mxu0 0.0
    %1780 = vmatpush1.msra.mxu0 %v1758
    %1781 = vmatprep.subr.mxu0 0.0
    %1782 = vmatpush1.msra.mxu0 %v1759
    %1783 = vmatprep.subr.mxu0 0.0
    %1784 = vmatpush1.msra.mxu0 %v1760
    %1785 = vmatprep.subr.mxu0 0.0
    %1786 = vmatpush1.msra.mxu0 %v1761
    %1787 = vmatprep.subr.mxu0 0.0
    %1788 = vmatpush1.msra.mxu0 %v1762
    %1789 = vmatprep.subr.mxu0 0.0
    %1790 = vmatpush1.msra.mxu0 0.0
    %1791 = vmatprep.subr.mxu0 0.0
    %1792 = vmatpush1.msra.mxu0 0.0
    %1793 = vmatprep.subr.mxu0 0.0
    %1794 = vmatpush1.msra.mxu0 0.0
    %1795 = vmatprep.subr.mxu0 0.0
    %1796 = vmatpush1.msra.mxu0 0.0
    %1797 = vmatprep.subr.mxu0 0.0
    %1798 = vmatpush1.msra.mxu0 0.0
    %1799 = vmatprep.subr.mxu0 0.0
    %1800 = vmatpush1.msra.mxu0 0.0
    %1801 = vmatprep.subr.mxu0 0.0
    %1802 = vmatpush1.msra.mxu0 0.0
    %1803 = vmatprep.subr.mxu0 0.0
    %1804 = vmatpush1.msra.mxu0 0.0
    %1805 = vmatprep.subr.mxu0 0.0
    %1806 = vmatpush1.msra.mxu0 0.0
    %1807 = vmatprep.subr.mxu0 0.0
    %1808 = vmatpush1.msra.mxu0 0.0
    %1809 = vmatprep.subr.mxu0 0.0
    %1810 = vmatpush1.msra.mxu0 0.0
    %1811 = vmatprep.subr.mxu0 0.0
    %1812 = vmatpush1.msra.mxu0 0.0
    %1813 = vmatprep.subr.mxu0 0.0
    %1814 = vmatpush1.msra.mxu0 0.0
    %1815 = vmatprep.subr.mxu0 0.0
    %1816 = vmatpush1.msra.mxu0 0.0
    %1817 = vmatprep.subr.mxu0 0.0
    %1818 = vmatpush1.msra.mxu0 0.0
    %1819 = vmatprep.subr.mxu0 0.0
    %1820 = vmatpush1.msra.mxu0 0.0
    %1821 = vmatprep.subr.mxu0 0.0
    %1822 = vmatpush1.msra.mxu0 0.0
    %1823 = vmatprep.subr.mxu0 0.0
    %1824 = vmatpush1.msra.mxu0 0.0
    %1825 = vmatprep.subr.mxu0 0.0
    %1826 = vmatpush1.msra.mxu0 0.0
    %1827 = vmatprep.subr.mxu0 0.0
    %1828 = vmatpush1.msra.mxu0 0.0
    %1829 = vmatprep.subr.mxu0 0.0
    %1830 = vmatpush1.msra.mxu0 0.0
    %1831 = vmatprep.subr.mxu0 0.0
    %1832 = vmatpush1.msra.mxu0 0.0
    %1833 = vmatprep.subr.mxu0 0.0
    %1834 = vmatpush1.msra.mxu0 0.0
    %1835 = vmatprep.subr.mxu0 0.0
    %1836 = vmatpush1.msra.mxu0 0.0
    %1837 = vmatprep.mubr.f32.mxu0 0.0
    %1838 = vmatmul.mubr.f32.gmra.mrb[0].mxu0 %v1768
    %v1839 = vpop.f32.mrb[0].mxu0
    %v1840 = vadd.f32 %v1766, %v1839
    %v1841 = vpop.f32.mrb[0].mxu0
    %1842 = vmatprep.mubr.f32.mxu0 0.0
    %1843 = vmatmul.mubr.f32.gmra.mrb[0].mxu0 %v1771
    %v1844 = vpop.f32.mrb[0].mxu0
    %v1845 = vadd.f32 %v1766, %v1844
    %v1846 = vpop.f32.mrb[0].mxu0
    %1847 = vdwg.mxu0
    %v1848 = vmax.f32 %v1840, 0.0
    %v1849 = vmax.f32 %v1845, 0.0
    %s1850 = scalar_lea.vmem %s11, 64
    %v1851 = vld [vmem:[%s1850] sm:$0xff]
    %v1852 = vld [vmem:[%s1850 + $0x8] sm:$0xff]
    %v1853 = vld [vmem:[%s1850 + $0x10] sm:$0xff]
    %v1854 = vld [vmem:[%s1850 + $0x18] sm:$0xff]
    %v1855 = vld [vmem:[%s1850 + $0x20] sm:$0xff]
    %v1856 = vld [vmem:[%s1850 + $0x28] sm:$0xff]
    %v1857 = vld [vmem:[%s1850 + $0x30] sm:$0xff]
    %v1858 = vld [vmem:[%s1850 + $0x38] sm:$0xff]
    %v1859 = vlaneseq
    %v1860 = vshrl.u32 %v1859, 7
    %v1861 = vsub.s32 1, %v1860
    %v1862 = vrot.slane %v1032, %v1861
    %v1864 = vsel %vm423, %v1848, 0
    %v1867 = vsel %vm423, %v1849, 0
    %1869 = vmatprep.subr.mxu0 0.0
    %1870 = vmatpush1.msra.mxu0 %v1851
    %1871 = vmatprep.subr.mxu0 0.0
    %1872 = vmatpush1.msra.mxu0 %v1852
    %1873 = vmatprep.subr.mxu0 0.0
    %1874 = vmatpush1.msra.mxu0 %v1853
    %1875 = vmatprep.subr.mxu0 0.0
    %1876 = vmatpush1.msra.mxu0 %v1854
    %1877 = vmatprep.subr.mxu0 0.0
    %1878 = vmatpush1.msra.mxu0 %v1855
    %1879 = vmatprep.subr.mxu0 0.0
    %1880 = vmatpush1.msra.mxu0 %v1856
    %1881 = vmatprep.subr.mxu0 0.0
    %1882 = vmatpush1.msra.mxu0 %v1857
    %1883 = vmatprep.subr.mxu0 0.0
    %1884 = vmatpush1.msra.mxu0 %v1858
    %1885 = vmatprep.subr.mxu0 0.0
    %1886 = vmatpush1.msra.mxu0 0.0
    %1887 = vmatprep.subr.mxu0 0.0
    %1888 = vmatpush1.msra.mxu0 0.0
    %1889 = vmatprep.subr.mxu0 0.0
    %1890 = vmatpush1.msra.mxu0 0.0
    %1891 = vmatprep.subr.mxu0 0.0
    %1892 = vmatpush1.msra.mxu0 0.0
    %1893 = vmatprep.subr.mxu0 0.0
    %1894 = vmatpush1.msra.mxu0 0.0
    %1895 = vmatprep.subr.mxu0 0.0
    %1896 = vmatpush1.msra.mxu0 0.0
    %1897 = vmatprep.subr.mxu0 0.0
    %1898 = vmatpush1.msra.mxu0 0.0
    %1899 = vmatprep.subr.mxu0 0.0
    %1900 = vmatpush1.msra.mxu0 0.0
    %1901 = vmatprep.subr.mxu0 0.0
    %1902 = vmatpush1.msra.mxu0 0.0
    %1903 = vmatprep.subr.mxu0 0.0
    %1904 = vmatpush1.msra.mxu0 0.0
    %1905 = vmatprep.subr.mxu0 0.0
    %1906 = vmatpush1.msra.mxu0 0.0
    %1907 = vmatprep.subr.mxu0 0.0
    %1908 = vmatpush1.msra.mxu0 0.0
    %1909 = vmatprep.subr.mxu0 0.0
    %1910 = vmatpush1.msra.mxu0 0.0
    %1911 = vmatprep.subr.mxu0 0.0
    %1912 = vmatpush1.msra.mxu0 0.0
    %1913 = vmatprep.subr.mxu0 0.0
    %1914 = vmatpush1.msra.mxu0 0.0
    %1915 = vmatprep.subr.mxu0 0.0
    %1916 = vmatpush1.msra.mxu0 0.0
    %1917 = vmatprep.subr.mxu0 0.0
    %1918 = vmatpush1.msra.mxu0 0.0
    %1919 = vmatprep.subr.mxu0 0.0
    %1920 = vmatpush1.msra.mxu0 0.0
    %1921 = vmatprep.subr.mxu0 0.0
    %1922 = vmatpush1.msra.mxu0 0.0
    %1923 = vmatprep.subr.mxu0 0.0
    %1924 = vmatpush1.msra.mxu0 0.0
    %1925 = vmatprep.subr.mxu0 0.0
    %1926 = vmatpush1.msra.mxu0 0.0
    %1927 = vmatprep.subr.mxu0 0.0
    %1928 = vmatpush1.msra.mxu0 0.0
    %1929 = vmatprep.subr.mxu0 0.0
    %1930 = vmatpush1.msra.mxu0 0.0
    %1931 = vmatprep.subr.mxu0 0.0
    %1932 = vmatpush1.msra.mxu0 0.0
    %1933 = vmatprep.mubr.f32.mxu0 0.0
    %1934 = vmatmul.mubr.f32.gmra.mrb[0].mxu0 %v1864
    %v1935 = vpop.f32.mrb[0].mxu0
    %v1936 = vadd.f32 %v1862, %v1935
    %v1937 = vpop.f32.mrb[0].mxu0
    %1938 = vmatprep.mubr.f32.mxu0 0.0
    %1939 = vmatmul.mubr.f32.gmra.mrb[0].mxu0 %v1867
    %v1940 = vpop.f32.mrb[0].mxu0
    %v1941 = vadd.f32 %v1862, %v1940
    %v1942 = vpop.f32.mrb[0].mxu0
    %1943 = vdwg.mxu0
    %v1944 = vmax.f32 %v1936, 0.0
    %v1945 = vmax.f32 %v1941, 0.0
    %s1946 = scalar_lea.vmem %s12, 8
    %v1947 = vld [vmem:[%s1946] sm:$0xf]
    %s1948 = scalar_lea.vmem %s13, 4
    %v1949 = vld [vmem:[%s1948] sm:$0x3]
    %1950 = vmatprep.subr.mxu0 0.0
    %1951 = vmatpush1.msra.mxu0 %v1944
    %1952 = vmatprep.subr.mxu0 0.0
    %1953 = vmatpush1.msra.mxu0 %v1945
    %1954 = vmatprep.subr.mxu0 0.0
    %1955 = vmatpush1.msra.mxu0 0.0
    %1956 = vmatprep.subr.mxu0 0.0
    %1957 = vmatpush1.msra.mxu0 0.0
    %1958 = vmatprep.subr.mxu0 0.0
    %1959 = vmatpush1.msra.mxu0 0.0
    %1960 = vmatprep.subr.mxu0 0.0
    %1961 = vmatpush1.msra.mxu0 0.0
    %1962 = vmatprep.subr.mxu0 0.0
    %1963 = vmatpush1.msra.mxu0 0.0
    %1964 = vmatprep.subr.mxu0 0.0
    %1965 = vmatpush1.msra.mxu0 0.0
    %1966 = vmatprep.subr.mxu0 0.0
    %1967 = vmatpush1.msra.mxu0 0.0
    %1968 = vmatprep.subr.mxu0 0.0
    %1969 = vmatpush1.msra.mxu0 0.0
    %1970 = vmatprep.subr.mxu0 0.0
    %1971 = vmatpush1.msra.mxu0 0.0
    %1972 = vmatprep.subr.mxu0 0.0
    %1973 = vmatpush1.msra.mxu0 0.0
    %1974 = vmatprep.subr.mxu0 0.0
    %1975 = vmatpush1.msra.mxu0 0.0
    %1976 = vmatprep.subr.mxu0 0.0
    %1977 = vmatpush1.msra.mxu0 0.0
    %1978 = vmatprep.subr.mxu0 0.0
    %1979 = vmatpush1.msra.mxu0 0.0
    %1980 = vmatprep.subr.mxu0 0.0
    %1981 = vmatpush1.msra.mxu0 0.0
    %1982 = vmatprep.subr.mxu0 0.0
    %1983 = vmatpush1.msra.mxu0 0.0
    %1984 = vmatprep.subr.mxu0 0.0
    %1985 = vmatpush1.msra.mxu0 0.0
    %1986 = vmatprep.subr.mxu0 0.0
    %1987 = vmatpush1.msra.mxu0 0.0
    %1988 = vmatprep.subr.mxu0 0.0
    %1989 = vmatpush1.msra.mxu0 0.0
    %1990 = vmatprep.subr.mxu0 0.0
    %1991 = vmatpush1.msra.mxu0 0.0
    %1992 = vmatprep.subr.mxu0 0.0
    %1993 = vmatpush1.msra.mxu0 0.0
    %1994 = vmatprep.subr.mxu0 0.0
    %1995 = vmatpush1.msra.mxu0 0.0
    %1996 = vmatprep.subr.mxu0 0.0
    %1997 = vmatpush1.msra.mxu0 0.0
    %1998 = vmatprep.subr.mxu0 0.0
    %1999 = vmatpush1.msra.mxu0 0.0
    %2000 = vmatprep.subr.mxu0 0.0
    %2001 = vmatpush1.msra.mxu0 0.0
    %2002 = vmatprep.subr.mxu0 0.0
    %2003 = vmatpush1.msra.mxu0 0.0
    %2004 = vmatprep.subr.mxu0 0.0
    %2005 = vmatpush1.msra.mxu0 0.0
    %2006 = vmatprep.subr.mxu0 0.0
    %2007 = vmatpush1.msra.mxu0 0.0
    %2008 = vmatprep.subr.mxu0 0.0
    %2009 = vmatpush1.msra.mxu0 0.0
    %2010 = vmatprep.subr.mxu0 0.0
    %2011 = vmatpush1.msra.mxu0 0.0
    %2012 = vmatprep.subr.mxu0 0.0
    %2013 = vmatpush1.msra.mxu0 0.0
    %2014 = vmatprep.mubr.f32.mxu0 0.0
    %2015 = vmatmul.mubr.f32.gmra.mrb[0].mxu0 %v92
    %v2016 = vpop.f32.mrb[0].mxu0
    %v2017 = vadd.f32 0.0, %v2016
    %v2018 = vpop.f32.mrb[0].mxu0
    %2019 = vmatprep.mubr.f32.mxu0 0.0
    %2020 = vmatmul.mubr.f32.gmra.mrb[0].mxu0 %v95
    %v2021 = vpop.f32.mrb[0].mxu0
    %v2022 = vadd.f32 0.0, %v2021
    %v2023 = vpop.f32.mrb[0].mxu0
    %2024 = vdwg.mxu0
    %s2025 = scalar_lea.vmem %s6, 192
    %v2026 = vld [vmem:[%s2025] sm:$0xff]
    %v2027 = vld [vmem:[%s2025 + $0x8] sm:$0xff]
    %v2028 = vld [vmem:[%s2025 + $0x10] sm:$0xff]
    %v2029 = vld [vmem:[%s2025 + $0x18] sm:$0xff]
    %v2030 = vld [vmem:[%s2025 + $0x20] sm:$0xff]
    %v2031 = vld [vmem:[%s2025 + $0x28] sm:$0xff]
    %v2032 = vld [vmem:[%s2025 + $0x30] sm:$0xff]
    %v2033 = vld [vmem:[%s2025 + $0x38] sm:$0xff]
    %v2034 = vld [vmem:[%s2025 + $0x40] sm:$0xff]
    %v2035 = vld [vmem:[%s2025 + $0x48] sm:$0xff]
    %v2036 = vld [vmem:[%s2025 + $0x50] sm:$0xff]
    %v2037 = vld [vmem:[%s2025 + $0x58] sm:$0xff]
    %v2039 = vsel %vm184, %v1601, 0
    %2041 = vmatprep.subr.mxu0 0.0
    %2042 = vmatpush1.msra.mxu0 %v2030
    %2043 = vmatprep.subr.mxu0 0.0
    %2044 = vmatpush1.msra.mxu0 %v2031
    %2045 = vmatprep.subr.mxu0 0.0
    %2046 = vmatpush1.msra.mxu0 %v2032
    %2047 = vmatprep.subr.mxu0 0.0
    %2048 = vmatpush1.msra.mxu0 %v2033
    %2049 = vmatprep.subr.mxu0 0.0
    %2050 = vmatpush1.msra.mxu0 0.0
    %2051 = vmatprep.subr.mxu0 0.0
    %2052 = vmatpush1.msra.mxu0 0.0
    %2053 = vmatprep.subr.mxu0 0.0
    %2054 = vmatpush1.msra.mxu0 0.0
    %2055 = vmatprep.subr.mxu0 0.0
    %2056 = vmatpush1.msra.mxu0 0.0
    %2057 = vmatprep.subr.mxu0 0.0
    %2058 = vmatpush1.msra.mxu0 0.0
    %2059 = vmatprep.subr.mxu0 0.0
    %2060 = vmatpush1.msra.mxu0 0.0
    %2061 = vmatprep.subr.mxu0 0.0
    %2062 = vmatpush1.msra.mxu0 0.0
    %2063 = vmatprep.subr.mxu0 0.0
    %2064 = vmatpush1.msra.mxu0 0.0
    %2065 = vmatprep.subr.mxu0 0.0
    %2066 = vmatpush1.msra.mxu0 0.0
    %2067 = vmatprep.subr.mxu0 0.0
    %2068 = vmatpush1.msra.mxu0 0.0
    %2069 = vmatprep.subr.mxu0 0.0
    %2070 = vmatpush1.msra.mxu0 0.0
    %2071 = vmatprep.subr.mxu0 0.0
    %2072 = vmatpush1.msra.mxu0 0.0
    %2073 = vmatprep.subr.mxu0 0.0
    %2074 = vmatpush1.msra.mxu0 0.0
    %2075 = vmatprep.subr.mxu0 0.0
    %2076 = vmatpush1.msra.mxu0 0.0
    %2077 = vmatprep.subr.mxu0 0.0
    %2078 = vmatpush1.msra.mxu0 0.0
    %2079 = vmatprep.subr.mxu0 0.0
    %2080 = vmatpush1.msra.mxu0 0.0
    %2081 = vmatprep.subr.mxu0 0.0
    %2082 = vmatpush1.msra.mxu0 0.0
    %2083 = vmatprep.subr.mxu0 0.0
    %2084 = vmatpush1.msra.mxu0 0.0
    %2085 = vmatprep.subr.mxu0 0.0
    %2086 = vmatpush1.msra.mxu0 0.0
    %2087 = vmatprep.subr.mxu0 0.0
    %2088 = vmatpush1.msra.mxu0 0.0
    %2089 = vmatprep.subr.mxu0 0.0
    %2090 = vmatpush1.msra.mxu0 0.0
    %2091 = vmatprep.subr.mxu0 0.0
    %2092 = vmatpush1.msra.mxu0 0.0
    %2093 = vmatprep.subr.mxu0 0.0
    %2094 = vmatpush1.msra.mxu0 0.0
    %2095 = vmatprep.subr.mxu0 0.0
    %2096 = vmatpush1.msra.mxu0 0.0
    %2097 = vmatprep.subr.mxu0 0.0
    %2098 = vmatpush1.msra.mxu0 0.0
    %2099 = vmatprep.subr.mxu0 0.0
    %2100 = vmatpush1.msra.mxu0 0.0
    %2101 = vmatprep.subr.mxu0 0.0
    %2102 = vmatpush1.msra.mxu0 0.0
    %2103 = vmatprep.subr.mxu0 0.0
    %2104 = vmatpush1.msra.mxu0 0.0
    %2105 = vmatprep.mubr.f32.mxu0 0.0
    %2106 = vmatmul.mubr.f32.gmra.mrb[0].mxu0 %v2039
    %v2107 = vpop.f32.mrb[0].mxu0
    %v2108 = vadd.f32 0.0, %v2107
    %v2109 = vpop.f32.mrb[0].mxu0
    %2110 = vdwg.mxu0
    %v2112 = vsel %vm184, %v2017, 0
    %2114 = vmatprep.subr.mxu0 0.0
    %2115 = vmatpush1.msra.mxu0 %v2026
    %2116 = vmatprep.subr.mxu0 0.0
    %2117 = vmatpush1.msra.mxu0 %v2027
    %2118 = vmatprep.subr.mxu0 0.0
    %2119 = vmatpush1.msra.mxu0 %v2028
    %2120 = vmatprep.subr.mxu0 0.0
    %2121 = vmatpush1.msra.mxu0 %v2029
    %2122 = vmatprep.subr.mxu0 0.0
    %2123 = vmatpush1.msra.mxu0 0.0
    %2124 = vmatprep.subr.mxu0 0.0
    %2125 = vmatpush1.msra.mxu0 0.0
    %2126 = vmatprep.subr.mxu0 0.0
    %2127 = vmatpush1.msra.mxu0 0.0
    %2128 = vmatprep.subr.mxu0 0.0
    %2129 = vmatpush1.msra.mxu0 0.0
    %2130 = vmatprep.subr.mxu0 0.0
    %2131 = vmatpush1.msra.mxu0 0.0
    %2132 = vmatprep.subr.mxu0 0.0
    %2133 = vmatpush1.msra.mxu0 0.0
    %2134 = vmatprep.subr.mxu0 0.0
    %2135 = vmatpush1.msra.mxu0 0.0
    %2136 = vmatprep.subr.mxu0 0.0
    %2137 = vmatpush1.msra.mxu0 0.0
    %2138 = vmatprep.subr.mxu0 0.0
    %2139 = vmatpush1.msra.mxu0 0.0
    %2140 = vmatprep.subr.mxu0 0.0
    %2141 = vmatpush1.msra.mxu0 0.0
    %2142 = vmatprep.subr.mxu0 0.0
    %2143 = vmatpush1.msra.mxu0 0.0
    %2144 = vmatprep.subr.mxu0 0.0
    %2145 = vmatpush1.msra.mxu0 0.0
    %2146 = vmatprep.subr.mxu0 0.0
    %2147 = vmatpush1.msra.mxu0 0.0
    %2148 = vmatprep.subr.mxu0 0.0
    %2149 = vmatpush1.msra.mxu0 0.0
    %2150 = vmatprep.subr.mxu0 0.0
    %2151 = vmatpush1.msra.mxu0 0.0
    %2152 = vmatprep.subr.mxu0 0.0
    %2153 = vmatpush1.msra.mxu0 0.0
    %2154 = vmatprep.subr.mxu0 0.0
    %2155 = vmatpush1.msra.mxu0 0.0
    %2156 = vmatprep.subr.mxu0 0.0
    %2157 = vmatpush1.msra.mxu0 0.0
    %2158 = vmatprep.subr.mxu0 0.0
    %2159 = vmatpush1.msra.mxu0 0.0
    %2160 = vmatprep.subr.mxu0 0.0
    %2161 = vmatpush1.msra.mxu0 0.0
    %2162 = vmatprep.subr.mxu0 0.0
    %2163 = vmatpush1.msra.mxu0 0.0
    %2164 = vmatprep.subr.mxu0 0.0
    %2165 = vmatpush1.msra.mxu0 0.0
    %2166 = vmatprep.subr.mxu0 0.0
    %2167 = vmatpush1.msra.mxu0 0.0
    %2168 = vmatprep.subr.mxu0 0.0
    %2169 = vmatpush1.msra.mxu0 0.0
    %2170 = vmatprep.subr.mxu0 0.0
    %2171 = vmatpush1.msra.mxu0 0.0
    %2172 = vmatprep.subr.mxu0 0.0
    %2173 = vmatpush1.msra.mxu0 0.0
    %2174 = vmatprep.subr.mxu0 0.0
    %2175 = vmatpush1.msra.mxu0 0.0
    %2176 = vmatprep.subr.mxu0 0.0
    %2177 = vmatpush1.msra.mxu0 0.0
    %2178 = vmatprep.mubr.f32.mxu0 0.0
    %2179 = vmatmul.mubr.f32.gmra.mrb[0].mxu0 %v2112
    %v2180 = vpop.f32.mrb[0].mxu0
    %v2181 = vadd.f32 %v2108, %v2180
    %v2182 = vpop.f32.mrb[0].mxu0
    %2183 = vdwg.mxu0
    %v2185 = vsel %vm184, %v2022, 0
    %2187 = vmatprep.subr.mxu0 0.0
    %2188 = vmatpush1.msra.mxu0 %v2034
    %2189 = vmatprep.subr.mxu0 0.0
    %2190 = vmatpush1.msra.mxu0 %v2035
    %2191 = vmatprep.subr.mxu0 0.0
    %2192 = vmatpush1.msra.mxu0 %v2036
    %2193 = vmatprep.subr.mxu0 0.0
    %2194 = vmatpush1.msra.mxu0 %v2037
    %2195 = vmatprep.subr.mxu0 0.0
    %2196 = vmatpush1.msra.mxu0 0.0
    %2197 = vmatprep.subr.mxu0 0.0
    %2198 = vmatpush1.msra.mxu0 0.0
    %2199 = vmatprep.subr.mxu0 0.0
    %2200 = vmatpush1.msra.mxu0 0.0
    %2201 = vmatprep.subr.mxu0 0.0
    %2202 = vmatpush1.msra.mxu0 0.0
    %2203 = vmatprep.subr.mxu0 0.0
    %2204 = vmatpush1.msra.mxu0 0.0
    %2205 = vmatprep.subr.mxu0 0.0
    %2206 = vmatpush1.msra.mxu0 0.0
    %2207 = vmatprep.subr.mxu0 0.0
    %2208 = vmatpush1.msra.mxu0 0.0
    %2209 = vmatprep.subr.mxu0 0.0
    %2210 = vmatpush1.msra.mxu0 0.0
    %2211 = vmatprep.subr.mxu0 0.0
    %2212 = vmatpush1.msra.mxu0 0.0
    %2213 = vmatprep.subr.mxu0 0.0
    %2214 = vmatpush1.msra.mxu0 0.0
    %2215 = vmatprep.subr.mxu0 0.0
    %2216 = vmatpush1.msra.mxu0 0.0
    %2217 = vmatprep.subr.mxu0 0.0
    %2218 = vmatpush1.msra.mxu0 0.0
    %2219 = vmatprep.subr.mxu0 0.0
    %2220 = vmatpush1.msra.mxu0 0.0
    %2221 = vmatprep.subr.mxu0 0.0
    %2222 = vmatpush1.msra.mxu0 0.0
    %2223 = vmatprep.subr.mxu0 0.0
    %2224 = vmatpush1.msra.mxu0 0.0
    %2225 = vmatprep.subr.mxu0 0.0
    %2226 = vmatpush1.msra.mxu0 0.0
    %2227 = vmatprep.subr.mxu0 0.0
    %2228 = vmatpush1.msra.mxu0 0.0
    %2229 = vmatprep.subr.mxu0 0.0
    %2230 = vmatpush1.msra.mxu0 0.0
    %2231 = vmatprep.subr.mxu0 0.0
    %2232 = vmatpush1.msra.mxu0 0.0
    %2233 = vmatprep.subr.mxu0 0.0
    %2234 = vmatpush1.msra.mxu0 0.0
    %2235 = vmatprep.subr.mxu0 0.0
    %2236 = vmatpush1.msra.mxu0 0.0
    %2237 = vmatprep.subr.mxu0 0.0
    %2238 = vmatpush1.msra.mxu0 0.0
    %2239 = vmatprep.subr.mxu0 0.0
    %2240 = vmatpush1.msra.mxu0 0.0
    %2241 = vmatprep.subr.mxu0 0.0
    %2242 = vmatpush1.msra.mxu0 0.0
    %2243 = vmatprep.subr.mxu0 0.0
    %2244 = vmatpush1.msra.mxu0 0.0
    %2245 = vmatprep.subr.mxu0 0.0
    %2246 = vmatpush1.msra.mxu0 0.0
    %2247 = vmatprep.subr.mxu0 0.0
    %2248 = vmatpush1.msra.mxu0 0.0
    %2249 = vmatprep.subr.mxu0 0.0
    %2250 = vmatpush1.msra.mxu0 0.0
    %2251 = vmatprep.mubr.f32.mxu0 0.0
    %2252 = vmatmul.mubr.f32.gmra.mrb[0].mxu0 %v2185
    %v2253 = vpop.f32.mrb[0].mxu0
    %v2254 = vadd.f32 0.0, %v2253
    %v2255 = vpop.f32.mrb[0].mxu0
    %2256 = vdwg.mxu0
    %v2257 = vadd.f32 %v2181, %v2254
    %v2258 = vlaneseq
    %v2259 = vshrl.u32 %v2258, 7
    %v2260 = vsub.s32 0, %v2259
    %v2261 = vrot.slane %v1947, %v2260
    %v2262 = vadd.f32 %v2257, %v2261
    %v2263 = vmax.f32 %v2262, 0.0
    %s2264 = scalar_lea.vmem %s7, 128
    %v2265 = vld [vmem:[%s2264] sm:$0xff]
    %v2266 = vld [vmem:[%s2264 + $0x8] sm:$0xff]
    %v2267 = vld [vmem:[%s2264 + $0x10] sm:$0xff]
    %v2268 = vld [vmem:[%s2264 + $0x18] sm:$0xff]
    %v2269 = vld [vmem:[%s2264 + $0x20] sm:$0xff]
    %v2270 = vld [vmem:[%s2264 + $0x28] sm:$0xff]
    %v2271 = vld [vmem:[%s2264 + $0x30] sm:$0xff]
    %v2272 = vld [vmem:[%s2264 + $0x38] sm:$0xff]
    %v2273 = vlaneseq
    %v2274 = vshrl.u32 %v2273, 7
    %v2275 = vsub.s32 1, %v2274
    %v2276 = vrot.slane %v1947, %v2275
    %v2278 = vsel %vm423, %v2263, 0
    %2280 = vmatprep.subr.mxu0 0.0
    %2281 = vmatpush1.msra.mxu0 %v2265
    %2282 = vmatprep.subr.mxu0 0.0
    %2283 = vmatpush1.msra.mxu0 %v2266
    %2284 = vmatprep.subr.mxu0 0.0
    %2285 = vmatpush1.msra.mxu0 %v2267
    %2286 = vmatprep.subr.mxu0 0.0
    %2287 = vmatpush1.msra.mxu0 %v2268
    %2288 = vmatprep.subr.mxu0 0.0
    %2289 = vmatpush1.msra.mxu0 %v2269
    %2290 = vmatprep.subr.mxu0 0.0
    %2291 = vmatpush1.msra.mxu0 %v2270
    %2292 = vmatprep.subr.mxu0 0.0
    %2293 = vmatpush1.msra.mxu0 %v2271
    %2294 = vmatprep.subr.mxu0 0.0
    %2295 = vmatpush1.msra.mxu0 %v2272
    %2296 = vmatprep.subr.mxu0 0.0
    %2297 = vmatpush1.msra.mxu0 0.0
    %2298 = vmatprep.subr.mxu0 0.0
    %2299 = vmatpush1.msra.mxu0 0.0
    %2300 = vmatprep.subr.mxu0 0.0
    %2301 = vmatpush1.msra.mxu0 0.0
    %2302 = vmatprep.subr.mxu0 0.0
    %2303 = vmatpush1.msra.mxu0 0.0
    %2304 = vmatprep.subr.mxu0 0.0
    %2305 = vmatpush1.msra.mxu0 0.0
    %2306 = vmatprep.subr.mxu0 0.0
    %2307 = vmatpush1.msra.mxu0 0.0
    %2308 = vmatprep.subr.mxu0 0.0
    %2309 = vmatpush1.msra.mxu0 0.0
    %2310 = vmatprep.subr.mxu0 0.0
    %2311 = vmatpush1.msra.mxu0 0.0
    %2312 = vmatprep.subr.mxu0 0.0
    %2313 = vmatpush1.msra.mxu0 0.0
    %2314 = vmatprep.subr.mxu0 0.0
    %2315 = vmatpush1.msra.mxu0 0.0
    %2316 = vmatprep.subr.mxu0 0.0
    %2317 = vmatpush1.msra.mxu0 0.0
    %2318 = vmatprep.subr.mxu0 0.0
    %2319 = vmatpush1.msra.mxu0 0.0
    %2320 = vmatprep.subr.mxu0 0.0
    %2321 = vmatpush1.msra.mxu0 0.0
    %2322 = vmatprep.subr.mxu0 0.0
    %2323 = vmatpush1.msra.mxu0 0.0
    %2324 = vmatprep.subr.mxu0 0.0
    %2325 = vmatpush1.msra.mxu0 0.0
    %2326 = vmatprep.subr.mxu0 0.0
    %2327 = vmatpush1.msra.mxu0 0.0
    %2328 = vmatprep.subr.mxu0 0.0
    %2329 = vmatpush1.msra.mxu0 0.0
    %2330 = vmatprep.subr.mxu0 0.0
    %2331 = vmatpush1.msra.mxu0 0.0
    %2332 = vmatprep.subr.mxu0 0.0
    %2333 = vmatpush1.msra.mxu0 0.0
    %2334 = vmatprep.subr.mxu0 0.0
    %2335 = vmatpush1.msra.mxu0 0.0
    %2336 = vmatprep.subr.mxu0 0.0
    %2337 = vmatpush1.msra.mxu0 0.0
    %2338 = vmatprep.subr.mxu0 0.0
    %2339 = vmatpush1.msra.mxu0 0.0
    %2340 = vmatprep.subr.mxu0 0.0
    %2341 = vmatpush1.msra.mxu0 0.0
    %2342 = vmatprep.subr.mxu0 0.0
    %2343 = vmatpush1.msra.mxu0 0.0
    %2344 = vmatprep.mubr.f32.mxu0 0.0
    %2345 = vmatmul.mubr.f32.gmra.mrb[0].mxu0 %v2278
    %v2346 = vpop.f32.mrb[0].mxu0
    %v2347 = vadd.f32 %v2276, %v2346
    %v2348 = vpop.f32.mrb[0].mxu0
    %2349 = vdwg.mxu0
    %v2350 = vmax.f32 %v2347, 0.0
    %s2351 = scalar_lea.vmem %s8, 128
    %v2352 = vld [vmem:[%s2351] sm:$0xff]
    %v2353 = vld [vmem:[%s2351 + $0x8] sm:$0xff]
    %v2354 = vld [vmem:[%s2351 + $0x10] sm:$0xff]
    %v2355 = vld [vmem:[%s2351 + $0x18] sm:$0xff]
    %v2356 = vld [vmem:[%s2351 + $0x20] sm:$0xff]
    %v2357 = vld [vmem:[%s2351 + $0x28] sm:$0xff]
    %v2358 = vld [vmem:[%s2351 + $0x30] sm:$0xff]
    %v2359 = vld [vmem:[%s2351 + $0x38] sm:$0xff]
    %v2360 = vlaneseq
    %v2361 = vshrl.u32 %v2360, 7
    %v2362 = vsub.s32 2, %v2361
    %v2363 = vrot.slane %v1947, %v2362
    %2364 = vmatprep.subr.mxu0 0.0
    %2365 = vmatpush1.msra.mxu0 %v2352
    %2366 = vmatprep.subr.mxu0 0.0
    %2367 = vmatpush1.msra.mxu0 %v2353
    %2368 = vmatprep.subr.mxu0 0.0
    %2369 = vmatpush1.msra.mxu0 %v2354
    %2370 = vmatprep.subr.mxu0 0.0
    %2371 = vmatpush1.msra.mxu0 %v2355
    %2372 = vmatprep.subr.mxu0 0.0
    %2373 = vmatpush1.msra.mxu0 %v2356
    %2374 = vmatprep.subr.mxu0 0.0
    %2375 = vmatpush1.msra.mxu0 %v2357
    %2376 = vmatprep.subr.mxu0 0.0
    %2377 = vmatpush1.msra.mxu0 %v2358
    %2378 = vmatprep.subr.mxu0 0.0
    %2379 = vmatpush1.msra.mxu0 %v2359
    %2380 = vmatprep.subr.mxu0 0.0
    %2381 = vmatpush1.msra.mxu0 0.0
    %2382 = vmatprep.subr.mxu0 0.0
    %2383 = vmatpush1.msra.mxu0 0.0
    %2384 = vmatprep.subr.mxu0 0.0
    %2385 = vmatpush1.msra.mxu0 0.0
    %2386 = vmatprep.subr.mxu0 0.0
    %2387 = vmatpush1.msra.mxu0 0.0
    %2388 = vmatprep.subr.mxu0 0.0
    %2389 = vmatpush1.msra.mxu0 0.0
    %2390 = vmatprep.subr.mxu0 0.0
    %2391 = vmatpush1.msra.mxu0 0.0
    %2392 = vmatprep.subr.mxu0 0.0
    %2393 = vmatpush1.msra.mxu0 0.0
    %2394 = vmatprep.subr.mxu0 0.0
    %2395 = vmatpush1.msra.mxu0 0.0
    %2396 = vmatprep.subr.mxu0 0.0
    %2397 = vmatpush1.msra.mxu0 0.0
    %2398 = vmatprep.subr.mxu0 0.0
    %2399 = vmatpush1.msra.mxu0 0.0
    %2400 = vmatprep.subr.mxu0 0.0
    %2401 = vmatpush1.msra.mxu0 0.0
    %2402 = vmatprep.subr.mxu0 0.0
    %2403 = vmatpush1.msra.mxu0 0.0
    %2404 = vmatprep.subr.mxu0 0.0
    %2405 = vmatpush1.msra.mxu0 0.0
    %2406 = vmatprep.subr.mxu0 0.0
    %2407 = vmatpush1.msra.mxu0 0.0
    %2408 = vmatprep.subr.mxu0 0.0
    %2409 = vmatpush1.msra.mxu0 0.0
    %2410 = vmatprep.subr.mxu0 0.0
    %2411 = vmatpush1.msra.mxu0 0.0
    %2412 = vmatprep.subr.mxu0 0.0
    %2413 = vmatpush1.msra.mxu0 0.0
    %2414 = vmatprep.subr.mxu0 0.0
    %2415 = vmatpush1.msra.mxu0 0.0
    %2416 = vmatprep.subr.mxu0 0.0
    %2417 = vmatpush1.msra.mxu0 0.0
    %2418 = vmatprep.subr.mxu0 0.0
    %2419 = vmatpush1.msra.mxu0 0.0
    %2420 = vmatprep.subr.mxu0 0.0
    %2421 = vmatpush1.msra.mxu0 0.0
    %2422 = vmatprep.subr.mxu0 0.0
    %2423 = vmatpush1.msra.mxu0 0.0
    %2424 = vmatprep.subr.mxu0 0.0
    %2425 = vmatpush1.msra.mxu0 0.0
    %2426 = vmatprep.subr.mxu0 0.0
    %2427 = vmatpush1.msra.mxu0 0.0
    %2428 = vmatprep.mubr.f32.mxu0 0.0
    %2429 = vmatmul.mubr.f32.gmra.mrb[0].mxu0 %v2278
    %v2430 = vpop.f32.mrb[0].mxu0
    %v2431 = vadd.f32 %v2363, %v2430
    %v2432 = vpop.f32.mrb[0].mxu0
    %2433 = vdwg.mxu0
    %v2434 = vmax.f32 %v2431, 0.0
    %s2435 = scalar_lea.vmem %s9, 128
    %v2436 = vld [vmem:[%s2435] sm:$0xff]
    %v2437 = vld [vmem:[%s2435 + $0x8] sm:$0xff]
    %v2438 = vld [vmem:[%s2435 + $0x10] sm:$0xff]
    %v2439 = vld [vmem:[%s2435 + $0x18] sm:$0xff]
    %v2440 = vld [vmem:[%s2435 + $0x20] sm:$0xff]
    %v2441 = vld [vmem:[%s2435 + $0x28] sm:$0xff]
    %v2442 = vld [vmem:[%s2435 + $0x30] sm:$0xff]
    %v2443 = vld [vmem:[%s2435 + $0x38] sm:$0xff]
    %v2444 = vlaneseq
    %v2445 = vshrl.u32 %v2444, 7
    %v2446 = vsub.s32 0, %v2445
    %v2447 = vrot.slane %v1949, %v2446
    %2448 = vmatprep.subr.mxu0 0.0
    %2449 = vmatpush1.msra.mxu0 %v2436
    %2450 = vmatprep.subr.mxu0 0.0
    %2451 = vmatpush1.msra.mxu0 %v2437
    %2452 = vmatprep.subr.mxu0 0.0
    %2453 = vmatpush1.msra.mxu0 %v2438
    %2454 = vmatprep.subr.mxu0 0.0
    %2455 = vmatpush1.msra.mxu0 %v2439
    %2456 = vmatprep.subr.mxu0 0.0
    %2457 = vmatpush1.msra.mxu0 %v2440
    %2458 = vmatprep.subr.mxu0 0.0
    %2459 = vmatpush1.msra.mxu0 %v2441
    %2460 = vmatprep.subr.mxu0 0.0
    %2461 = vmatpush1.msra.mxu0 %v2442
    %2462 = vmatprep.subr.mxu0 0.0
    %2463 = vmatpush1.msra.mxu0 %v2443
    %2464 = vmatprep.subr.mxu0 0.0
    %2465 = vmatpush1.msra.mxu0 0.0
    %2466 = vmatprep.subr.mxu0 0.0
    %2467 = vmatpush1.msra.mxu0 0.0
    %2468 = vmatprep.subr.mxu0 0.0
    %2469 = vmatpush1.msra.mxu0 0.0
    %2470 = vmatprep.subr.mxu0 0.0
    %2471 = vmatpush1.msra.mxu0 0.0
    %2472 = vmatprep.subr.mxu0 0.0
    %2473 = vmatpush1.msra.mxu0 0.0
    %2474 = vmatprep.subr.mxu0 0.0
    %2475 = vmatpush1.msra.mxu0 0.0
    %2476 = vmatprep.subr.mxu0 0.0
    %2477 = vmatpush1.msra.mxu0 0.0
    %2478 = vmatprep.subr.mxu0 0.0
    %2479 = vmatpush1.msra.mxu0 0.0
    %2480 = vmatprep.subr.mxu0 0.0
    %2481 = vmatpush1.msra.mxu0 0.0
    %2482 = vmatprep.subr.mxu0 0.0
    %2483 = vmatpush1.msra.mxu0 0.0
    %2484 = vmatprep.subr.mxu0 0.0
    %2485 = vmatpush1.msra.mxu0 0.0
    %2486 = vmatprep.subr.mxu0 0.0
    %2487 = vmatpush1.msra.mxu0 0.0
    %2488 = vmatprep.subr.mxu0 0.0
    %2489 = vmatpush1.msra.mxu0 0.0
    %2490 = vmatprep.subr.mxu0 0.0
    %2491 = vmatpush1.msra.mxu0 0.0
    %2492 = vmatprep.subr.mxu0 0.0
    %2493 = vmatpush1.msra.mxu0 0.0
    %2494 = vmatprep.subr.mxu0 0.0
    %2495 = vmatpush1.msra.mxu0 0.0
    %2496 = vmatprep.subr.mxu0 0.0
    %2497 = vmatpush1.msra.mxu0 0.0
    %2498 = vmatprep.subr.mxu0 0.0
    %2499 = vmatpush1.msra.mxu0 0.0
    %2500 = vmatprep.subr.mxu0 0.0
    %2501 = vmatpush1.msra.mxu0 0.0
    %2502 = vmatprep.subr.mxu0 0.0
    %2503 = vmatpush1.msra.mxu0 0.0
    %2504 = vmatprep.subr.mxu0 0.0
    %2505 = vmatpush1.msra.mxu0 0.0
    %2506 = vmatprep.subr.mxu0 0.0
    %2507 = vmatpush1.msra.mxu0 0.0
    %2508 = vmatprep.subr.mxu0 0.0
    %2509 = vmatpush1.msra.mxu0 0.0
    %2510 = vmatprep.subr.mxu0 0.0
    %2511 = vmatpush1.msra.mxu0 0.0
    %2512 = vmatprep.mubr.f32.mxu0 0.0
    %2513 = vmatmul.mubr.f32.gmra.mrb[0].mxu0 %v2278
    %v2514 = vpop.f32.mrb[0].mxu0
    %v2515 = vadd.f32 %v2447, %v2514
    %v2516 = vpop.f32.mrb[0].mxu0
    %2517 = vdwg.mxu0
    %v2518 = vmax.f32 %v2515, 0.0
    %2519 = vmatprep.subr.mxu0 0.0
    %2520 = vmatpush1.msra.mxu0 %v2434
    %2521 = vmatprep.subr.mxu0 0.0
    %2522 = vmatpush1.msra.mxu0 0.0
    %2523 = vmatprep.subr.mxu0 0.0
    %2524 = vmatpush1.msra.mxu0 0.0
    %2525 = vmatprep.subr.mxu0 0.0
    %2526 = vmatpush1.msra.mxu0 0.0
    %2527 = vmatprep.subr.mxu0 0.0
    %2528 = vmatpush1.msra.mxu0 0.0
    %2529 = vmatprep.subr.mxu0 0.0
    %2530 = vmatpush1.msra.mxu0 0.0
    %2531 = vmatprep.subr.mxu0 0.0
    %2532 = vmatpush1.msra.mxu0 0.0
    %2533 = vmatprep.subr.mxu0 0.0
    %2534 = vmatpush1.msra.mxu0 0.0
    %2535 = vmatprep.subr.mxu0 0.0
    %2536 = vmatpush1.msra.mxu0 0.0
    %2537 = vmatprep.subr.mxu0 0.0
    %2538 = vmatpush1.msra.mxu0 0.0
    %2539 = vmatprep.subr.mxu0 0.0
    %2540 = vmatpush1.msra.mxu0 0.0
    %2541 = vmatprep.subr.mxu0 0.0
    %2542 = vmatpush1.msra.mxu0 0.0
    %2543 = vmatprep.subr.mxu0 0.0
    %2544 = vmatpush1.msra.mxu0 0.0
    %2545 = vmatprep.subr.mxu0 0.0
    %2546 = vmatpush1.msra.mxu0 0.0
    %2547 = vmatprep.subr.mxu0 0.0
    %2548 = vmatpush1.msra.mxu0 0.0
    %2549 = vmatprep.subr.mxu0 0.0
    %2550 = vmatpush1.msra.mxu0 0.0
    %2551 = vmatprep.subr.mxu0 0.0
    %2552 = vmatpush1.msra.mxu0 0.0
    %2553 = vmatprep.subr.mxu0 0.0
    %2554 = vmatpush1.msra.mxu0 0.0
    %2555 = vmatprep.subr.mxu0 0.0
    %2556 = vmatpush1.msra.mxu0 0.0
    %2557 = vmatprep.subr.mxu0 0.0
    %2558 = vmatpush1.msra.mxu0 0.0
    %2559 = vmatprep.subr.mxu0 0.0
    %2560 = vmatpush1.msra.mxu0 0.0
    %2561 = vmatprep.subr.mxu0 0.0
    %2562 = vmatpush1.msra.mxu0 0.0
    %2563 = vmatprep.subr.mxu0 0.0
    %2564 = vmatpush1.msra.mxu0 0.0
    %2565 = vmatprep.subr.mxu0 0.0
    %2566 = vmatpush1.msra.mxu0 0.0
    %2567 = vmatprep.subr.mxu0 0.0
    %2568 = vmatpush1.msra.mxu0 0.0
    %2569 = vmatprep.subr.mxu0 0.0
    %2570 = vmatpush1.msra.mxu0 0.0
    %2571 = vmatprep.subr.mxu0 0.0
    %2572 = vmatpush1.msra.mxu0 0.0
    %2573 = vmatprep.subr.mxu0 0.0
    %2574 = vmatpush1.msra.mxu0 0.0
    %2575 = vmatprep.subr.mxu0 0.0
    %2576 = vmatpush1.msra.mxu0 0.0
    %2577 = vmatprep.subr.mxu0 0.0
    %2578 = vmatpush1.msra.mxu0 0.0
    %2579 = vmatprep.subr.mxu0 0.0
    %2580 = vmatpush1.msra.mxu0 0.0
    %2581 = vmatprep.subr.mxu0 0.0
    %2582 = vmatpush1.msra.mxu0 0.0
    %2583 = vmatprep.mubr.f32.mxu0 0.0
    %2584 = vmatmul.mubr.f32.gmra.mrb[0].mxu0 %v666
    %v2585 = vpop.f32.mrb[0].mxu0
    %v2586 = vadd.f32 0.0, %v2585
    %v2587 = vpop.f32.mrb[0].mxu0
    %2588 = vmatprep.mubr.f32.mxu0 0.0
    %2589 = vmatmul.mubr.f32.gmra.mrb[0].mxu0 %v669
    %v2590 = vpop.f32.mrb[0].mxu0
    %v2591 = vadd.f32 0.0, %v2590
    %v2592 = vpop.f32.mrb[0].mxu0
    %2593 = vdwg.mxu0
    %2594 = vmatprep.subr.mxu0 0.0
    %2595 = vmatpush1.msra.mxu0 %v2350
    %2596 = vmatprep.subr.mxu0 0.0
    %2597 = vmatpush1.msra.mxu0 0.0
    %2598 = vmatprep.subr.mxu0 0.0
    %2599 = vmatpush1.msra.mxu0 0.0
    %2600 = vmatprep.subr.mxu0 0.0
    %2601 = vmatpush1.msra.mxu0 0.0
    %2602 = vmatprep.subr.mxu0 0.0
    %2603 = vmatpush1.msra.mxu0 0.0
    %2604 = vmatprep.subr.mxu0 0.0
    %2605 = vmatpush1.msra.mxu0 0.0
    %2606 = vmatprep.subr.mxu0 0.0
    %2607 = vmatpush1.msra.mxu0 0.0
    %2608 = vmatprep.subr.mxu0 0.0
    %2609 = vmatpush1.msra.mxu0 0.0
    %2610 = vmatprep.subr.mxu0 0.0
    %2611 = vmatpush1.msra.mxu0 0.0
    %2612 = vmatprep.subr.mxu0 0.0
    %2613 = vmatpush1.msra.mxu0 0.0
    %2614 = vmatprep.subr.mxu0 0.0
    %2615 = vmatpush1.msra.mxu0 0.0
    %2616 = vmatprep.subr.mxu0 0.0
    %2617 = vmatpush1.msra.mxu0 0.0
    %2618 = vmatprep.subr.mxu0 0.0
    %2619 = vmatpush1.msra.mxu0 0.0
    %2620 = vmatprep.subr.mxu0 0.0
    %2621 = vmatpush1.msra.mxu0 0.0
    %2622 = vmatprep.subr.mxu0 0.0
    %2623 = vmatpush1.msra.mxu0 0.0
    %2624 = vmatprep.subr.mxu0 0.0
    %2625 = vmatpush1.msra.mxu0 0.0
    %2626 = vmatprep.subr.mxu0 0.0
    %2627 = vmatpush1.msra.mxu0 0.0
    %2628 = vmatprep.subr.mxu0 0.0
    %2629 = vmatpush1.msra.mxu0 0.0
    %2630 = vmatprep.subr.mxu0 0.0
    %2631 = vmatpush1.msra.mxu0 0.0
    %2632 = vmatprep.subr.mxu0 0.0
    %2633 = vmatpush1.msra.mxu0 0.0
    %2634 = vmatprep.subr.mxu0 0.0
    %2635 = vmatpush1.msra.mxu0 0.0
    %2636 = vmatprep.subr.mxu0 0.0
    %2637 = vmatpush1.msra.mxu0 0.0
    %2638 = vmatprep.subr.mxu0 0.0
    %2639 = vmatpush1.msra.mxu0 0.0
    %2640 = vmatprep.subr.mxu0 0.0
    %2641 = vmatpush1.msra.mxu0 0.0
    %2642 = vmatprep.subr.mxu0 0.0
    %2643 = vmatpush1.msra.mxu0 0.0
    %2644 = vmatprep.subr.mxu0 0.0
    %2645 = vmatpush1.msra.mxu0 0.0
    %2646 = vmatprep.subr.mxu0 0.0
    %2647 = vmatpush1.msra.mxu0 0.0
    %2648 = vmatprep.subr.mxu0 0.0
    %2649 = vmatpush1.msra.mxu0 0.0
    %2650 = vmatprep.subr.mxu0 0.0
    %2651 = vmatpush1.msra.mxu0 0.0
    %2652 = vmatprep.subr.mxu0 0.0
    %2653 = vmatpush1.msra.mxu0 0.0
    %2654 = vmatprep.subr.mxu0 0.0
    %2655 = vmatpush1.msra.mxu0 0.0
    %2656 = vmatprep.subr.mxu0 0.0
    %2657 = vmatpush1.msra.mxu0 0.0
    %2658 = vmatprep.mubr.f32.mxu0 0.0
    %2659 = vmatmul.mubr.f32.gmra.mrb[0].mxu0 %v747
    %v2660 = vpop.f32.mrb[0].mxu0
    %v2661 = vadd.f32 %v2586, %v2660
    %v2662 = vpop.f32.mrb[0].mxu0
    %2663 = vmatprep.mubr.f32.mxu0 0.0
    %2664 = vmatmul.mubr.f32.gmra.mrb[0].mxu0 %v750
    %v2665 = vpop.f32.mrb[0].mxu0
    %v2666 = vadd.f32 %v2591, %v2665
    %v2667 = vpop.f32.mrb[0].mxu0
    %2668 = vdwg.mxu0
    %v2669 = vmul.f32 %v2661, %v830
    %v2670 = vmul.f32 %v2666, %v835
    %s2671 = scalar_lea.vmem %s10, 128
    %v2672 = vld [vmem:[%s2671] sm:$0xff]
    %v2673 = vld [vmem:[%s2671 + $0x8] sm:$0xff]
    %v2674 = vld [vmem:[%s2671 + $0x10] sm:$0xff]
    %v2675 = vld [vmem:[%s2671 + $0x18] sm:$0xff]
    %v2676 = vld [vmem:[%s2671 + $0x20] sm:$0xff]
    %v2677 = vld [vmem:[%s2671 + $0x28] sm:$0xff]
    %v2678 = vld [vmem:[%s2671 + $0x30] sm:$0xff]
    %v2679 = vld [vmem:[%s2671 + $0x38] sm:$0xff]
    %v2680 = vlaneseq
    %v2681 = vshrl.u32 %v2680, 7
    %v2682 = vsub.s32 3, %v2681
    %v2683 = vrot.slane %v1947, %v2682
    %v2685 = vsel %vm423, %v2669, 0
    %v2688 = vsel %vm423, %v2670, 0
    %2690 = vmatprep.subr.mxu0 0.0
    %2691 = vmatpush1.msra.mxu0 %v2672
    %2692 = vmatprep.subr.mxu0 0.0
    %2693 = vmatpush1.msra.mxu0 %v2673
    %2694 = vmatprep.subr.mxu0 0.0
    %2695 = vmatpush1.msra.mxu0 %v2674
    %2696 = vmatprep.subr.mxu0 0.0
    %2697 = vmatpush1.msra.mxu0 %v2675
    %2698 = vmatprep.subr.mxu0 0.0
    %2699 = vmatpush1.msra.mxu0 %v2676
    %2700 = vmatprep.subr.mxu0 0.0
    %2701 = vmatpush1.msra.mxu0 %v2677
    %2702 = vmatprep.subr.mxu0 0.0
    %2703 = vmatpush1.msra.mxu0 %v2678
    %2704 = vmatprep.subr.mxu0 0.0
    %2705 = vmatpush1.msra.mxu0 %v2679
    %2706 = vmatprep.subr.mxu0 0.0
    %2707 = vmatpush1.msra.mxu0 0.0
    %2708 = vmatprep.subr.mxu0 0.0
    %2709 = vmatpush1.msra.mxu0 0.0
    %2710 = vmatprep.subr.mxu0 0.0
    %2711 = vmatpush1.msra.mxu0 0.0
    %2712 = vmatprep.subr.mxu0 0.0
    %2713 = vmatpush1.msra.mxu0 0.0
    %2714 = vmatprep.subr.mxu0 0.0
    %2715 = vmatpush1.msra.mxu0 0.0
    %2716 = vmatprep.subr.mxu0 0.0
    %2717 = vmatpush1.msra.mxu0 0.0
    %2718 = vmatprep.subr.mxu0 0.0
    %2719 = vmatpush1.msra.mxu0 0.0
    %2720 = vmatprep.subr.mxu0 0.0
    %2721 = vmatpush1.msra.mxu0 0.0
    %2722 = vmatprep.subr.mxu0 0.0
    %2723 = vmatpush1.msra.mxu0 0.0
    %2724 = vmatprep.subr.mxu0 0.0
    %2725 = vmatpush1.msra.mxu0 0.0
    %2726 = vmatprep.subr.mxu0 0.0
    %2727 = vmatpush1.msra.mxu0 0.0
    %2728 = vmatprep.subr.mxu0 0.0
    %2729 = vmatpush1.msra.mxu0 0.0
    %2730 = vmatprep.subr.mxu0 0.0
    %2731 = vmatpush1.msra.mxu0 0.0
    %2732 = vmatprep.subr.mxu0 0.0
    %2733 = vmatpush1.msra.mxu0 0.0
    %2734 = vmatprep.subr.mxu0 0.0
    %2735 = vmatpush1.msra.mxu0 0.0
    %2736 = vmatprep.subr.mxu0 0.0
    %2737 = vmatpush1.msra.mxu0 0.0
    %2738 = vmatprep.subr.mxu0 0.0
    %2739 = vmatpush1.msra.mxu0 0.0
    %2740 = vmatprep.subr.mxu0 0.0
    %2741 = vmatpush1.msra.mxu0 0.0
    %2742 = vmatprep.subr.mxu0 0.0
    %2743 = vmatpush1.msra.mxu0 0.0
    %2744 = vmatprep.subr.mxu0 0.0
    %2745 = vmatpush1.msra.mxu0 0.0
    %2746 = vmatprep.subr.mxu0 0.0
    %2747 = vmatpush1.msra.mxu0 0.0
    %2748 = vmatprep.subr.mxu0 0.0
    %2749 = vmatpush1.msra.mxu0 0.0
    %2750 = vmatprep.subr.mxu0 0.0
    %2751 = vmatpush1.msra.mxu0 0.0
    %2752 = vmatprep.subr.mxu0 0.0
    %2753 = vmatpush1.msra.mxu0 0.0
    %2754 = vmatprep.mubr.f32.mxu0 0.0
    %2755 = vmatmul.mubr.f32.gmra.mrb[0].mxu0 %v2685
    %v2756 = vpop.f32.mrb[0].mxu0
    %v2757 = vadd.f32 %v2683, %v2756
    %v2758 = vpop.f32.mrb[0].mxu0
    %2759 = vmatprep.mubr.f32.mxu0 0.0
    %2760 = vmatmul.mubr.f32.gmra.mrb[0].mxu0 %v2688
    %v2761 = vpop.f32.mrb[0].mxu0
    %v2762 = vadd.f32 %v2683, %v2761
    %v2763 = vpop.f32.mrb[0].mxu0
    %2764 = vdwg.mxu0
    %v2765 = vmax.f32 %v2757, 0.0
    %v2766 = vmax.f32 %v2762, 0.0
    %s2767 = scalar_lea.vmem %s11, 128
    %v2768 = vld [vmem:[%s2767] sm:$0xff]
    %v2769 = vld [vmem:[%s2767 + $0x8] sm:$0xff]
    %v2770 = vld [vmem:[%s2767 + $0x10] sm:$0xff]
    %v2771 = vld [vmem:[%s2767 + $0x18] sm:$0xff]
    %v2772 = vld [vmem:[%s2767 + $0x20] sm:$0xff]
    %v2773 = vld [vmem:[%s2767 + $0x28] sm:$0xff]
    %v2774 = vld [vmem:[%s2767 + $0x30] sm:$0xff]
    %v2775 = vld [vmem:[%s2767 + $0x38] sm:$0xff]
    %v2776 = vlaneseq
    %v2777 = vshrl.u32 %v2776, 7
    %v2778 = vsub.s32 1, %v2777
    %v2779 = vrot.slane %v1949, %v2778
    %v2781 = vsel %vm423, %v2765, 0
    %v2784 = vsel %vm423, %v2766, 0
    %2786 = vmatprep.subr.mxu0 0.0
    %2787 = vmatpush1.msra.mxu0 %v2768
    %2788 = vmatprep.subr.mxu0 0.0
    %2789 = vmatpush1.msra.mxu0 %v2769
    %2790 = vmatprep.subr.mxu0 0.0
    %2791 = vmatpush1.msra.mxu0 %v2770
    %2792 = vmatprep.subr.mxu0 0.0
    %2793 = vmatpush1.msra.mxu0 %v2771
    %2794 = vmatprep.subr.mxu0 0.0
    %2795 = vmatpush1.msra.mxu0 %v2772
    %2796 = vmatprep.subr.mxu0 0.0
    %2797 = vmatpush1.msra.mxu0 %v2773
    %2798 = vmatprep.subr.mxu0 0.0
    %2799 = vmatpush1.msra.mxu0 %v2774
    %2800 = vmatprep.subr.mxu0 0.0
    %2801 = vmatpush1.msra.mxu0 %v2775
    %2802 = vmatprep.subr.mxu0 0.0
    %2803 = vmatpush1.msra.mxu0 0.0
    %2804 = vmatprep.subr.mxu0 0.0
    %2805 = vmatpush1.msra.mxu0 0.0
    %2806 = vmatprep.subr.mxu0 0.0
    %2807 = vmatpush1.msra.mxu0 0.0
    %2808 = vmatprep.subr.mxu0 0.0
    %2809 = vmatpush1.msra.mxu0 0.0
    %2810 = vmatprep.subr.mxu0 0.0
    %2811 = vmatpush1.msra.mxu0 0.0
    %2812 = vmatprep.subr.mxu0 0.0
    %2813 = vmatpush1.msra.mxu0 0.0
    %2814 = vmatprep.subr.mxu0 0.0
    %2815 = vmatpush1.msra.mxu0 0.0
    %2816 = vmatprep.subr.mxu0 0.0
    %2817 = vmatpush1.msra.mxu0 0.0
    %2818 = vmatprep.subr.mxu0 0.0
    %2819 = vmatpush1.msra.mxu0 0.0
    %2820 = vmatprep.subr.mxu0 0.0
    %2821 = vmatpush1.msra.mxu0 0.0
    %2822 = vmatprep.subr.mxu0 0.0
    %2823 = vmatpush1.msra.mxu0 0.0
    %2824 = vmatprep.subr.mxu0 0.0
    %2825 = vmatpush1.msra.mxu0 0.0
    %2826 = vmatprep.subr.mxu0 0.0
    %2827 = vmatpush1.msra.mxu0 0.0
    %2828 = vmatprep.subr.mxu0 0.0
    %2829 = vmatpush1.msra.mxu0 0.0
    %2830 = vmatprep.subr.mxu0 0.0
    %2831 = vmatpush1.msra.mxu0 0.0
    %2832 = vmatprep.subr.mxu0 0.0
    %2833 = vmatpush1.msra.mxu0 0.0
    %2834 = vmatprep.subr.mxu0 0.0
    %2835 = vmatpush1.msra.mxu0 0.0
    %2836 = vmatprep.subr.mxu0 0.0
    %2837 = vmatpush1.msra.mxu0 0.0
    %2838 = vmatprep.subr.mxu0 0.0
    %2839 = vmatpush1.msra.mxu0 0.0
    %2840 = vmatprep.subr.mxu0 0.0
    %2841 = vmatpush1.msra.mxu0 0.0
    %2842 = vmatprep.subr.mxu0 0.0
    %2843 = vmatpush1.msra.mxu0 0.0
    %2844 = vmatprep.subr.mxu0 0.0
    %2845 = vmatpush1.msra.mxu0 0.0
    %2846 = vmatprep.subr.mxu0 0.0
    %2847 = vmatpush1.msra.mxu0 0.0
    %2848 = vmatprep.subr.mxu0 0.0
    %2849 = vmatpush1.msra.mxu0 0.0
    %2850 = vmatprep.mubr.f32.mxu0 0.0
    %2851 = vmatmul.mubr.f32.gmra.mrb[0].mxu0 %v2781
    %v2852 = vpop.f32.mrb[0].mxu0
    %v2853 = vadd.f32 %v2779, %v2852
    %v2854 = vpop.f32.mrb[0].mxu0
    %2855 = vmatprep.mubr.f32.mxu0 0.0
    %2856 = vmatmul.mubr.f32.gmra.mrb[0].mxu0 %v2784
    %v2857 = vpop.f32.mrb[0].mxu0
    %v2858 = vadd.f32 %v2779, %v2857
    %v2859 = vpop.f32.mrb[0].mxu0
    %2860 = vdwg.mxu0
    %v2861 = vmax.f32 %v2853, 0.0
    %v2862 = vmax.f32 %v2858, 0.0
    %2863 = vst.msk [vmem:[#allocation7] sm:$0xff] %vm184, %v2861
    %2864 = vst.msk [vmem:[#allocation7 + $0x8] sm:$0xff] %vm184, %v2862
    %2865 = vst.msk [vmem:[#allocation8] sm:$0xff] %vm184, %v2518
    // Predicated region
    $region66: #{tpu_custom_call.1} parent=1 // pred_check
      _
    $region67: #{tpu_custom_call.1} parent=1 // pred_check_branch
      %2867 = sbr.rel (0) target = $region69
    $region68: #{tpu_custom_call.1} parent=1 // pred_region
      %s2869 = ssub.s32 256, 256
      %2870 = vsyncadd [#allocation4], %s2869
      %s2871 = sshll.u32 [#allocation7], 4
      %s2872 = int_to_ptr.vmem [resolvable:$true] %s2871
      %2877 = dma.vmem_to_hbm [thread:$0]  %s2872, 256, %s14, [#allocation4], 128, 128, 8
    $region69: #{tpu_custom_call.1} parent=1 // pred_fallthru
      _
    // Predicated region
    $region70: #{tpu_custom_call.1} parent=1 // pred_check
      _
    $region71: #{tpu_custom_call.1} parent=1 // pred_check_branch
      %2879 = sbr.rel (0) target = $region73
    $region72: #{tpu_custom_call.1} parent=1 // pred_region
      %s2881 = ssub.s32 128, 128
      %2882 = vsyncadd [#allocation9], %s2881
      %s2884 = sshll.u32 [#allocation8], 4
      %s2885 = int_to_ptr.vmem [resolvable:$true] %s2884
      %2887 = dma.vmem_to_hbm [thread:$0]  %s2885, 128, %s15, [#allocation9]
    $region73: #{tpu_custom_call.1} parent=1 // pred_fallthru
      _
    // Predicated region
    $region74: #{tpu_custom_call.1} parent=1 // pred_check
      _
    $region75: #{tpu_custom_call.1} parent=1 // pred_check_branch
      %2889 = sbr.rel (0) target = $region77
    $region76: #{tpu_custom_call.1} parent=1 // pred_region
      %2890 = dma.done [#allocation4], 256
    $region77: #{tpu_custom_call.1} parent=1 // pred_fallthru
      _
    // Predicated region
    $region78: #{tpu_custom_call.1} parent=1 // pred_check
      _
    $region79: #{tpu_custom_call.1} parent=1 // pred_check_branch
      %2892 = sbr.rel (0) target = $region81
    $region80: #{tpu_custom_call.1} parent=1 // pred_region
      %2893 = dma.done [#allocation9], 128
    $region81: #{tpu_custom_call.1} parent=1 // pred_fallthru
      _
    %2894 = vsyncpa [#allocation3], 1
    %2895 = vsyncpa [#allocation6], 1
    %2896 = vsyncpa [#allocation4], 1
    %2897 = vsyncpa [#allocation9], 1

</llo_original>
